<compile_context>
chip_gen: v7x
topology: tpu7x:2x2x1
jax: 0.10.0
libtpu: 0.0.40
codegen_flags: <defaults>
</compile_context>

<pallas_src>
import functools
import math

import jax
import jax.numpy as jnp
from jax.experimental import pallas as pl
from jax.experimental.pallas import tpu as pltpu


def _round_up(x, m):
    return (x + m - 1) // m * m


def _gelu_tanh(y):
    # TODO(synk): eu.activate_func() source unknown; assuming GELU (tanh approx).
    c = math.sqrt(2.0 / math.pi)
    return 0.5 * y * (1.0 + jnp.tanh(c * (y + 0.044715 * y * y * y)))


# ---------------------------------------------------------------------------
# Pallas kernel: fused 2-layer MLP (1x1 conv + folded eval-BN + activation per
# layer) in channel-first layout, with optional max-over-k fused in the
# epilogue.  One kernel per MLP; only the final (k-reduced) tile goes to HBM.
# ---------------------------------------------------------------------------
def _fused_mlp2_kernel(x_ref, w1_ref, b1_ref, w2_ref, b2_ref, o_ref, *, k_groups):
    # x_ref : [Cin, L]   bf16, channel-first (lane axis = points -> lane-dense)
    # w*_ref: [Cout, Cin] bf16 (BN scale pre-folded)
    # b*_ref: [Cout, 1]  f32  (conv bias + BN bias folded)
    # o_ref : [Cout2, L // k_groups]
    x = x_ref[...]
    y = jnp.dot(w1_ref[...], x, preferred_element_type=jnp.float32)
    y = _gelu_tanh(y + b1_ref[...])
    y = jnp.dot(w2_ref[...], y.astype(jnp.bfloat16),
                preferred_element_type=jnp.float32)
    y = _gelu_tanh(y + b2_ref[...])       # final_proc=True -> BN+act on last layer too
    if k_groups > 1:
        # Columns are ordered (k, point) inside this lane block; the per-k
        # slices are lane-aligned (multiples of 128), so this is cheap VPU max.
        n_in = y.shape[1] // k_groups
        m = y[:, :n_in]
        for ki in range(1, k_groups):
            m = jnp.maximum(m, y[:, ki * n_in:(ki + 1) * n_in])
        y = m
    o_ref[...] = y.astype(o_ref.dtype)


def _fold_bn(layer, eps=1e-5):
    # y = gamma * (x@w + b - mean)/sqrt(var+eps) + beta
    #   = (scale*w)^T-applied x  +  (beta + (b-mean)*scale)
    w, b, gamma, beta, mean, var = layer
    scale = gamma / jnp.sqrt(var + eps)
    w_t = (w * scale[None, :]).T.astype(jnp.bfloat16)            # [Cout, Cin]
    bias = (beta + (b - mean) * scale).reshape(-1, 1).astype(jnp.float32)
    return w_t, bias


def fused_mlp2(x_cf, layers, *, k_groups=1, n_lane_blocks=1,
               out_dtype=jnp.bfloat16, eps=1e-5):
    """x_cf: [Cin, L] bf16 channel-first.  If k_groups > 1, columns must be
    ordered (lane_block, k, point) so each lane block holds whole neighbor
    groups.  Returns [Cout, L // k_groups]."""
    assert len(layers) == 2  # channel plan always yields 2 conv layers per MLP
    w1, b1 = _fold_bn(layers[0], eps)
    w2, b2 = _fold_bn(layers[1], eps)
    cin, L = x_cf.shape
    cout = w2.shape[0]
    assert L % n_lane_blocks == 0
    lb = L // n_lane_blocks
    assert lb % (128 * k_groups) == 0
    out_lb = lb // k_groups

    flops = 2 * L * (w1.shape[0] * w1.shape[1] + w2.shape[0] * w2.shape[1])
    trans = L * (w1.shape[0] + w2.shape[0])
    bytes_acc = (x_cf.size * 2 + w1.size * 2 + w2.size * 2
                 + b1.size * 4 + b2.size * 4
                 + cout * (L // k_groups) * jnp.dtype(out_dtype).itemsize)

    return pl.pallas_call(
        functools.partial(_fused_mlp2_kernel, k_groups=k_groups),
        out_shape=jax.ShapeDtypeStruct((cout, L // k_groups), out_dtype),
        grid_spec=pltpu.PrefetchScalarGridSpec(
            num_scalar_prefetch=0,
            grid=(n_lane_blocks,),
            in_specs=[
                pl.BlockSpec((cin, lb), lambda h: (0, h)),   # activations: lane-tiled
                pl.BlockSpec(w1.shape, lambda h: (0, 0)),    # weights/biases resident
                pl.BlockSpec(b1.shape, lambda h: (0, 0)),
                pl.BlockSpec(w2.shape, lambda h: (0, 0)),
                pl.BlockSpec(b2.shape, lambda h: (0, 0)),
            ],
            out_specs=pl.BlockSpec((cout, out_lb), lambda h: (0, h)),
        ),
        compiler_params=pltpu.CompilerParams(
            dimension_semantics=("parallel",),   # lane blocks independent -> megacore
            vmem_limit_bytes=32 << 20,
        ),
        cost_estimate=pl.CostEstimate(
            flops=int(flops), transcendentals=int(trans),
            bytes_accessed=int(bytes_acc)),
    )(x_cf, w1, b1, w2, b2)


# ---------------------------------------------------------------------------
# DGCNN graph-feature glue (plain JAX: top-k + gather are data dependent).
# ---------------------------------------------------------------------------
def knn_indices(x_nc, k):
    # TODO(synk): eu.knn source unknown; assuming standard DGCNN kNN (top-k by
    # negative squared L2 distance; the point itself is its own nearest neighbor).
    inner = -2.0 * jnp.einsum("bnc,bmc->bnm", x_nc, x_nc)
    xx = jnp.sum(x_nc * x_nc, axis=-1)
    neg_dist = -xx[:, :, None] - inner - xx[:, None, :]
    return jax.lax.top_k(neg_dist, k)[1]                       # [bs, N, k]


def get_graph_feature(x_nc, k):
    # x_nc: [bs, N, C] channel-last -> [bs, N, k, 2C] = [neighbor-center, center].
    idx = knn_indices(x_nc, k)
    neighbors = jax.vmap(lambda pts, ids: pts[ids])(x_nc, idx)  # [bs, N, k, C]
    center = x_nc[:, :, None, :]
    return jnp.concatenate(
        [neighbors - center, jnp.broadcast_to(center, neighbors.shape)], axis=-1)


def _graph_conv(x_nc, layers, k, *, out_dtype=jnp.bfloat16):
    """graph-feature -> fused 2-layer MLP -> max over k, one pallas_call.
    Returns channel-first [Cout, bs*n_pts]."""
    bs, n_pts, c = x_nc.shape
    P = bs * n_pts
    f = get_graph_feature(x_nc, k).reshape(P, k, 2 * c)
    P_pad = _round_up(P, 128)
    if P_pad != P:
        f = jnp.pad(f, ((0, P_pad - P), (0, 0), (0, 0)))
    H = 2 if P_pad % 256 == 0 else 1          # even grid -> both v7x TensorCores
    pin = P_pad // H
    # Channel-first, columns ordered (lane_block, k, point): each lane block
    # holds whole neighbor groups; 128-aligned point slices stay lane-dense.
    f_cf = jnp.transpose(f.reshape(H, pin, k, 2 * c), (3, 0, 2, 1))
    f_cf = f_cf.reshape(2 * c, H * k * pin).astype(jnp.bfloat16)
    out = fused_mlp2(f_cf, layers, k_groups=k, n_lane_blocks=H,
                     out_dtype=out_dtype)
    return out[:, :P]                                           # [Cout, P]


def gcn_encoder_forward(x_nc, params, k):
    bs, n_pts, _ = x_nc.shape
    P = bs * n_pts

    x1t = _graph_conv(x_nc, params["conv1"], k)                 # [c1, P] bf16
    x1_nc = jnp.transpose(x1t.reshape(-1, bs, n_pts), (1, 2, 0)).astype(jnp.float32)

    x2t = _graph_conv(x1_nc, params["conv2"], k)                # [c2, P] bf16

    xc = jnp.concatenate([x1t, x2t], axis=0)                    # [c1+c2, P] bf16
    P_pad = _round_up(P, 128)
    if P_pad != P:
        xc = jnp.pad(xc, ((0, 0), (0, P_pad - P)))
    H = 2 if P_pad % 256 == 0 else 1
    emb_t = fused_mlp2(xc, params["conv3"], k_groups=1, n_lane_blocks=H,
                       out_dtype=jnp.float32)                   # [emb, P_pad] f32
    return emb_t[:, :P]                                         # [emb, P]


def point_to_dense_forward(xy, params, k):
    # xy: [bs, n_stk, n_stk_pnt, point_dim] -> [bs, emb, n_stk, n_stk_pnt]
    bs, n_stk, n_stk_pnt, ch = xy.shape
    x_nc = xy.reshape(bs, n_stk * n_stk_pnt, ch)                # 'b s sp c -> b (s sp) c'
    emb_t = gcn_encoder_forward(x_nc, params, k)                # [emb, bs*N]
    emb = emb_t.reshape(-1, bs, n_stk, n_stk_pnt)               # [emb, bs, s, sp]
    return jnp.transpose(emb, (1, 0, 2, 3))                     # [bs, emb, s, sp]


# ---------------------------------------------------------------------------
# Channel plan mirroring GCNEncoder.__init__ and synthetic parameter init.
# ---------------------------------------------------------------------------
def gcn_channel_plan(emb_in, emb_out):
    emb_inc = (emb_out / (4 * emb_in)) ** 0.25
    l1_0 = emb_in * 2
    l1_1 = int(l1_0 * emb_inc)
    l1_2 = int(l1_0 * emb_inc ** 2)
    l2_0 = l1_2 * 2
    l2_1 = int(l2_0 * emb_inc)
    l2_2 = emb_out
    l3_0 = l2_2 + l1_2
    l3_1 = int((emb_out / l3_0) ** 0.5 * l3_0)
    l3_2 = emb_out
    return (l1_0, l1_1, l1_2), (l2_0, l2_1, l2_2), (l3_0, l3_1, l3_2)


def init_mlp_params(key, channels):
    # TODO(synk): eu.MLP source unknown; assuming each layer = 1x1 conv ->
    # BN(eval) -> activation; Dropout(p=0.0) is identity.
    layers = []
    for cin, cout in zip(channels[:-1], channels[1:]):
        key, kw, kb, kg, kbt, km, kv = jax.random.split(key, 7)
        w = jax.random.normal(kw, (cin, cout), jnp.float32) / math.sqrt(cin)
        b = 0.05 * jax.random.normal(kb, (cout,), jnp.float32)
        gamma = 1.0 + 0.1 * jax.random.normal(kg, (cout,), jnp.float32)
        beta = 0.05 * jax.random.normal(kbt, (cout,), jnp.float32)
        mean = 0.02 * jax.random.normal(km, (cout,), jnp.float32)
        var = jnp.abs(1.0 + 0.1 * jax.random.normal(kv, (cout,), jnp.float32))
        layers.append((w, b, gamma, beta, mean, var))
    return key, layers


if __name__ == "__main__":
    # Shapes consistent with PointToDense.forward: xy [bs, n_stk, n_stk_pnt, 2]
    bs, n_stk, n_stk_pnt = 2, 8, 16
    point_dim, emb_dim, n_near = 2, 32, 10

    c1, c2, c3 = gcn_channel_plan(point_dim, emb_dim)   # (4,5,8) (16,22,32) (40,35,32)

    key = jax.random.PRNGKey(0)
    key, kx = jax.random.split(key)
    xy = jax.random.normal(kx, (bs, n_stk, n_stk_pnt, point_dim), jnp.float32)

    key, p1 = init_mlp_params(key, c1)
    key, p2 = init_mlp_params(key, c2)
    key, p3 = init_mlp_params(key, c3)
    params = {"conv1": p1, "conv2": p2, "conv3": p3}

    fwd = jax.jit(functools.partial(point_to_dense_forward, k=n_near))
    out = jax.block_until_ready(fwd(xy, params))

    assert out.shape == (bs, emb_dim, n_stk, n_stk_pnt), out.shape
    assert bool(jnp.all(jnp.isfinite(out)))
    print("KERNEL_OK")
</pallas_src>

<mosaic_0001>
module attributes {stable_mosaic.version = 11 : i64} {
  func.func @_fused_mlp2_kernel(%arg0: i32, %arg1: memref<4x1280xbf16, #tpu.memory_space<vmem>>, %arg2: memref<5x4xbf16, #tpu.memory_space<vmem>>, %arg3: memref<5x1xf32, #tpu.memory_space<vmem>>, %arg4: memref<8x5xbf16, #tpu.memory_space<vmem>>, %arg5: memref<8x1xf32, #tpu.memory_space<vmem>>, %arg6: memref<8x128xbf16, #tpu.memory_space<vmem>>) attributes {dimension_semantics = [#tpu.dimension_semantics<parallel>], iteration_bounds = array<i64: 2>, scalar_prefetch = 0 : i64, scratch_operands = 0 : i64, tpu.core_type = #tpu.core_type<tc>, window_params = [{transform_indices = @transform_0, window_bounds = array<i64: 4, 1280>}, {pipeline_mode = #tpu.pipeline_mode<synchronous>, transform_indices = @transform_1, window_bounds = array<i64: 5, 4>}, {pipeline_mode = #tpu.pipeline_mode<synchronous>, transform_indices = @transform_2, window_bounds = array<i64: 5, 1>}, {pipeline_mode = #tpu.pipeline_mode<synchronous>, transform_indices = @transform_3, window_bounds = array<i64: 8, 5>}, {pipeline_mode = #tpu.pipeline_mode<synchronous>, transform_indices = @transform_4, window_bounds = array<i64: 8, 1>}, {transform_indices = @transform_5, window_bounds = array<i64: 8, 128>}]} {
    %c0 = arith.constant 0 : index
    %c0_0 = arith.constant 0 : index
    %0 = vector.load %arg1[%c0, %c0_0] : memref<4x1280xbf16, #tpu.memory_space<vmem>>, vector<4x1280xbf16>
    %c0_1 = arith.constant 0 : index
    %c0_2 = arith.constant 0 : index
    %1 = vector.load %arg2[%c0_1, %c0_2] : memref<5x4xbf16, #tpu.memory_space<vmem>>, vector<5x4xbf16>
    %cst = arith.constant dense<0.000000e+00> : vector<5x1280xf32>
    %2 = tpu.matmul %1, %0, %cst {dimension_numbers = #tpu.dot_dimension_numbers<[1], [0], [0], [1], [0, 0, 1, 1], [], []>} : vector<5x4xbf16>, vector<4x1280xbf16>, vector<5x1280xf32> -> vector<5x1280xf32>
    %c0_3 = arith.constant 0 : index
    %c0_4 = arith.constant 0 : index
    %3 = vector.load %arg3[%c0_3, %c0_4] : memref<5x1xf32, #tpu.memory_space<vmem>>, vector<5x1xf32>
    %4 = vector.broadcast %3 : vector<5x1xf32> to vector<5x1280xf32>
    %5 = arith.addf %2, %4 : vector<5x1280xf32>
    %cst_5 = arith.constant 5.000000e-01 : f32
    %6 = vector.broadcast %cst_5 : f32 to vector<5x1280xf32>
    %7 = arith.mulf %6, %5 : vector<5x1280xf32>
    %cst_6 = arith.constant 4.471500e-02 : f32
    %8 = vector.broadcast %cst_6 : f32 to vector<5x1280xf32>
    %9 = arith.mulf %8, %5 : vector<5x1280xf32>
    %10 = arith.mulf %9, %5 : vector<5x1280xf32>
    %11 = arith.mulf %10, %5 : vector<5x1280xf32>
    %12 = arith.addf %5, %11 : vector<5x1280xf32>
    %cst_7 = arith.constant 0.797884583 : f32
    %13 = vector.broadcast %cst_7 : f32 to vector<5x1280xf32>
    %14 = arith.mulf %13, %12 : vector<5x1280xf32>
    %15 = math.tanh %14 : vector<5x1280xf32>
    %cst_8 = arith.constant 1.000000e+00 : f32
    %16 = vector.broadcast %cst_8 : f32 to vector<5x1280xf32>
    %17 = arith.addf %16, %15 : vector<5x1280xf32>
    %18 = arith.mulf %7, %17 : vector<5x1280xf32>
    %c0_9 = arith.constant 0 : index
    %c0_10 = arith.constant 0 : index
    %19 = vector.load %arg4[%c0_9, %c0_10] : memref<8x5xbf16, #tpu.memory_space<vmem>>, vector<8x5xbf16>
    %20 = arith.truncf %18 : vector<5x1280xf32> to vector<5x1280xbf16>
    %cst_11 = arith.constant dense<0.000000e+00> : vector<8x1280xf32>
    %21 = tpu.matmul %19, %20, %cst_11 {dimension_numbers = #tpu.dot_dimension_numbers<[1], [0], [0], [1], [0, 0, 1, 1], [], []>} : vector<8x5xbf16>, vector<5x1280xbf16>, vector<8x1280xf32> -> vector<8x1280xf32>
    %c0_12 = arith.constant 0 : index
    %c0_13 = arith.constant 0 : index
    %22 = vector.load %arg5[%c0_12, %c0_13] : memref<8x1xf32, #tpu.memory_space<vmem>>, vector<8x1xf32>
    %23 = vector.broadcast %22 : vector<8x1xf32> to vector<8x1280xf32>
    %24 = arith.addf %21, %23 : vector<8x1280xf32>
    %cst_14 = arith.constant 5.000000e-01 : f32
    %25 = vector.broadcast %cst_14 : f32 to vector<8x1280xf32>
    %26 = arith.mulf %25, %24 : vector<8x1280xf32>
    %cst_15 = arith.constant 4.471500e-02 : f32
    %27 = vector.broadcast %cst_15 : f32 to vector<8x1280xf32>
    %28 = arith.mulf %27, %24 : vector<8x1280xf32>
    %29 = arith.mulf %28, %24 : vector<8x1280xf32>
    %30 = arith.mulf %29, %24 : vector<8x1280xf32>
    %31 = arith.addf %24, %30 : vector<8x1280xf32>
    %cst_16 = arith.constant 0.797884583 : f32
    %32 = vector.broadcast %cst_16 : f32 to vector<8x1280xf32>
    %33 = arith.mulf %32, %31 : vector<8x1280xf32>
    %34 = math.tanh %33 : vector<8x1280xf32>
    %cst_17 = arith.constant 1.000000e+00 : f32
    %35 = vector.broadcast %cst_17 : f32 to vector<8x1280xf32>
    %36 = arith.addf %35, %34 : vector<8x1280xf32>
    %37 = arith.mulf %26, %36 : vector<8x1280xf32>
    %38 = vector.extract_strided_slice %37 {offsets = [0, 0], sizes = [8, 128], strides = [1, 1]} : vector<8x1280xf32> to vector<8x128xf32>
    %39 = vector.extract_strided_slice %37 {offsets = [0, 128], sizes = [8, 128], strides = [1, 1]} : vector<8x1280xf32> to vector<8x128xf32>
    %40 = arith.maximumf %38, %39 : vector<8x128xf32>
    %41 = vector.extract_strided_slice %37 {offsets = [0, 256], sizes = [8, 128], strides = [1, 1]} : vector<8x1280xf32> to vector<8x128xf32>
    %42 = arith.maximumf %40, %41 : vector<8x128xf32>
    %43 = vector.extract_strided_slice %37 {offsets = [0, 384], sizes = [8, 128], strides = [1, 1]} : vector<8x1280xf32> to vector<8x128xf32>
    %44 = arith.maximumf %42, %43 : vector<8x128xf32>
    %45 = vector.extract_strided_slice %37 {offsets = [0, 512], sizes = [8, 128], strides = [1, 1]} : vector<8x1280xf32> to vector<8x128xf32>
    %46 = arith.maximumf %44, %45 : vector<8x128xf32>
    %47 = vector.extract_strided_slice %37 {offsets = [0, 640], sizes = [8, 128], strides = [1, 1]} : vector<8x1280xf32> to vector<8x128xf32>
    %48 = arith.maximumf %46, %47 : vector<8x128xf32>
    %49 = vector.extract_strided_slice %37 {offsets = [0, 768], sizes = [8, 128], strides = [1, 1]} : vector<8x1280xf32> to vector<8x128xf32>
    %50 = arith.maximumf %48, %49 : vector<8x128xf32>
    %51 = vector.extract_strided_slice %37 {offsets = [0, 896], sizes = [8, 128], strides = [1, 1]} : vector<8x1280xf32> to vector<8x128xf32>
    %52 = arith.maximumf %50, %51 : vector<8x128xf32>
    %53 = vector.extract_strided_slice %37 {offsets = [0, 1024], sizes = [8, 128], strides = [1, 1]} : vector<8x1280xf32> to vector<8x128xf32>
    %54 = arith.maximumf %52, %53 : vector<8x128xf32>
    %55 = vector.extract_strided_slice %37 {offsets = [0, 1152], sizes = [8, 128], strides = [1, 1]} : vector<8x1280xf32> to vector<8x128xf32>
    %56 = arith.maximumf %54, %55 : vector<8x128xf32>
    %57 = arith.truncf %56 : vector<8x128xf32> to vector<8x128xbf16>
    %c0_18 = arith.constant 0 : index
    %c0_19 = arith.constant 0 : index
    %58 = vector.load %arg6[%c0_18, %c0_19] : memref<8x128xbf16, #tpu.memory_space<vmem>>, vector<8x128xbf16>
    tpu.vector_store %arg6[%c0_18, %c0_19], %57 {strides = array<i32>} : memref<8x128xbf16, #tpu.memory_space<vmem>>, vector<8x128xbf16>,
    return
  }
  func.func @transform_0(%arg0: i32) -> (i32, i32) {
    %c0_i32 = arith.constant 0 : i32
    %c0_i32_0 = arith.constant 0 : i32
    return %c0_i32, %arg0 : i32, i32
  }
  func.func @transform_1(%arg0: i32) -> (i32, i32) {
    %c0_i32 = arith.constant 0 : i32
    %c0_i32_0 = arith.constant 0 : i32
    %c0_i32_1 = arith.constant 0 : i32
    return %c0_i32, %c0_i32_0 : i32, i32
  }
  func.func @transform_2(%arg0: i32) -> (i32, i32) {
    %c0_i32 = arith.constant 0 : i32
    %c0_i32_0 = arith.constant 0 : i32
    %c0_i32_1 = arith.constant 0 : i32
    return %c0_i32, %c0_i32_0 : i32, i32
  }
  func.func @transform_3(%arg0: i32) -> (i32, i32) {
    %c0_i32 = arith.constant 0 : i32
    %c0_i32_0 = arith.constant 0 : i32
    %c0_i32_1 = arith.constant 0 : i32
    return %c0_i32, %c0_i32_0 : i32, i32
  }
  func.func @transform_4(%arg0: i32) -> (i32, i32) {
    %c0_i32 = arith.constant 0 : i32
    %c0_i32_0 = arith.constant 0 : i32
    %c0_i32_1 = arith.constant 0 : i32
    return %c0_i32, %c0_i32_0 : i32, i32
  }
  func.func @transform_5(%arg0: i32) -> (i32, i32) {
    %c0_i32 = arith.constant 0 : i32
    %c0_i32_0 = arith.constant 0 : i32
    return %c0_i32, %arg0 : i32, i32
  }
}

module attributes {stable_mosaic.version = 11 : i64} {
  func.func @_fused_mlp2_kernel(%arg0: i32, %arg1: memref<16x1280xbf16, #tpu.memory_space<vmem>>, %arg2: memref<22x16xbf16, #tpu.memory_space<vmem>>, %arg3: memref<22x1xf32, #tpu.memory_space<vmem>>, %arg4: memref<32x22xbf16, #tpu.memory_space<vmem>>, %arg5: memref<32x1xf32, #tpu.memory_space<vmem>>, %arg6: memref<32x128xbf16, #tpu.memory_space<vmem>>) attributes {dimension_semantics = [#tpu.dimension_semantics<parallel>], iteration_bounds = array<i64: 2>, scalar_prefetch = 0 : i64, scratch_operands = 0 : i64, tpu.core_type = #tpu.core_type<tc>, window_params = [{transform_indices = @transform_0, window_bounds = array<i64: 16, 1280>}, {pipeline_mode = #tpu.pipeline_mode<synchronous>, transform_indices = @transform_1, window_bounds = array<i64: 22, 16>}, {pipeline_mode = #tpu.pipeline_mode<synchronous>, transform_indices = @transform_2, window_bounds = array<i64: 22, 1>}, {pipeline_mode = #tpu.pipeline_mode<synchronous>, transform_indices = @transform_3, window_bounds = array<i64: 32, 22>}, {pipeline_mode = #tpu.pipeline_mode<synchronous>, transform_indices = @transform_4, window_bounds = array<i64: 32, 1>}, {transform_indices = @transform_5, window_bounds = array<i64: 32, 128>}]} {
    %c0 = arith.constant 0 : index
    %c0_0 = arith.constant 0 : index
    %0 = vector.load %arg1[%c0, %c0_0] : memref<16x1280xbf16, #tpu.memory_space<vmem>>, vector<16x1280xbf16>
    %c0_1 = arith.constant 0 : index
    %c0_2 = arith.constant 0 : index
    %1 = vector.load %arg2[%c0_1, %c0_2] : memref<22x16xbf16, #tpu.memory_space<vmem>>, vector<22x16xbf16>
    %cst = arith.constant dense<0.000000e+00> : vector<22x1280xf32>
    %2 = tpu.matmul %1, %0, %cst {dimension_numbers = #tpu.dot_dimension_numbers<[1], [0], [0], [1], [0, 0, 1, 1], [], []>} : vector<22x16xbf16>, vector<16x1280xbf16>, vector<22x1280xf32> -> vector<22x1280xf32>
    %c0_3 = arith.constant 0 : index
    %c0_4 = arith.constant 0 : index
    %3 = vector.load %arg3[%c0_3, %c0_4] : memref<22x1xf32, #tpu.memory_space<vmem>>, vector<22x1xf32>
    %4 = vector.broadcast %3 : vector<22x1xf32> to vector<22x1280xf32>
    %5 = arith.addf %2, %4 : vector<22x1280xf32>
    %cst_5 = arith.constant 5.000000e-01 : f32
    %6 = vector.broadcast %cst_5 : f32 to vector<22x1280xf32>
    %7 = arith.mulf %6, %5 : vector<22x1280xf32>
    %cst_6 = arith.constant 4.471500e-02 : f32
    %8 = vector.broadcast %cst_6 : f32 to vector<22x1280xf32>
    %9 = arith.mulf %8, %5 : vector<22x1280xf32>
    %10 = arith.mulf %9, %5 : vector<22x1280xf32>
    %11 = arith.mulf %10, %5 : vector<22x1280xf32>
    %12 = arith.addf %5, %11 : vector<22x1280xf32>
    %cst_7 = arith.constant 0.797884583 : f32
    %13 = vector.broadcast %cst_7 : f32 to vector<22x1280xf32>
    %14 = arith.mulf %13, %12 : vector<22x1280xf32>
    %15 = math.tanh %14 : vector<22x1280xf32>
    %cst_8 = arith.constant 1.000000e+00 : f32
    %16 = vector.broadcast %cst_8 : f32 to vector<22x1280xf32>
    %17 = arith.addf %16, %15 : vector<22x1280xf32>
    %18 = arith.mulf %7, %17 : vector<22x1280xf32>
    %c0_9 = arith.constant 0 : index
    %c0_10 = arith.constant 0 : index
    %19 = vector.load %arg4[%c0_9, %c0_10] : memref<32x22xbf16, #tpu.memory_space<vmem>>, vector<32x22xbf16>
    %20 = arith.truncf %18 : vector<22x1280xf32> to vector<22x1280xbf16>
    %cst_11 = arith.constant dense<0.000000e+00> : vector<32x1280xf32>
    %21 = tpu.matmul %19, %20, %cst_11 {dimension_numbers = #tpu.dot_dimension_numbers<[1], [0], [0], [1], [0, 0, 1, 1], [], []>} : vector<32x22xbf16>, vector<22x1280xbf16>, vector<32x1280xf32> -> vector<32x1280xf32>
    %c0_12 = arith.constant 0 : index
    %c0_13 = arith.constant 0 : index
    %22 = vector.load %arg5[%c0_12, %c0_13] : memref<32x1xf32, #tpu.memory_space<vmem>>, vector<32x1xf32>
    %23 = vector.broadcast %22 : vector<32x1xf32> to vector<32x1280xf32>
    %24 = arith.addf %21, %23 : vector<32x1280xf32>
    %cst_14 = arith.constant 5.000000e-01 : f32
    %25 = vector.broadcast %cst_14 : f32 to vector<32x1280xf32>
    %26 = arith.mulf %25, %24 : vector<32x1280xf32>
    %cst_15 = arith.constant 4.471500e-02 : f32
    %27 = vector.broadcast %cst_15 : f32 to vector<32x1280xf32>
    %28 = arith.mulf %27, %24 : vector<32x1280xf32>
    %29 = arith.mulf %28, %24 : vector<32x1280xf32>
    %30 = arith.mulf %29, %24 : vector<32x1280xf32>
    %31 = arith.addf %24, %30 : vector<32x1280xf32>
    %cst_16 = arith.constant 0.797884583 : f32
    %32 = vector.broadcast %cst_16 : f32 to vector<32x1280xf32>
    %33 = arith.mulf %32, %31 : vector<32x1280xf32>
    %34 = math.tanh %33 : vector<32x1280xf32>
    %cst_17 = arith.constant 1.000000e+00 : f32
    %35 = vector.broadcast %cst_17 : f32 to vector<32x1280xf32>
    %36 = arith.addf %35, %34 : vector<32x1280xf32>
    %37 = arith.mulf %26, %36 : vector<32x1280xf32>
    %38 = vector.extract_strided_slice %37 {offsets = [0, 0], sizes = [32, 128], strides = [1, 1]} : vector<32x1280xf32> to vector<32x128xf32>
    %39 = vector.extract_strided_slice %37 {offsets = [0, 128], sizes = [32, 128], strides = [1, 1]} : vector<32x1280xf32> to vector<32x128xf32>
    %40 = arith.maximumf %38, %39 : vector<32x128xf32>
    %41 = vector.extract_strided_slice %37 {offsets = [0, 256], sizes = [32, 128], strides = [1, 1]} : vector<32x1280xf32> to vector<32x128xf32>
    %42 = arith.maximumf %40, %41 : vector<32x128xf32>
    %43 = vector.extract_strided_slice %37 {offsets = [0, 384], sizes = [32, 128], strides = [1, 1]} : vector<32x1280xf32> to vector<32x128xf32>
    %44 = arith.maximumf %42, %43 : vector<32x128xf32>
    %45 = vector.extract_strided_slice %37 {offsets = [0, 512], sizes = [32, 128], strides = [1, 1]} : vector<32x1280xf32> to vector<32x128xf32>
    %46 = arith.maximumf %44, %45 : vector<32x128xf32>
    %47 = vector.extract_strided_slice %37 {offsets = [0, 640], sizes = [32, 128], strides = [1, 1]} : vector<32x1280xf32> to vector<32x128xf32>
    %48 = arith.maximumf %46, %47 : vector<32x128xf32>
    %49 = vector.extract_strided_slice %37 {offsets = [0, 768], sizes = [32, 128], strides = [1, 1]} : vector<32x1280xf32> to vector<32x128xf32>
    %50 = arith.maximumf %48, %49 : vector<32x128xf32>
    %51 = vector.extract_strided_slice %37 {offsets = [0, 896], sizes = [32, 128], strides = [1, 1]} : vector<32x1280xf32> to vector<32x128xf32>
    %52 = arith.maximumf %50, %51 : vector<32x128xf32>
    %53 = vector.extract_strided_slice %37 {offsets = [0, 1024], sizes = [32, 128], strides = [1, 1]} : vector<32x1280xf32> to vector<32x128xf32>
    %54 = arith.maximumf %52, %53 : vector<32x128xf32>
    %55 = vector.extract_strided_slice %37 {offsets = [0, 1152], sizes = [32, 128], strides = [1, 1]} : vector<32x1280xf32> to vector<32x128xf32>
    %56 = arith.maximumf %54, %55 : vector<32x128xf32>
    %57 = arith.truncf %56 : vector<32x128xf32> to vector<32x128xbf16>
    %c0_18 = arith.constant 0 : index
    %c0_19 = arith.constant 0 : index
    %58 = vector.load %arg6[%c0_18, %c0_19] : memref<32x128xbf16, #tpu.memory_space<vmem>>, vector<32x128xbf16>
    tpu.vector_store %arg6[%c0_18, %c0_19], %57 {strides = array<i32>} : memref<32x128xbf16, #tpu.memory_space<vmem>>, vector<32x128xbf16>,
    return
  }
  func.func @transform_0(%arg0: i32) -> (i32, i32) {
    %c0_i32 = arith.constant 0 : i32
    %c0_i32_0 = arith.constant 0 : i32
    return %c0_i32, %arg0 : i32, i32
  }
  func.func @transform_1(%arg0: i32) -> (i32, i32) {
    %c0_i32 = arith.constant 0 : i32
    %c0_i32_0 = arith.constant 0 : i32
    %c0_i32_1 = arith.constant 0 : i32
    return %c0_i32, %c0_i32_0 : i32, i32
  }
  func.func @transform_2(%arg0: i32) -> (i32, i32) {
    %c0_i32 = arith.constant 0 : i32
    %c0_i32_0 = arith.constant 0 : i32
    %c0_i32_1 = arith.constant 0 : i32
    return %c0_i32, %c0_i32_0 : i32, i32
  }
  func.func @transform_3(%arg0: i32) -> (i32, i32) {
    %c0_i32 = arith.constant 0 : i32
    %c0_i32_0 = arith.constant 0 : i32
    %c0_i32_1 = arith.constant 0 : i32
    return %c0_i32, %c0_i32_0 : i32, i32
  }
  func.func @transform_4(%arg0: i32) -> (i32, i32) {
    %c0_i32 = arith.constant 0 : i32
    %c0_i32_0 = arith.constant 0 : i32
    %c0_i32_1 = arith.constant 0 : i32
    return %c0_i32, %c0_i32_0 : i32, i32
  }
  func.func @transform_5(%arg0: i32) -> (i32, i32) {
    %c0_i32 = arith.constant 0 : i32
    %c0_i32_0 = arith.constant 0 : i32
    return %c0_i32, %arg0 : i32, i32
  }
}

module attributes {stable_mosaic.version = 11 : i64} {
  func.func @_fused_mlp2_kernel(%arg0: i32, %arg1: memref<40x128xbf16, #tpu.memory_space<vmem>>, %arg2: memref<35x40xbf16, #tpu.memory_space<vmem>>, %arg3: memref<35x1xf32, #tpu.memory_space<vmem>>, %arg4: memref<32x35xbf16, #tpu.memory_space<vmem>>, %arg5: memref<32x1xf32, #tpu.memory_space<vmem>>, %arg6: memref<32x128xf32, #tpu.memory_space<vmem>>) attributes {dimension_semantics = [#tpu.dimension_semantics<parallel>], iteration_bounds = array<i64: 2>, scalar_prefetch = 0 : i64, scratch_operands = 0 : i64, tpu.core_type = #tpu.core_type<tc>, window_params = [{transform_indices = @transform_0, window_bounds = array<i64: 40, 128>}, {pipeline_mode = #tpu.pipeline_mode<synchronous>, transform_indices = @transform_1, window_bounds = array<i64: 35, 40>}, {pipeline_mode = #tpu.pipeline_mode<synchronous>, transform_indices = @transform_2, window_bounds = array<i64: 35, 1>}, {pipeline_mode = #tpu.pipeline_mode<synchronous>, transform_indices = @transform_3, window_bounds = array<i64: 32, 35>}, {pipeline_mode = #tpu.pipeline_mode<synchronous>, transform_indices = @transform_4, window_bounds = array<i64: 32, 1>}, {transform_indices = @transform_5, window_bounds = array<i64: 32, 128>}]} {
    %c0 = arith.constant 0 : index
    %c0_0 = arith.constant 0 : index
    %0 = vector.load %arg1[%c0, %c0_0] : memref<40x128xbf16, #tpu.memory_space<vmem>>, vector<40x128xbf16>
    %c0_1 = arith.constant 0 : index
    %c0_2 = arith.constant 0 : index
    %1 = vector.load %arg2[%c0_1, %c0_2] : memref<35x40xbf16, #tpu.memory_space<vmem>>, vector<35x40xbf16>
    %cst = arith.constant dense<0.000000e+00> : vector<35x128xf32>
    %2 = tpu.matmul %1, %0, %cst {dimension_numbers = #tpu.dot_dimension_numbers<[1], [0], [0], [1], [0, 0, 1, 1], [], []>} : vector<35x40xbf16>, vector<40x128xbf16>, vector<35x128xf32> -> vector<35x128xf32>
    %c0_3 = arith.constant 0 : index
    %c0_4 = arith.constant 0 : index
    %3 = vector.load %arg3[%c0_3, %c0_4] : memref<35x1xf32, #tpu.memory_space<vmem>>, vector<35x1xf32>
    %4 = vector.broadcast %3 : vector<35x1xf32> to vector<35x128xf32>
    %5 = arith.addf %2, %4 : vector<35x128xf32>
    %cst_5 = arith.constant 5.000000e-01 : f32
    %6 = vector.broadcast %cst_5 : f32 to vector<35x128xf32>
    %7 = arith.mulf %6, %5 : vector<35x128xf32>
    %cst_6 = arith.constant 4.471500e-02 : f32
    %8 = vector.broadcast %cst_6 : f32 to vector<35x128xf32>
    %9 = arith.mulf %8, %5 : vector<35x128xf32>
    %10 = arith.mulf %9, %5 : vector<35x128xf32>
    %11 = arith.mulf %10, %5 : vector<35x128xf32>
    %12 = arith.addf %5, %11 : vector<35x128xf32>
    %cst_7 = arith.constant 0.797884583 : f32
    %13 = vector.broadcast %cst_7 : f32 to vector<35x128xf32>
    %14 = arith.mulf %13, %12 : vector<35x128xf32>
    %15 = math.tanh %14 : vector<35x128xf32>
    %cst_8 = arith.constant 1.000000e+00 : f32
    %16 = vector.broadcast %cst_8 : f32 to vector<35x128xf32>
    %17 = arith.addf %16, %15 : vector<35x128xf32>
    %18 = arith.mulf %7, %17 : vector<35x128xf32>
    %c0_9 = arith.constant 0 : index
    %c0_10 = arith.constant 0 : index
    %19 = vector.load %arg4[%c0_9, %c0_10] : memref<32x35xbf16, #tpu.memory_space<vmem>>, vector<32x35xbf16>
    %20 = arith.truncf %18 : vector<35x128xf32> to vector<35x128xbf16>
    %cst_11 = arith.constant dense<0.000000e+00> : vector<32x128xf32>
    %21 = tpu.matmul %19, %20, %cst_11 {dimension_numbers = #tpu.dot_dimension_numbers<[1], [0], [0], [1], [0, 0, 1, 1], [], []>} : vector<32x35xbf16>, vector<35x128xbf16>, vector<32x128xf32> -> vector<32x128xf32>
    %c0_12 = arith.constant 0 : index
    %c0_13 = arith.constant 0 : index
    %22 = vector.load %arg5[%c0_12, %c0_13] : memref<32x1xf32, #tpu.memory_space<vmem>>, vector<32x1xf32>
    %23 = vector.broadcast %22 : vector<32x1xf32> to vector<32x128xf32>
    %24 = arith.addf %21, %23 : vector<32x128xf32>
    %cst_14 = arith.constant 5.000000e-01 : f32
    %25 = vector.broadcast %cst_14 : f32 to vector<32x128xf32>
    %26 = arith.mulf %25, %24 : vector<32x128xf32>
    %cst_15 = arith.constant 4.471500e-02 : f32
    %27 = vector.broadcast %cst_15 : f32 to vector<32x128xf32>
    %28 = arith.mulf %27, %24 : vector<32x128xf32>
    %29 = arith.mulf %28, %24 : vector<32x128xf32>
    %30 = arith.mulf %29, %24 : vector<32x128xf32>
    %31 = arith.addf %24, %30 : vector<32x128xf32>
    %cst_16 = arith.constant 0.797884583 : f32
    %32 = vector.broadcast %cst_16 : f32 to vector<32x128xf32>
    %33 = arith.mulf %32, %31 : vector<32x128xf32>
    %34 = math.tanh %33 : vector<32x128xf32>
    %cst_17 = arith.constant 1.000000e+00 : f32
    %35 = vector.broadcast %cst_17 : f32 to vector<32x128xf32>
    %36 = arith.addf %35, %34 : vector<32x128xf32>
    %37 = arith.mulf %26, %36 : vector<32x128xf32>
    %c0_18 = arith.constant 0 : index
    %c0_19 = arith.constant 0 : index
    %38 = vector.load %arg6[%c0_18, %c0_19] : memref<32x128xf32, #tpu.memory_space<vmem>>, vector<32x128xf32>
    tpu.vector_store %arg6[%c0_18, %c0_19], %37 {strides = array<i32>} : memref<32x128xf32, #tpu.memory_space<vmem>>, vector<32x128xf32>,
    return
  }
  func.func @transform_0(%arg0: i32) -> (i32, i32) {
    %c0_i32 = arith.constant 0 : i32
    %c0_i32_0 = arith.constant 0 : i32
    return %c0_i32, %arg0 : i32, i32
  }
  func.func @transform_1(%arg0: i32) -> (i32, i32) {
    %c0_i32 = arith.constant 0 : i32
    %c0_i32_0 = arith.constant 0 : i32
    %c0_i32_1 = arith.constant 0 : i32
    return %c0_i32, %c0_i32_0 : i32, i32
  }
  func.func @transform_2(%arg0: i32) -> (i32, i32) {
    %c0_i32 = arith.constant 0 : i32
    %c0_i32_0 = arith.constant 0 : i32
    %c0_i32_1 = arith.constant 0 : i32
    return %c0_i32, %c0_i32_0 : i32, i32
  }
  func.func @transform_3(%arg0: i32) -> (i32, i32) {
    %c0_i32 = arith.constant 0 : i32
    %c0_i32_0 = arith.constant 0 : i32
    %c0_i32_1 = arith.constant 0 : i32
    return %c0_i32, %c0_i32_0 : i32, i32
  }
  func.func @transform_4(%arg0: i32) -> (i32, i32) {
    %c0_i32 = arith.constant 0 : i32
    %c0_i32_0 = arith.constant 0 : i32
    %c0_i32_1 = arith.constant 0 : i32
    return %c0_i32, %c0_i32_0 : i32, i32
  }
  func.func @transform_5(%arg0: i32) -> (i32, i32) {
    %c0_i32 = arith.constant 0 : i32
    %c0_i32_0 = arith.constant 0 : i32
    return %c0_i32, %arg0 : i32, i32
  }
}

</mosaic_0001>

<llo_original>
// kernel: neg.9
$region0: #{neg.9}
  #allocation0 [shape = 's32[1]{0}', space=sflag, size = 0x4, scoped, tag = 'scoped memory for neg.9']
  %s0 = inlined_call_operand.vmem [shape: f32[2,128], index: 0, kind: input, shape index: {}]
  %s1 = inlined_call_operand.vmem [shape: f32[2,128], index: 1, kind: output, shape index: {}]
  %v2 = vld [vmem:[%s0] sm:$0x3]
  %3 = xla_tuple %v2
  %4 = xla_tuple %3
  %v5 = vxor.u32 %v2, 2147483648
  %6 = xla_tuple %v5
  %7 = vst [vmem:[%s1] sm:$0x3] %v5

// kernel: point_to_dense_forward.3
$region0: #{point_to_dense_forward.3}
  #allocation0 [shape = 'u32[]', space=smem, size = 0x4, offset = 0x4, fixed_abs, tag = 'smem constant byte address 0x4 - core index']
  #allocation1 [shape = 'u32[144,128]{1,0:T(1,128)}', space=vmem, size = 0x12000, scoped, tag = 'internal scratch']
  %s0 = inlined_call_operand.vmem [shape: bf16[4,2560], index: 0, kind: input, shape index: {}]
  %s1 = inlined_call_operand.vmem [shape: bf16[5,4], index: 1, kind: input, shape index: {}]
  %s2 = inlined_call_operand.vmem [shape: f32[5,1], index: 2, kind: input, shape index: {}]
  %s3 = inlined_call_operand.vmem [shape: bf16[8,5], index: 3, kind: input, shape index: {}]
  %s4 = inlined_call_operand.vmem [shape: f32[8,1], index: 4, kind: input, shape index: {}]
  %s5 = inlined_call_operand.vmem [shape: bf16[8,256], index: 5, kind: output, shape index: {}]
  %s6 = sld [smem:[#allocation0]]
  $region53: #{point_to_dense_forward.3} parent=0
    _
  %s8 = ssub.s32 1, %s6
  %s9 = scalar_select 0, %s8, %s6
  loop: start=0, step=1, limit=4
  $region2: #{point_to_dense_forward.3} parent=0 // loop_pre_header
    _
  $region3: #{point_to_dense_forward.3} parent=0 // loop_header
    %s11 = sphi 0, %s15
    %p12 = scmp.ge.s32.totalorder %s11, 4
    %s21 = sphi 0, %s23
    %s24 = sphi 0, %s21
    %s25 = sphi 0, %s24
    %s41 = sphi 0, %s25
    %s45 = sphi 0, %s45
    %s47 = sphi 0, %s45
    %s48 = sphi 0, %s47
    %s62 = sphi 0, %s48
    %s66 = sphi 0, %s66
    %s68 = sphi 0, %s66
    %s69 = sphi 0, %s68
    %s83 = sphi 0, %s69
    %s87 = sphi 0, %s87
    %s89 = sphi 0, %s87
    %s90 = sphi 0, %s89
    %s104 = sphi 0, %s90
    %s108 = sphi 0, %s108
    %s110 = sphi 0, %s108
    %s111 = sphi 0, %s110
    %s125 = sphi 0, %s111
    %s131 = sphi 0, %s133
    %s134 = sphi 0, %s131
    %s135 = sphi 0, %s134
    %s151 = sphi 0, %s135
  $region4: #{point_to_dense_forward.3} parent=0 // loop_header_branch
    %14 = sbr.rel (%p12) target = $region8
  $region5: #{point_to_dense_forward.3} parent=0 // loop_body
    %s16 = ssub.s32 %s11, 1
    %s17 = ssub.s32 %s11, 2
    %s18 = sadd.s32 %s11, 1
    %s19 = ssub.s32 %s11, %s18
    %p20 = scmp.eq.s32.totalorder %s19, 0
    %s22 = sadd.s32 %s21, 1
    %s23 = scalar_select %p20, %s21, %s22
    %p26 = pneg %p20
    %p27 = scmp.eq.s32.totalorder %s11, 1
    %p28 = por %p26, %p27
    %p29 = scmp.ne.s32.totalorder %s21, %s24
    %p30 = scmp.eq.s32.totalorder %s11, 0
    %p31 = por %p29, %p30
    %p32 = scmp.ne.s32.totalorder %s21, %s24
    %p33 = scmp.eq.s32.totalorder %s16, 1
    %p34 = por %p32, %p33
    %p35 = scmp.ne.s32.totalorder %s24, %s25
    %p36 = scmp.eq.s32.totalorder %s16, 0
    %p37 = por %p35, %p36
    %p38 = scmp.ne.s32.totalorder %s24, %s25
    %p39 = scmp.eq.s32.totalorder %s17, 1
    %p40 = por %p38, %p39
    %p42 = scmp.ne.s32.totalorder %s25, %s41
    %p43 = scmp.eq.s32.totalorder %s17, 0
    %p44 = por %p42, %p43
    %s46 = sadd.s32 %s45, 1
    %p49 = scmp.eq.s32.totalorder %s11, 1
    %p50 = scmp.ne.s32.totalorder %s45, %s47
    %p51 = scmp.eq.s32.totalorder %s11, 0
    %p52 = por %p50, %p51
    %p53 = scmp.ne.s32.totalorder %s45, %s47
    %p54 = scmp.eq.s32.totalorder %s16, 1
    %p55 = por %p53, %p54
    %p56 = scmp.ne.s32.totalorder %s47, %s48
    %p57 = scmp.eq.s32.totalorder %s16, 0
    %p58 = por %p56, %p57
    %p59 = scmp.ne.s32.totalorder %s47, %s48
    %p60 = scmp.eq.s32.totalorder %s17, 1
    %p61 = por %p59, %p60
    %p63 = scmp.ne.s32.totalorder %s48, %s62
    %p64 = scmp.eq.s32.totalorder %s17, 0
    %p65 = por %p63, %p64
    %s67 = sadd.s32 %s66, 1
    %p70 = scmp.eq.s32.totalorder %s11, 1
    %p71 = scmp.ne.s32.totalorder %s66, %s68
    %p72 = scmp.eq.s32.totalorder %s11, 0
    %p73 = por %p71, %p72
    %p74 = scmp.ne.s32.totalorder %s66, %s68
    %p75 = scmp.eq.s32.totalorder %s16, 1
    %p76 = por %p74, %p75
    %p77 = scmp.ne.s32.totalorder %s68, %s69
    %p78 = scmp.eq.s32.totalorder %s16, 0
    %p79 = por %p77, %p78
    %p80 = scmp.ne.s32.totalorder %s68, %s69
    %p81 = scmp.eq.s32.totalorder %s17, 1
    %p82 = por %p80, %p81
    %p84 = scmp.ne.s32.totalorder %s69, %s83
    %p85 = scmp.eq.s32.totalorder %s17, 0
    %p86 = por %p84, %p85
    %s88 = sadd.s32 %s87, 1
    %p91 = scmp.eq.s32.totalorder %s11, 1
    %p92 = scmp.ne.s32.totalorder %s87, %s89
    %p93 = scmp.eq.s32.totalorder %s11, 0
    %p94 = por %p92, %p93
    %p95 = scmp.ne.s32.totalorder %s87, %s89
    %p96 = scmp.eq.s32.totalorder %s16, 1
    %p97 = por %p95, %p96
    %p98 = scmp.ne.s32.totalorder %s89, %s90
    %p99 = scmp.eq.s32.totalorder %s16, 0
    %p100 = por %p98, %p99
    %p101 = scmp.ne.s32.totalorder %s89, %s90
    %p102 = scmp.eq.s32.totalorder %s17, 1
    %p103 = por %p101, %p102
    %p105 = scmp.ne.s32.totalorder %s90, %s104
    %p106 = scmp.eq.s32.totalorder %s17, 0
    %p107 = por %p105, %p106
    %s109 = sadd.s32 %s108, 1
    %p112 = scmp.eq.s32.totalorder %s11, 1
    %p113 = scmp.ne.s32.totalorder %s108, %s110
    %p114 = scmp.eq.s32.totalorder %s11, 0
    %p115 = por %p113, %p114
    %p116 = scmp.ne.s32.totalorder %s108, %s110
    %p117 = scmp.eq.s32.totalorder %s16, 1
    %p118 = por %p116, %p117
    %p119 = scmp.ne.s32.totalorder %s110, %s111
    %p120 = scmp.eq.s32.totalorder %s16, 0
    %p121 = por %p119, %p120
    %p122 = scmp.ne.s32.totalorder %s110, %s111
    %p123 = scmp.eq.s32.totalorder %s17, 1
    %p124 = por %p122, %p123
    %p126 = scmp.ne.s32.totalorder %s111, %s125
    %p127 = scmp.eq.s32.totalorder %s17, 0
    %p128 = por %p126, %p127
    %s129 = ssub.s32 %s11, %s18
    %p130 = scmp.eq.s32.totalorder %s129, 0
    %s132 = sadd.s32 %s131, 1
    %s133 = scalar_select %p130, %s131, %s132
    %p136 = pneg %p130
    %p137 = scmp.eq.s32.totalorder %s11, 1
    %p138 = por %p136, %p137
    %p139 = scmp.ne.s32.totalorder %s131, %s134
    %p140 = scmp.eq.s32.totalorder %s11, 0
    %p141 = por %p139, %p140
    %p142 = scmp.ne.s32.totalorder %s131, %s134
    %p143 = scmp.eq.s32.totalorder %s16, 1
    %p144 = por %p142, %p143
    %p145 = scmp.ne.s32.totalorder %s134, %s135
    %p146 = scmp.eq.s32.totalorder %s16, 0
    %p147 = por %p145, %p146
    %p148 = scmp.ne.s32.totalorder %s134, %s135
    %p149 = scmp.eq.s32.totalorder %s17, 1
    %p150 = por %p148, %p149
    %p152 = scmp.ne.s32.totalorder %s135, %s151
    %p153 = scmp.eq.s32.totalorder %s17, 0
    %p154 = por %p152, %p153
    %p155 = scmp.le.s32.totalorder 1, %s11
    %p156 = scmp.lt.s32.totalorder %s11, 3
    %p157 = pnand %p155, %p156
    %p158 = pneg %p157
    // Predicated region
    $region9: #{point_to_dense_forward.3} parent=5 // pred_check
      _
    $region10: #{point_to_dense_forward.3} parent=5 // pred_check_branch
      %160 = sbr.rel (%p157) target = $region12
    $region11: #{point_to_dense_forward.3} parent=5 // pred_region
      %s161 = ssub.s32 %s11, 1
      // Predicated region
      $region13: #{point_to_dense_forward.3} parent=11 // pred_check
        %p162 = pneg %p58
      $region14: #{point_to_dense_forward.3} parent=11 // pred_check_branch
        %164 = sbr.rel (%p162) target = $region16
      $region15: #{point_to_dense_forward.3} parent=11 // pred_region
        _
      $region16: #{point_to_dense_forward.3} parent=11 // pred_fallthru
        _
      // Predicated region
      $region17: #{point_to_dense_forward.3} parent=11 // pred_check
        %p165 = pneg %p79
      $region18: #{point_to_dense_forward.3} parent=11 // pred_check_branch
        %167 = sbr.rel (%p165) target = $region20
      $region19: #{point_to_dense_forward.3} parent=11 // pred_region
        _
      $region20: #{point_to_dense_forward.3} parent=11 // pred_fallthru
        _
      // Predicated region
      $region21: #{point_to_dense_forward.3} parent=11 // pred_check
        %p168 = pneg %p100
      $region22: #{point_to_dense_forward.3} parent=11 // pred_check_branch
        %170 = sbr.rel (%p168) target = $region24
      $region23: #{point_to_dense_forward.3} parent=11 // pred_region
        _
      $region24: #{point_to_dense_forward.3} parent=11 // pred_fallthru
        _
      // Predicated region
      $region25: #{point_to_dense_forward.3} parent=11 // pred_check
        %p171 = pneg %p121
      $region26: #{point_to_dense_forward.3} parent=11 // pred_check_branch
        %173 = sbr.rel (%p171) target = $region28
      $region27: #{point_to_dense_forward.3} parent=11 // pred_region
        _
      $region28: #{point_to_dense_forward.3} parent=11 // pred_fallthru
        _
    $region12: #{point_to_dense_forward.3} parent=5 // pred_fallthru
      _
    %p174 = scmp.lt.s32.totalorder %s11, 2
    // Predicated region
    $region29: #{point_to_dense_forward.3} parent=5 // pred_check
      %p175 = pneg %p174
    $region30: #{point_to_dense_forward.3} parent=5 // pred_check_branch
      %177 = sbr.rel (%p175) target = $region32
    $region31: #{point_to_dense_forward.3} parent=5 // pred_region
      // Predicated region
      $region33: #{point_to_dense_forward.3} parent=31 // pred_check
        %p178 = pneg %p31
      $region34: #{point_to_dense_forward.3} parent=31 // pred_check_branch
        %180 = sbr.rel (%p178) target = $region36
      $region35: #{point_to_dense_forward.3} parent=31 // pred_region
        %s181 = smul.u32 10, %s11
        %p182 = scmp.lt.s32.totalorder %s181, 19
        %s183 = scalar_select %p182, %s181, 19
        %s184 = smul.addr %s183, 2
        %s185 = scalar_lea.vmem %s0, %s184
        %s186 = smul.u32 10, %s11
      $region36: #{point_to_dense_forward.3} parent=31 // pred_fallthru
        _
    $region32: #{point_to_dense_forward.3} parent=5 // pred_fallthru
      _
    %p187 = scmp.le.s32.totalorder 1, %s11
    %p188 = scmp.lt.s32.totalorder %s11, 3
    %p189 = pnand %p187, %p188
    %p190 = pneg %p189
    // Predicated region
    $region37: #{point_to_dense_forward.3} parent=5 // pred_check
      _
    $region38: #{point_to_dense_forward.3} parent=5 // pred_check_branch
      %192 = sbr.rel (%p189) target = $region40
    $region39: #{point_to_dense_forward.3} parent=5 // pred_region
      %s193 = ssub.s32 %s11, 1
      %s194 = smul.u32 10, %s16
      %p195 = scmp.lt.s32.totalorder %s194, 19
      %s196 = scalar_select %p195, %s194, 19
      %s197 = smul.addr %s196, 2
      %s198 = scalar_lea.vmem %s0, %s197
      %p199 = pneg %p37
      %p200 = pneg %p34
      %p201 = pneg %p58
      %p202 = pneg %p55
      %p203 = pneg %p79
      %p204 = pneg %p76
      %p205 = pneg %p100
      %p206 = pneg %p97
      %p207 = pneg %p121
      %p208 = pneg %p118
      %p209 = pneg %p147
      %p210 = pneg %p144
      %p211 = scmp.lt.s32.totalorder %s16, 1
      %s212 = scalar_select %p211, %s16, 1
      %s213 = smul.addr %s212, 4
      %s214 = scalar_lea.vmem %s5, %s213
      %s215 = smul.u32 10, %s16
      %p216 = scmp.lt.s32.totalorder %s215, 19
      %s217 = scalar_select %p216, %s215, 19
      %s218 = smul.addr %s217, 2
      %s219 = scalar_lea.vmem %s0, %s218
      %s220 = smul.u32 10, %s16
      %p221 = scmp.lt.s32.totalorder %s16, 1
      %s222 = scalar_select %p221, %s16, 1
      %s223 = smul.addr %s222, 4
      %s224 = scalar_lea.vmem %s5, %s223
      %v226 = vld [vmem:[%s219] sm:$0xff]
      %v227 = vld [vmem:[%s219 + $0x8] sm:$0xff]
      %v228 = vld [vmem:[%s219 + $0x10] sm:$0xf]
      %v229 = vld [vmem:[%s1] sm:$0x7]
      %v230 = vld [vmem:[%s2] sm:$0x1f]
      %232 = vset.pattern.permute.xlu0 0
      %233 = vperm.xlu0 %232, %v230
      %v234 = vpop.permute.xlu0 %233
      %v239 = vcombine.high %v226, %v226
      %v241 = vunpack.c.l.s4 1983009808
      %v242 = vunpack.c.0.s8 %v241
      %v243 = vlaneseq
      %v244 = vshrl.u32 %v243, 7
      %v245 = vsub.s32 %v242, %v244
      %v246 = vrot.slane %v226, %v245
      %v248 = vunpack.c.l.s4 1983009808
      %v249 = vunpack.c.0.s8 %v248
      %v250 = vlaneseq
      %v251 = vshrl.u32 %v250, 7
      %v252 = vsub.s32 %v249, %v251
      %v253 = vrot.slane %v239, %v252
      %v254 = vcombine.high %v246, %v246
      %v255 = vcombine.high %v253, %v253
      %v256 = vcombine.high %v227, %v227
      %v258 = vunpack.c.l.s4 1983009808
      %v259 = vunpack.c.0.s8 %v258
      %v260 = vlaneseq
      %v261 = vshrl.u32 %v260, 7
      %v262 = vsub.s32 %v259, %v261
      %v263 = vrot.slane %v227, %v262
      %v265 = vunpack.c.l.s4 1983009808
      %v266 = vunpack.c.0.s8 %v265
      %v267 = vlaneseq
      %v268 = vshrl.u32 %v267, 7
      %v269 = vsub.s32 %v266, %v268
      %v270 = vrot.slane %v256, %v269
      %v271 = vcombine.high %v263, %v263
      %v272 = vcombine.high %v270, %v270
      %v274 = vunpack.c.l.s4 1983009808
      %v275 = vunpack.c.0.s8 %v274
      %v276 = vlaneseq
      %v277 = vshrl.u32 %v276, 7
      %v278 = vsub.s32 %v275, %v277
      %v279 = vrot.slane %v228, %v278
      %v280 = vcombine.high %v279, %v279
      %vm281 = vcmask 31744
      %v283 = vsel %vm281, %v229, 0
      %vm285 = vcmask 1041408
      %v287 = vsel %vm285, %v246, 0
      %v290 = vsel %vm285, %v254, 0
      %v293 = vsel %vm285, %v253, 0
      %v296 = vsel %vm285, %v255, 0
      %v299 = vsel %vm285, %v263, 0
      %v302 = vsel %vm285, %v271, 0
      %v305 = vsel %vm285, %v270, 0
      %v308 = vsel %vm285, %v272, 0
      %v311 = vsel %vm285, %v279, 0
      %v314 = vsel %vm285, %v280, 0
      %316 = vmatprep.subr.bf16.mxu0 %v290
      %317 = vmatpush1.bf16.msra.mxu0 %v287
      %318 = vmatprep.subr.bf16.mxu0 0
      %319 = vmatpush1.bf16.msra.mxu0 0
      %320 = vmatprep.subr.bf16.mxu0 0
      %321 = vmatpush1.bf16.msra.mxu0 0
      %322 = vmatprep.subr.bf16.mxu0 0
      %323 = vmatpush1.bf16.msra.mxu0 0
      %324 = vmatprep.subr.bf16.mxu0 0
      %325 = vmatpush1.bf16.msra.mxu0 0
      %326 = vmatprep.subr.bf16.mxu0 0
      %327 = vmatpush1.bf16.msra.mxu0 0
      %328 = vmatprep.subr.bf16.mxu0 0
      %329 = vmatpush1.bf16.msra.mxu0 0
      %330 = vmatprep.subr.bf16.mxu0 0
      %331 = vmatpush1.bf16.msra.mxu0 0
      %332 = vmatprep.subr.bf16.mxu0 0
      %333 = vmatpush1.bf16.msra.mxu0 0
      %334 = vmatprep.subr.bf16.mxu0 0
      %335 = vmatpush1.bf16.msra.mxu0 0
      %336 = vmatprep.subr.bf16.mxu0 0
      %337 = vmatpush1.bf16.msra.mxu0 0
      %338 = vmatprep.subr.bf16.mxu0 0
      %339 = vmatpush1.bf16.msra.mxu0 0
      %340 = vmatprep.subr.bf16.mxu0 0
      %341 = vmatpush1.bf16.msra.mxu0 0
      %342 = vmatprep.subr.bf16.mxu0 0
      %343 = vmatpush1.bf16.msra.mxu0 0
      %344 = vmatprep.subr.bf16.mxu0 0
      %345 = vmatpush1.bf16.msra.mxu0 0
      %346 = vmatprep.subr.bf16.mxu0 0
      %347 = vmatpush1.bf16.msra.mxu0 0
      %348 = vmatprep.mubr.bf16.mxu0 0
      %349 = vmatmul.mubr.bf16.gmra.mrb[0].mxu0 %v283
      %v350 = vpop.f32.mrb[0].mxu0
      %v351 = vadd.f32 %v234, %v350
      %v352 = vpop.f32.mrb[0].mxu0
      %v353 = vadd.f32 %v234, %v352
      %v354 = vpop.f32.mrb[0].mxu0
      %v355 = vpop.f32.mrb[0].mxu0
      %356 = vdwg.mxu0
      %357 = vmatprep.subr.bf16.mxu0 %v296
      %358 = vmatpush1.bf16.msra.mxu0 %v293
      %359 = vmatprep.subr.bf16.mxu0 0
      %360 = vmatpush1.bf16.msra.mxu0 0
      %361 = vmatprep.subr.bf16.mxu0 0
      %362 = vmatpush1.bf16.msra.mxu0 0
      %363 = vmatprep.subr.bf16.mxu0 0
      %364 = vmatpush1.bf16.msra.mxu0 0
      %365 = vmatprep.subr.bf16.mxu0 0
      %366 = vmatpush1.bf16.msra.mxu0 0
      %367 = vmatprep.subr.bf16.mxu0 0
      %368 = vmatpush1.bf16.msra.mxu0 0
      %369 = vmatprep.subr.bf16.mxu0 0
      %370 = vmatpush1.bf16.msra.mxu0 0
      %371 = vmatprep.subr.bf16.mxu0 0
      %372 = vmatpush1.bf16.msra.mxu0 0
      %373 = vmatprep.subr.bf16.mxu0 0
      %374 = vmatpush1.bf16.msra.mxu0 0
      %375 = vmatprep.subr.bf16.mxu0 0
      %376 = vmatpush1.bf16.msra.mxu0 0
      %377 = vmatprep.subr.bf16.mxu0 0
      %378 = vmatpush1.bf16.msra.mxu0 0
      %379 = vmatprep.subr.bf16.mxu0 0
      %380 = vmatpush1.bf16.msra.mxu0 0
      %381 = vmatprep.subr.bf16.mxu0 0
      %382 = vmatpush1.bf16.msra.mxu0 0
      %383 = vmatprep.subr.bf16.mxu0 0
      %384 = vmatpush1.bf16.msra.mxu0 0
      %385 = vmatprep.subr.bf16.mxu0 0
      %386 = vmatpush1.bf16.msra.mxu0 0
      %387 = vmatprep.subr.bf16.mxu0 0
      %388 = vmatpush1.bf16.msra.mxu0 0
      %389 = vmatprep.mubr.bf16.mxu0 0
      %390 = vmatmul.mubr.bf16.gmra.mrb[0].mxu0 %v283
      %v391 = vpop.f32.mrb[0].mxu0
      %v392 = vadd.f32 %v234, %v391
      %v393 = vpop.f32.mrb[0].mxu0
      %v394 = vadd.f32 %v234, %v393
      %v395 = vpop.f32.mrb[0].mxu0
      %v396 = vpop.f32.mrb[0].mxu0
      %397 = vdwg.mxu0
      %398 = vmatprep.subr.bf16.mxu0 %v302
      %399 = vmatpush1.bf16.msra.mxu0 %v299
      %400 = vmatprep.subr.bf16.mxu0 0
      %401 = vmatpush1.bf16.msra.mxu0 0
      %402 = vmatprep.subr.bf16.mxu0 0
      %403 = vmatpush1.bf16.msra.mxu0 0
      %404 = vmatprep.subr.bf16.mxu0 0
      %405 = vmatpush1.bf16.msra.mxu0 0
      %406 = vmatprep.subr.bf16.mxu0 0
      %407 = vmatpush1.bf16.msra.mxu0 0
      %408 = vmatprep.subr.bf16.mxu0 0
      %409 = vmatpush1.bf16.msra.mxu0 0
      %410 = vmatprep.subr.bf16.mxu0 0
      %411 = vmatpush1.bf16.msra.mxu0 0
      %412 = vmatprep.subr.bf16.mxu0 0
      %413 = vmatpush1.bf16.msra.mxu0 0
      %414 = vmatprep.subr.bf16.mxu0 0
      %415 = vmatpush1.bf16.msra.mxu0 0
      %416 = vmatprep.subr.bf16.mxu0 0
      %417 = vmatpush1.bf16.msra.mxu0 0
      %418 = vmatprep.subr.bf16.mxu0 0
      %419 = vmatpush1.bf16.msra.mxu0 0
      %420 = vmatprep.subr.bf16.mxu0 0
      %421 = vmatpush1.bf16.msra.mxu0 0
      %422 = vmatprep.subr.bf16.mxu0 0
      %423 = vmatpush1.bf16.msra.mxu0 0
      %424 = vmatprep.subr.bf16.mxu0 0
      %425 = vmatpush1.bf16.msra.mxu0 0
      %426 = vmatprep.subr.bf16.mxu0 0
      %427 = vmatpush1.bf16.msra.mxu0 0
      %428 = vmatprep.subr.bf16.mxu0 0
      %429 = vmatpush1.bf16.msra.mxu0 0
      %430 = vmatprep.mubr.bf16.mxu0 0
      %431 = vmatmul.mubr.bf16.gmra.mrb[0].mxu0 %v283
      %v432 = vpop.f32.mrb[0].mxu0
      %v433 = vadd.f32 %v234, %v432
      %v434 = vpop.f32.mrb[0].mxu0
      %v435 = vadd.f32 %v234, %v434
      %v436 = vpop.f32.mrb[0].mxu0
      %v437 = vpop.f32.mrb[0].mxu0
      %438 = vdwg.mxu0
      %439 = vmatprep.subr.bf16.mxu0 %v308
      %440 = vmatpush1.bf16.msra.mxu0 %v305
      %441 = vmatprep.subr.bf16.mxu0 0
      %442 = vmatpush1.bf16.msra.mxu0 0
      %443 = vmatprep.subr.bf16.mxu0 0
      %444 = vmatpush1.bf16.msra.mxu0 0
      %445 = vmatprep.subr.bf16.mxu0 0
      %446 = vmatpush1.bf16.msra.mxu0 0
      %447 = vmatprep.subr.bf16.mxu0 0
      %448 = vmatpush1.bf16.msra.mxu0 0
      %449 = vmatprep.subr.bf16.mxu0 0
      %450 = vmatpush1.bf16.msra.mxu0 0
      %451 = vmatprep.subr.bf16.mxu0 0
      %452 = vmatpush1.bf16.msra.mxu0 0
      %453 = vmatprep.subr.bf16.mxu0 0
      %454 = vmatpush1.bf16.msra.mxu0 0
      %455 = vmatprep.subr.bf16.mxu0 0
      %456 = vmatpush1.bf16.msra.mxu0 0
      %457 = vmatprep.subr.bf16.mxu0 0
      %458 = vmatpush1.bf16.msra.mxu0 0
      %459 = vmatprep.subr.bf16.mxu0 0
      %460 = vmatpush1.bf16.msra.mxu0 0
      %461 = vmatprep.subr.bf16.mxu0 0
      %462 = vmatpush1.bf16.msra.mxu0 0
      %463 = vmatprep.subr.bf16.mxu0 0
      %464 = vmatpush1.bf16.msra.mxu0 0
      %465 = vmatprep.subr.bf16.mxu0 0
      %466 = vmatpush1.bf16.msra.mxu0 0
      %467 = vmatprep.subr.bf16.mxu0 0
      %468 = vmatpush1.bf16.msra.mxu0 0
      %469 = vmatprep.subr.bf16.mxu0 0
      %470 = vmatpush1.bf16.msra.mxu0 0
      %471 = vmatprep.mubr.bf16.mxu0 0
      %472 = vmatmul.mubr.bf16.gmra.mrb[0].mxu0 %v283
      %v473 = vpop.f32.mrb[0].mxu0
      %v474 = vadd.f32 %v234, %v473
      %v475 = vpop.f32.mrb[0].mxu0
      %v476 = vadd.f32 %v234, %v475
      %v477 = vpop.f32.mrb[0].mxu0
      %v478 = vpop.f32.mrb[0].mxu0
      %479 = vdwg.mxu0
      %480 = vmatprep.subr.bf16.mxu0 %v314
      %481 = vmatpush1.bf16.msra.mxu0 %v311
      %482 = vmatprep.subr.bf16.mxu0 0
      %483 = vmatpush1.bf16.msra.mxu0 0
      %484 = vmatprep.subr.bf16.mxu0 0
      %485 = vmatpush1.bf16.msra.mxu0 0
      %486 = vmatprep.subr.bf16.mxu0 0
      %487 = vmatpush1.bf16.msra.mxu0 0
      %488 = vmatprep.subr.bf16.mxu0 0
      %489 = vmatpush1.bf16.msra.mxu0 0
      %490 = vmatprep.subr.bf16.mxu0 0
      %491 = vmatpush1.bf16.msra.mxu0 0
      %492 = vmatprep.subr.bf16.mxu0 0
      %493 = vmatpush1.bf16.msra.mxu0 0
      %494 = vmatprep.subr.bf16.mxu0 0
      %495 = vmatpush1.bf16.msra.mxu0 0
      %496 = vmatprep.subr.bf16.mxu0 0
      %497 = vmatpush1.bf16.msra.mxu0 0
      %498 = vmatprep.subr.bf16.mxu0 0
      %499 = vmatpush1.bf16.msra.mxu0 0
      %500 = vmatprep.subr.bf16.mxu0 0
      %501 = vmatpush1.bf16.msra.mxu0 0
      %502 = vmatprep.subr.bf16.mxu0 0
      %503 = vmatpush1.bf16.msra.mxu0 0
      %504 = vmatprep.subr.bf16.mxu0 0
      %505 = vmatpush1.bf16.msra.mxu0 0
      %506 = vmatprep.subr.bf16.mxu0 0
      %507 = vmatpush1.bf16.msra.mxu0 0
      %508 = vmatprep.subr.bf16.mxu0 0
      %509 = vmatpush1.bf16.msra.mxu0 0
      %510 = vmatprep.subr.bf16.mxu0 0
      %511 = vmatpush1.bf16.msra.mxu0 0
      %512 = vmatprep.mubr.bf16.mxu0 0
      %513 = vmatmul.mubr.bf16.gmra.mrb[0].mxu0 %v283
      %v514 = vpop.f32.mrb[0].mxu0
      %v515 = vadd.f32 %v234, %v514
      %v516 = vpop.f32.mrb[0].mxu0
      %v517 = vadd.f32 %v234, %v516
      %v518 = vpop.f32.mrb[0].mxu0
      %v519 = vpop.f32.mrb[0].mxu0
      %520 = vdwg.mxu0
      %v521 = vmul.f32 %v351, 0.5
      %v522 = vmul.f32 %v353, 0.5
      %v523 = vmul.f32 %v392, 0.5
      %v524 = vmul.f32 %v394, 0.5
      %v525 = vmul.f32 %v433, 0.5
      %v526 = vmul.f32 %v435, 0.5
      %v527 = vmul.f32 %v474, 0.5
      %v528 = vmul.f32 %v476, 0.5
      %v529 = vmul.f32 %v515, 0.5
      %v530 = vmul.f32 %v517, 0.5
      %v531 = vmul.f32 %v351, 0.044715
      %v532 = vmul.f32 %v353, 0.044715
      %v533 = vmul.f32 %v392, 0.044715
      %v534 = vmul.f32 %v394, 0.044715
      %v535 = vmul.f32 %v433, 0.044715
      %v536 = vmul.f32 %v435, 0.044715
      %v537 = vmul.f32 %v474, 0.044715
      %v538 = vmul.f32 %v476, 0.044715
      %v539 = vmul.f32 %v515, 0.044715
      %v540 = vmul.f32 %v517, 0.044715
      %v541 = vmul.f32 %v531, %v351
      %v542 = vmul.f32 %v532, %v353
      %v543 = vmul.f32 %v533, %v392
      %v544 = vmul.f32 %v534, %v394
      %v545 = vmul.f32 %v535, %v433
      %v546 = vmul.f32 %v536, %v435
      %v547 = vmul.f32 %v537, %v474
      %v548 = vmul.f32 %v538, %v476
      %v549 = vmul.f32 %v539, %v515
      %v550 = vmul.f32 %v540, %v517
      %v551 = vmul.f32 %v541, %v351
      %v552 = vmul.f32 %v542, %v353
      %v553 = vmul.f32 %v543, %v392
      %v554 = vmul.f32 %v544, %v394
      %v555 = vmul.f32 %v545, %v433
      %v556 = vmul.f32 %v546, %v435
      %v557 = vmul.f32 %v547, %v474
      %v558 = vmul.f32 %v548, %v476
      %v559 = vmul.f32 %v549, %v515
      %v560 = vmul.f32 %v550, %v517
      %v561 = vadd.f32 %v351, %v551
      %v562 = vadd.f32 %v353, %v552
      %v563 = vadd.f32 %v392, %v553
      %v564 = vadd.f32 %v394, %v554
      %v565 = vadd.f32 %v433, %v555
      %v566 = vadd.f32 %v435, %v556
      %v567 = vadd.f32 %v474, %v557
      %v568 = vadd.f32 %v476, %v558
      %v569 = vadd.f32 %v515, %v559
      %v570 = vadd.f32 %v517, %v560
      %v571 = vmul.f32 %v561, 0.7978846
      %v572 = vmul.f32 %v562, 0.7978846
      %v573 = vmul.f32 %v563, 0.7978846
      %v574 = vmul.f32 %v564, 0.7978846
      %v575 = vmul.f32 %v565, 0.7978846
      %v576 = vmul.f32 %v566, 0.7978846
      %v577 = vmul.f32 %v567, 0.7978846
      %v578 = vmul.f32 %v568, 0.7978846
      %v579 = vmul.f32 %v569, 0.7978846
      %v580 = vmul.f32 %v570, 0.7978846
      %v581 = vtanh.pop %v571
      %v582 = vtanh.pop %v572
      %v583 = vtanh.pop %v573
      %v584 = vtanh.pop %v574
      %v585 = vtanh.pop %v575
      %v586 = vtanh.pop %v576
      %v587 = vtanh.pop %v577
      %v588 = vtanh.pop %v578
      %v589 = vtanh.pop %v579
      %v590 = vtanh.pop %v580
      %v591 = vadd.f32 %v581, 1.0
      %v592 = vadd.f32 %v582, 1.0
      %v593 = vadd.f32 %v583, 1.0
      %v594 = vadd.f32 %v584, 1.0
      %v595 = vadd.f32 %v585, 1.0
      %v596 = vadd.f32 %v586, 1.0
      %v597 = vadd.f32 %v587, 1.0
      %v598 = vadd.f32 %v588, 1.0
      %v599 = vadd.f32 %v589, 1.0
      %v600 = vadd.f32 %v590, 1.0
      %v601 = vmul.f32 %v521, %v591
      %v602 = vmul.f32 %v522, %v592
      %v603 = vmul.f32 %v523, %v593
      %v604 = vmul.f32 %v524, %v594
      %v605 = vmul.f32 %v525, %v595
      %v606 = vmul.f32 %v526, %v596
      %v607 = vmul.f32 %v527, %v597
      %v608 = vmul.f32 %v528, %v598
      %v609 = vmul.f32 %v529, %v599
      %v610 = vmul.f32 %v530, %v600
      %v611 = vld [vmem:[%s3] sm:$0xf]
      %v612 = vpack.c.bf16 %v601, %v601
      %v613 = vpack.c.bf16 %v602, %v602
      %v614 = vpack.c.bf16 %v603, %v603
      %v615 = vpack.c.bf16 %v604, %v604
      %v616 = vpack.c.bf16 %v605, %v605
      %v617 = vpack.c.bf16 %v606, %v606
      %v618 = vpack.c.bf16 %v607, %v607
      %v619 = vpack.c.bf16 %v608, %v608
      %v620 = vpack.c.bf16 %v609, %v609
      %v621 = vpack.c.bf16 %v610, %v610
      %v622 = vld [vmem:[%s4] sm:$0xff]
      %624 = vset.pattern.permute.xlu0 0
      %625 = vperm.xlu0 %624, %v622
      %v626 = vpop.permute.xlu0 %625
      %vm628 = vcmask 39936
      %v630 = vsel %vm628, %v611, 0
      %vm632 = vcmask 1042432
      %v633 = vsel %vm285, 4294967295, 65535
      %v634 = vsel %vm632, %v633, 0
      %v636 = vand.u32 %v612, %v634
      %v639 = vand.u32 %v613, %v634
      %v642 = vand.u32 %v614, %v634
      %v645 = vand.u32 %v615, %v634
      %v648 = vand.u32 %v616, %v634
      %v651 = vand.u32 %v617, %v634
      %v654 = vand.u32 %v618, %v634
      %v657 = vand.u32 %v619, %v634
      %v660 = vand.u32 %v620, %v634
      %v663 = vand.u32 %v621, %v634
      %665 = vmatprep.subr.bf16.mxu0 %v639
      %666 = vmatpush1.bf16.msra.mxu0 %v636
      %667 = vmatprep.subr.bf16.mxu0 0
      %668 = vmatpush1.bf16.msra.mxu0 0
      %669 = vmatprep.subr.bf16.mxu0 0
      %670 = vmatpush1.bf16.msra.mxu0 0
      %671 = vmatprep.subr.bf16.mxu0 0
      %672 = vmatpush1.bf16.msra.mxu0 0
      %673 = vmatprep.subr.bf16.mxu0 0
      %674 = vmatpush1.bf16.msra.mxu0 0
      %675 = vmatprep.subr.bf16.mxu0 0
      %676 = vmatpush1.bf16.msra.mxu0 0
      %677 = vmatprep.subr.bf16.mxu0 0
      %678 = vmatpush1.bf16.msra.mxu0 0
      %679 = vmatprep.subr.bf16.mxu0 0
      %680 = vmatpush1.bf16.msra.mxu0 0
      %681 = vmatprep.subr.bf16.mxu0 0
      %682 = vmatpush1.bf16.msra.mxu0 0
      %683 = vmatprep.subr.bf16.mxu0 0
      %684 = vmatpush1.bf16.msra.mxu0 0
      %685 = vmatprep.subr.bf16.mxu0 0
      %686 = vmatpush1.bf16.msra.mxu0 0
      %687 = vmatprep.subr.bf16.mxu0 0
      %688 = vmatpush1.bf16.msra.mxu0 0
      %689 = vmatprep.subr.bf16.mxu0 0
      %690 = vmatpush1.bf16.msra.mxu0 0
      %691 = vmatprep.subr.bf16.mxu0 0
      %692 = vmatpush1.bf16.msra.mxu0 0
      %693 = vmatprep.subr.bf16.mxu0 0
      %694 = vmatpush1.bf16.msra.mxu0 0
      %695 = vmatprep.subr.bf16.mxu0 0
      %696 = vmatpush1.bf16.msra.mxu0 0
      %697 = vmatprep.mubr.bf16.mxu0 0
      %698 = vmatmul.mubr.bf16.gmra.mrb[0].mxu0 %v630
      %v699 = vpop.f32.mrb[0].mxu0
      %v700 = vadd.f32 %v626, %v699
      %v701 = vpop.f32.mrb[0].mxu0
      %v702 = vadd.f32 %v626, %v701
      %v703 = vpop.f32.mrb[0].mxu0
      %v704 = vpop.f32.mrb[0].mxu0
      %705 = vdwg.mxu0
      %706 = vmatprep.subr.bf16.mxu0 %v645
      %707 = vmatpush1.bf16.msra.mxu0 %v642
      %708 = vmatprep.subr.bf16.mxu0 0
      %709 = vmatpush1.bf16.msra.mxu0 0
      %710 = vmatprep.subr.bf16.mxu0 0
      %711 = vmatpush1.bf16.msra.mxu0 0
      %712 = vmatprep.subr.bf16.mxu0 0
      %713 = vmatpush1.bf16.msra.mxu0 0
      %714 = vmatprep.subr.bf16.mxu0 0
      %715 = vmatpush1.bf16.msra.mxu0 0
      %716 = vmatprep.subr.bf16.mxu0 0
      %717 = vmatpush1.bf16.msra.mxu0 0
      %718 = vmatprep.subr.bf16.mxu0 0
      %719 = vmatpush1.bf16.msra.mxu0 0
      %720 = vmatprep.subr.bf16.mxu0 0
      %721 = vmatpush1.bf16.msra.mxu0 0
      %722 = vmatprep.subr.bf16.mxu0 0
      %723 = vmatpush1.bf16.msra.mxu0 0
      %724 = vmatprep.subr.bf16.mxu0 0
      %725 = vmatpush1.bf16.msra.mxu0 0
      %726 = vmatprep.subr.bf16.mxu0 0
      %727 = vmatpush1.bf16.msra.mxu0 0
      %728 = vmatprep.subr.bf16.mxu0 0
      %729 = vmatpush1.bf16.msra.mxu0 0
      %730 = vmatprep.subr.bf16.mxu0 0
      %731 = vmatpush1.bf16.msra.mxu0 0
      %732 = vmatprep.subr.bf16.mxu0 0
      %733 = vmatpush1.bf16.msra.mxu0 0
      %734 = vmatprep.subr.bf16.mxu0 0
      %735 = vmatpush1.bf16.msra.mxu0 0
      %736 = vmatprep.subr.bf16.mxu0 0
      %737 = vmatpush1.bf16.msra.mxu0 0
      %738 = vmatprep.mubr.bf16.mxu0 0
      %739 = vmatmul.mubr.bf16.gmra.mrb[0].mxu0 %v630
      %v740 = vpop.f32.mrb[0].mxu0
      %v741 = vadd.f32 %v626, %v740
      %v742 = vpop.f32.mrb[0].mxu0
      %v743 = vadd.f32 %v626, %v742
      %v744 = vpop.f32.mrb[0].mxu0
      %v745 = vpop.f32.mrb[0].mxu0
      %746 = vdwg.mxu0
      %747 = vmatprep.subr.bf16.mxu0 %v651
      %748 = vmatpush1.bf16.msra.mxu0 %v648
      %749 = vmatprep.subr.bf16.mxu0 0
      %750 = vmatpush1.bf16.msra.mxu0 0
      %751 = vmatprep.subr.bf16.mxu0 0
      %752 = vmatpush1.bf16.msra.mxu0 0
      %753 = vmatprep.subr.bf16.mxu0 0
      %754 = vmatpush1.bf16.msra.mxu0 0
      %755 = vmatprep.subr.bf16.mxu0 0
      %756 = vmatpush1.bf16.msra.mxu0 0
      %757 = vmatprep.subr.bf16.mxu0 0
      %758 = vmatpush1.bf16.msra.mxu0 0
      %759 = vmatprep.subr.bf16.mxu0 0
      %760 = vmatpush1.bf16.msra.mxu0 0
      %761 = vmatprep.subr.bf16.mxu0 0
      %762 = vmatpush1.bf16.msra.mxu0 0
      %763 = vmatprep.subr.bf16.mxu0 0
      %764 = vmatpush1.bf16.msra.mxu0 0
      %765 = vmatprep.subr.bf16.mxu0 0
      %766 = vmatpush1.bf16.msra.mxu0 0
      %767 = vmatprep.subr.bf16.mxu0 0
      %768 = vmatpush1.bf16.msra.mxu0 0
      %769 = vmatprep.subr.bf16.mxu0 0
      %770 = vmatpush1.bf16.msra.mxu0 0
      %771 = vmatprep.subr.bf16.mxu0 0
      %772 = vmatpush1.bf16.msra.mxu0 0
      %773 = vmatprep.subr.bf16.mxu0 0
      %774 = vmatpush1.bf16.msra.mxu0 0
      %775 = vmatprep.subr.bf16.mxu0 0
      %776 = vmatpush1.bf16.msra.mxu0 0
      %777 = vmatprep.subr.bf16.mxu0 0
      %778 = vmatpush1.bf16.msra.mxu0 0
      %779 = vmatprep.mubr.bf16.mxu0 0
      %780 = vmatmul.mubr.bf16.gmra.mrb[0].mxu0 %v630
      %v781 = vpop.f32.mrb[0].mxu0
      %v782 = vadd.f32 %v626, %v781
      %v783 = vpop.f32.mrb[0].mxu0
      %v784 = vadd.f32 %v626, %v783
      %v785 = vpop.f32.mrb[0].mxu0
      %v786 = vpop.f32.mrb[0].mxu0
      %787 = vdwg.mxu0
      %788 = vmatprep.subr.bf16.mxu0 %v657
      %789 = vmatpush1.bf16.msra.mxu0 %v654
      %790 = vmatprep.subr.bf16.mxu0 0
      %791 = vmatpush1.bf16.msra.mxu0 0
      %792 = vmatprep.subr.bf16.mxu0 0
      %793 = vmatpush1.bf16.msra.mxu0 0
      %794 = vmatprep.subr.bf16.mxu0 0
      %795 = vmatpush1.bf16.msra.mxu0 0
      %796 = vmatprep.subr.bf16.mxu0 0
      %797 = vmatpush1.bf16.msra.mxu0 0
      %798 = vmatprep.subr.bf16.mxu0 0
      %799 = vmatpush1.bf16.msra.mxu0 0
      %800 = vmatprep.subr.bf16.mxu0 0
      %801 = vmatpush1.bf16.msra.mxu0 0
      %802 = vmatprep.subr.bf16.mxu0 0
      %803 = vmatpush1.bf16.msra.mxu0 0
      %804 = vmatprep.subr.bf16.mxu0 0
      %805 = vmatpush1.bf16.msra.mxu0 0
      %806 = vmatprep.subr.bf16.mxu0 0
      %807 = vmatpush1.bf16.msra.mxu0 0
      %808 = vmatprep.subr.bf16.mxu0 0
      %809 = vmatpush1.bf16.msra.mxu0 0
      %810 = vmatprep.subr.bf16.mxu0 0
      %811 = vmatpush1.bf16.msra.mxu0 0
      %812 = vmatprep.subr.bf16.mxu0 0
      %813 = vmatpush1.bf16.msra.mxu0 0
      %814 = vmatprep.subr.bf16.mxu0 0
      %815 = vmatpush1.bf16.msra.mxu0 0
      %816 = vmatprep.subr.bf16.mxu0 0
      %817 = vmatpush1.bf16.msra.mxu0 0
      %818 = vmatprep.subr.bf16.mxu0 0
      %819 = vmatpush1.bf16.msra.mxu0 0
      %820 = vmatprep.mubr.bf16.mxu0 0
      %821 = vmatmul.mubr.bf16.gmra.mrb[0].mxu0 %v630
      %v822 = vpop.f32.mrb[0].mxu0
      %v823 = vadd.f32 %v626, %v822
      %v824 = vpop.f32.mrb[0].mxu0
      %v825 = vadd.f32 %v626, %v824
      %v826 = vpop.f32.mrb[0].mxu0
      %v827 = vpop.f32.mrb[0].mxu0
      %828 = vdwg.mxu0
      %829 = vmatprep.subr.bf16.mxu0 %v663
      %830 = vmatpush1.bf16.msra.mxu0 %v660
      %831 = vmatprep.subr.bf16.mxu0 0
      %832 = vmatpush1.bf16.msra.mxu0 0
      %833 = vmatprep.subr.bf16.mxu0 0
      %834 = vmatpush1.bf16.msra.mxu0 0
      %835 = vmatprep.subr.bf16.mxu0 0
      %836 = vmatpush1.bf16.msra.mxu0 0
      %837 = vmatprep.subr.bf16.mxu0 0
      %838 = vmatpush1.bf16.msra.mxu0 0
      %839 = vmatprep.subr.bf16.mxu0 0
      %840 = vmatpush1.bf16.msra.mxu0 0
      %841 = vmatprep.subr.bf16.mxu0 0
      %842 = vmatpush1.bf16.msra.mxu0 0
      %843 = vmatprep.subr.bf16.mxu0 0
      %844 = vmatpush1.bf16.msra.mxu0 0
      %845 = vmatprep.subr.bf16.mxu0 0
      %846 = vmatpush1.bf16.msra.mxu0 0
      %847 = vmatprep.subr.bf16.mxu0 0
      %848 = vmatpush1.bf16.msra.mxu0 0
      %849 = vmatprep.subr.bf16.mxu0 0
      %850 = vmatpush1.bf16.msra.mxu0 0
      %851 = vmatprep.subr.bf16.mxu0 0
      %852 = vmatpush1.bf16.msra.mxu0 0
      %853 = vmatprep.subr.bf16.mxu0 0
      %854 = vmatpush1.bf16.msra.mxu0 0
      %855 = vmatprep.subr.bf16.mxu0 0
      %856 = vmatpush1.bf16.msra.mxu0 0
      %857 = vmatprep.subr.bf16.mxu0 0
      %858 = vmatpush1.bf16.msra.mxu0 0
      %859 = vmatprep.subr.bf16.mxu0 0
      %860 = vmatpush1.bf16.msra.mxu0 0
      %861 = vmatprep.mubr.bf16.mxu0 0
      %862 = vmatmul.mubr.bf16.gmra.mrb[0].mxu0 %v630
      %v863 = vpop.f32.mrb[0].mxu0
      %v864 = vadd.f32 %v626, %v863
      %v865 = vpop.f32.mrb[0].mxu0
      %v866 = vadd.f32 %v626, %v865
      %v867 = vpop.f32.mrb[0].mxu0
      %v868 = vpop.f32.mrb[0].mxu0
      %869 = vdwg.mxu0
      %v870 = vmul.f32 %v700, 0.5
      %v871 = vmul.f32 %v702, 0.5
      %v872 = vmul.f32 %v741, 0.5
      %v873 = vmul.f32 %v743, 0.5
      %v874 = vmul.f32 %v782, 0.5
      %v875 = vmul.f32 %v784, 0.5
      %v876 = vmul.f32 %v823, 0.5
      %v877 = vmul.f32 %v825, 0.5
      %v878 = vmul.f32 %v864, 0.5
      %v879 = vmul.f32 %v866, 0.5
      %v880 = vmul.f32 %v700, 0.044715
      %v881 = vmul.f32 %v702, 0.044715
      %v882 = vmul.f32 %v741, 0.044715
      %v883 = vmul.f32 %v743, 0.044715
      %v884 = vmul.f32 %v782, 0.044715
      %v885 = vmul.f32 %v784, 0.044715
      %v886 = vmul.f32 %v823, 0.044715
      %v887 = vmul.f32 %v825, 0.044715
      %v888 = vmul.f32 %v864, 0.044715
      %v889 = vmul.f32 %v866, 0.044715
      %v890 = vmul.f32 %v880, %v700
      %v891 = vmul.f32 %v881, %v702
      %v892 = vmul.f32 %v882, %v741
      %v893 = vmul.f32 %v883, %v743
      %v894 = vmul.f32 %v884, %v782
      %v895 = vmul.f32 %v885, %v784
      %v896 = vmul.f32 %v886, %v823
      %v897 = vmul.f32 %v887, %v825
      %v898 = vmul.f32 %v888, %v864
      %v899 = vmul.f32 %v889, %v866
      %v900 = vmul.f32 %v890, %v700
      %v901 = vmul.f32 %v891, %v702
      %v902 = vmul.f32 %v892, %v741
      %v903 = vmul.f32 %v893, %v743
      %v904 = vmul.f32 %v894, %v782
      %v905 = vmul.f32 %v895, %v784
      %v906 = vmul.f32 %v896, %v823
      %v907 = vmul.f32 %v897, %v825
      %v908 = vmul.f32 %v898, %v864
      %v909 = vmul.f32 %v899, %v866
      %v910 = vadd.f32 %v700, %v900
      %v911 = vadd.f32 %v702, %v901
      %v912 = vadd.f32 %v741, %v902
      %v913 = vadd.f32 %v743, %v903
      %v914 = vadd.f32 %v782, %v904
      %v915 = vadd.f32 %v784, %v905
      %v916 = vadd.f32 %v823, %v906
      %v917 = vadd.f32 %v825, %v907
      %v918 = vadd.f32 %v864, %v908
      %v919 = vadd.f32 %v866, %v909
      %v920 = vmul.f32 %v910, 0.7978846
      %v921 = vmul.f32 %v911, 0.7978846
      %v922 = vmul.f32 %v912, 0.7978846
      %v923 = vmul.f32 %v913, 0.7978846
      %v924 = vmul.f32 %v914, 0.7978846
      %v925 = vmul.f32 %v915, 0.7978846
      %v926 = vmul.f32 %v916, 0.7978846
      %v927 = vmul.f32 %v917, 0.7978846
      %v928 = vmul.f32 %v918, 0.7978846
      %v929 = vmul.f32 %v919, 0.7978846
      %v930 = vtanh.pop %v920
      %v931 = vtanh.pop %v921
      %v932 = vtanh.pop %v922
      %v933 = vtanh.pop %v923
      %v934 = vtanh.pop %v924
      %v935 = vtanh.pop %v925
      %v936 = vtanh.pop %v926
      %v937 = vtanh.pop %v927
      %v938 = vtanh.pop %v928
      %v939 = vtanh.pop %v929
      %v940 = vadd.f32 %v930, 1.0
      %v941 = vadd.f32 %v931, 1.0
      %v942 = vadd.f32 %v932, 1.0
      %v943 = vadd.f32 %v933, 1.0
      %v944 = vadd.f32 %v934, 1.0
      %v945 = vadd.f32 %v935, 1.0
      %v946 = vadd.f32 %v936, 1.0
      %v947 = vadd.f32 %v937, 1.0
      %v948 = vadd.f32 %v938, 1.0
      %v949 = vadd.f32 %v939, 1.0
      %v950 = vmul.f32 %v870, %v940
      %v951 = vmul.f32 %v871, %v941
      %v952 = vmul.f32 %v872, %v942
      %v953 = vmul.f32 %v873, %v943
      %v954 = vmul.f32 %v874, %v944
      %v955 = vmul.f32 %v875, %v945
      %v956 = vmul.f32 %v876, %v946
      %v957 = vmul.f32 %v877, %v947
      %v958 = vmul.f32 %v878, %v948
      %v959 = vmul.f32 %v879, %v949
      %v960 = vmax.f32 %v950, %v951
      %v961 = vmax.f32 %v960, %v952
      %v962 = vmax.f32 %v961, %v953
      %v963 = vmax.f32 %v962, %v954
      %v964 = vmax.f32 %v963, %v955
      %v965 = vmax.f32 %v964, %v956
      %v966 = vmax.f32 %v965, %v957
      %v967 = vmax.f32 %v966, %v958
      %v968 = vmax.f32 %v967, %v959
      %v969 = vpack.c.bf16 %v968, %v968
      %970 = vst [vmem:[%s224] sm:$0xf] %v969
      %p971 = scmp.lt.s32.totalorder %s16, 1
      %s972 = scalar_select %p971, %s16, 1
      %s973 = smul.addr %s972, 4
      %s974 = scalar_lea.vmem %s5, %s973
      // Predicated region
      $region41: #{point_to_dense_forward.3} parent=39 // pred_check
        %p975 = pneg %p144
      $region42: #{point_to_dense_forward.3} parent=39 // pred_check_branch
        %977 = sbr.rel (%p975) target = $region44
      $region43: #{point_to_dense_forward.3} parent=39 // pred_region
        _
      $region44: #{point_to_dense_forward.3} parent=39 // pred_fallthru
        _
    $region40: #{point_to_dense_forward.3} parent=5 // pred_fallthru
      _
    %p978 = scmp.le.s32.totalorder 2, %s11
    // Predicated region
    $region45: #{point_to_dense_forward.3} parent=5 // pred_check
      %p979 = pneg %p978
    $region46: #{point_to_dense_forward.3} parent=5 // pred_check_branch
      %981 = sbr.rel (%p979) target = $region48
    $region47: #{point_to_dense_forward.3} parent=5 // pred_region
      %s982 = ssub.s32 %s11, 2
      // Predicated region
      $region49: #{point_to_dense_forward.3} parent=47 // pred_check
        %p983 = pneg %p150
      $region50: #{point_to_dense_forward.3} parent=47 // pred_check_branch
        %985 = sbr.rel (%p983) target = $region52
      $region51: #{point_to_dense_forward.3} parent=47 // pred_region
        %p986 = scmp.lt.s32.totalorder %s17, 1
        %s987 = scalar_select %p986, %s17, 1
        %s988 = smul.addr %s987, 4
        %s989 = scalar_lea.vmem %s5, %s988
      $region52: #{point_to_dense_forward.3} parent=47 // pred_fallthru
        _
    $region48: #{point_to_dense_forward.3} parent=5 // pred_fallthru
      _
  $region6: #{point_to_dense_forward.3} parent=0 // loop_footer
    %s15 = sadd.s32 1, %s11
  $region7: #{point_to_dense_forward.3} parent=0 // loop_footer_branch
    %10 = sbr.rel target = $region3
  $region8: #{point_to_dense_forward.3} parent=0 // loop_exit
    _

// kernel: point_to_dense_forward.5
$region0: #{point_to_dense_forward.5}
  #allocation0 [shape = 'u32[]', space=smem, size = 0x4, offset = 0x4, fixed_abs, tag = 'smem constant byte address 0x4 - core index']
  #allocation1 [shape = 'u32[144,128]{1,0:T(1,128)}', space=vmem, size = 0x12000, scoped, tag = 'internal scratch']
  %s0 = inlined_call_operand.vmem [shape: bf16[40,256], index: 0, kind: input, shape index: {}]
  %s1 = inlined_call_operand.vmem [shape: bf16[35,40], index: 1, kind: input, shape index: {}]
  %s2 = inlined_call_operand.vmem [shape: f32[35,1], index: 2, kind: input, shape index: {}]
  %s3 = inlined_call_operand.vmem [shape: bf16[32,35], index: 3, kind: input, shape index: {}]
  %s4 = inlined_call_operand.vmem [shape: f32[32,1], index: 4, kind: input, shape index: {}]
  %s5 = inlined_call_operand.vmem [shape: f32[32,256], index: 5, kind: output, shape index: {}]
  %s6 = sld [smem:[#allocation0]]
  $region128: #{point_to_dense_forward.5} parent=0
    _
  %s8 = ssub.s32 1, %s6
  %s9 = scalar_select 0, %s8, %s6
  $region1: #{point_to_dense_forward.5} parent=0
    #allocation2 [shape = 'u8[20480]{0}', space=vmem, size = 0x5000, scoped, tag = 'input window, operand 0']
    #allocation3 [shape = 'u8[32768]{0}', space=vmem, size = 0x8000, scoped, tag = 'output window, operand 0']
    loop: start=0, step=1, limit=4
    $region2: #{point_to_dense_forward.5} parent=1 // loop_pre_header
      _
    $region3: #{point_to_dense_forward.5} parent=1 // loop_header
      %s11 = sphi 0, %s15
      %p12 = scmp.ge.s32.totalorder %s11, 4
      %s21 = sphi 0, %s23
      %s24 = sphi 0, %s21
      %s25 = sphi 0, %s24
      %s41 = sphi 0, %s25
      %s45 = sphi 0, %s45
      %s47 = sphi 0, %s45
      %s48 = sphi 0, %s47
      %s62 = sphi 0, %s48
      %s66 = sphi 0, %s66
      %s68 = sphi 0, %s66
      %s69 = sphi 0, %s68
      %s83 = sphi 0, %s69
      %s87 = sphi 0, %s87
      %s89 = sphi 0, %s87
      %s90 = sphi 0, %s89
      %s104 = sphi 0, %s90
      %s108 = sphi 0, %s108
      %s110 = sphi 0, %s108
      %s111 = sphi 0, %s110
      %s125 = sphi 0, %s111
      %s131 = sphi 0, %s133
      %s134 = sphi 0, %s131
      %s135 = sphi 0, %s134
      %s151 = sphi 0, %s135
    $region4: #{point_to_dense_forward.5} parent=1 // loop_header_branch
      %14 = sbr.rel (%p12) target = $region8
    $region5: #{point_to_dense_forward.5} parent=1 // loop_body
      %s16 = ssub.s32 %s11, 1
      %s17 = ssub.s32 %s11, 2
      %s18 = sadd.s32 %s11, 1
      %s19 = ssub.s32 %s11, %s18
      %p20 = scmp.eq.s32.totalorder %s19, 0
      %s22 = sadd.s32 %s21, 1
      %s23 = scalar_select %p20, %s21, %s22
      %p26 = pneg %p20
      %p27 = scmp.eq.s32.totalorder %s11, 1
      %p28 = por %p26, %p27
      %p29 = scmp.ne.s32.totalorder %s21, %s24
      %p30 = scmp.eq.s32.totalorder %s11, 0
      %p31 = por %p29, %p30
      %p32 = scmp.ne.s32.totalorder %s21, %s24
      %p33 = scmp.eq.s32.totalorder %s16, 1
      %p34 = por %p32, %p33
      %p35 = scmp.ne.s32.totalorder %s24, %s25
      %p36 = scmp.eq.s32.totalorder %s16, 0
      %p37 = por %p35, %p36
      %p38 = scmp.ne.s32.totalorder %s24, %s25
      %p39 = scmp.eq.s32.totalorder %s17, 1
      %p40 = por %p38, %p39
      %p42 = scmp.ne.s32.totalorder %s25, %s41
      %p43 = scmp.eq.s32.totalorder %s17, 0
      %p44 = por %p42, %p43
      %s46 = sadd.s32 %s45, 1
      %p49 = scmp.eq.s32.totalorder %s11, 1
      %p50 = scmp.ne.s32.totalorder %s45, %s47
      %p51 = scmp.eq.s32.totalorder %s11, 0
      %p52 = por %p50, %p51
      %p53 = scmp.ne.s32.totalorder %s45, %s47
      %p54 = scmp.eq.s32.totalorder %s16, 1
      %p55 = por %p53, %p54
      %p56 = scmp.ne.s32.totalorder %s47, %s48
      %p57 = scmp.eq.s32.totalorder %s16, 0
      %p58 = por %p56, %p57
      %p59 = scmp.ne.s32.totalorder %s47, %s48
      %p60 = scmp.eq.s32.totalorder %s17, 1
      %p61 = por %p59, %p60
      %p63 = scmp.ne.s32.totalorder %s48, %s62
      %p64 = scmp.eq.s32.totalorder %s17, 0
      %p65 = por %p63, %p64
      %s67 = sadd.s32 %s66, 1
      %p70 = scmp.eq.s32.totalorder %s11, 1
      %p71 = scmp.ne.s32.totalorder %s66, %s68
      %p72 = scmp.eq.s32.totalorder %s11, 0
      %p73 = por %p71, %p72
      %p74 = scmp.ne.s32.totalorder %s66, %s68
      %p75 = scmp.eq.s32.totalorder %s16, 1
      %p76 = por %p74, %p75
      %p77 = scmp.ne.s32.totalorder %s68, %s69
      %p78 = scmp.eq.s32.totalorder %s16, 0
      %p79 = por %p77, %p78
      %p80 = scmp.ne.s32.totalorder %s68, %s69
      %p81 = scmp.eq.s32.totalorder %s17, 1
      %p82 = por %p80, %p81
      %p84 = scmp.ne.s32.totalorder %s69, %s83
      %p85 = scmp.eq.s32.totalorder %s17, 0
      %p86 = por %p84, %p85
      %s88 = sadd.s32 %s87, 1
      %p91 = scmp.eq.s32.totalorder %s11, 1
      %p92 = scmp.ne.s32.totalorder %s87, %s89
      %p93 = scmp.eq.s32.totalorder %s11, 0
      %p94 = por %p92, %p93
      %p95 = scmp.ne.s32.totalorder %s87, %s89
      %p96 = scmp.eq.s32.totalorder %s16, 1
      %p97 = por %p95, %p96
      %p98 = scmp.ne.s32.totalorder %s89, %s90
      %p99 = scmp.eq.s32.totalorder %s16, 0
      %p100 = por %p98, %p99
      %p101 = scmp.ne.s32.totalorder %s89, %s90
      %p102 = scmp.eq.s32.totalorder %s17, 1
      %p103 = por %p101, %p102
      %p105 = scmp.ne.s32.totalorder %s90, %s104
      %p106 = scmp.eq.s32.totalorder %s17, 0
      %p107 = por %p105, %p106
      %s109 = sadd.s32 %s108, 1
      %p112 = scmp.eq.s32.totalorder %s11, 1
      %p113 = scmp.ne.s32.totalorder %s108, %s110
      %p114 = scmp.eq.s32.totalorder %s11, 0
      %p115 = por %p113, %p114
      %p116 = scmp.ne.s32.totalorder %s108, %s110
      %p117 = scmp.eq.s32.totalorder %s16, 1
      %p118 = por %p116, %p117
      %p119 = scmp.ne.s32.totalorder %s110, %s111
      %p120 = scmp.eq.s32.totalorder %s16, 0
      %p121 = por %p119, %p120
      %p122 = scmp.ne.s32.totalorder %s110, %s111
      %p123 = scmp.eq.s32.totalorder %s17, 1
      %p124 = por %p122, %p123
      %p126 = scmp.ne.s32.totalorder %s111, %s125
      %p127 = scmp.eq.s32.totalorder %s17, 0
      %p128 = por %p126, %p127
      %s129 = ssub.s32 %s11, %s18
      %p130 = scmp.eq.s32.totalorder %s129, 0
      %s132 = sadd.s32 %s131, 1
      %s133 = scalar_select %p130, %s131, %s132
      %p136 = pneg %p130
      %p137 = scmp.eq.s32.totalorder %s11, 1
      %p138 = por %p136, %p137
      %p139 = scmp.ne.s32.totalorder %s131, %s134
      %p140 = scmp.eq.s32.totalorder %s11, 0
      %p141 = por %p139, %p140
      %p142 = scmp.ne.s32.totalorder %s131, %s134
      %p143 = scmp.eq.s32.totalorder %s16, 1
      %p144 = por %p142, %p143
      %p145 = scmp.ne.s32.totalorder %s134, %s135
      %p146 = scmp.eq.s32.totalorder %s16, 0
      %p147 = por %p145, %p146
      %p148 = scmp.ne.s32.totalorder %s134, %s135
      %p149 = scmp.eq.s32.totalorder %s17, 1
      %p150 = por %p148, %p149
      %p152 = scmp.ne.s32.totalorder %s135, %s151
      %p153 = scmp.eq.s32.totalorder %s17, 0
      %p154 = por %p152, %p153
      %p155 = scmp.le.s32.totalorder 1, %s11
      %p156 = scmp.lt.s32.totalorder %s11, 3
      %p157 = pnand %p155, %p156
      %p158 = pneg %p157
      // Predicated region
      $region9: #{point_to_dense_forward.5} parent=5 // pred_check
        _
      $region10: #{point_to_dense_forward.5} parent=5 // pred_check_branch
        %160 = sbr.rel (%p157) target = $region12
      $region11: #{point_to_dense_forward.5} parent=5 // pred_region
        %s161 = ssub.s32 %s11, 1
        // Predicated region
        $region13: #{point_to_dense_forward.5} parent=11 // pred_check
          %p162 = pneg %p58
        $region14: #{point_to_dense_forward.5} parent=11 // pred_check_branch
          %164 = sbr.rel (%p162) target = $region16
        $region15: #{point_to_dense_forward.5} parent=11 // pred_region
          _
        $region16: #{point_to_dense_forward.5} parent=11 // pred_fallthru
          _
        // Predicated region
        $region17: #{point_to_dense_forward.5} parent=11 // pred_check
          %p165 = pneg %p79
        $region18: #{point_to_dense_forward.5} parent=11 // pred_check_branch
          %167 = sbr.rel (%p165) target = $region20
        $region19: #{point_to_dense_forward.5} parent=11 // pred_region
          _
        $region20: #{point_to_dense_forward.5} parent=11 // pred_fallthru
          _
        // Predicated region
        $region21: #{point_to_dense_forward.5} parent=11 // pred_check
          %p168 = pneg %p100
        $region22: #{point_to_dense_forward.5} parent=11 // pred_check_branch
          %170 = sbr.rel (%p168) target = $region24
        $region23: #{point_to_dense_forward.5} parent=11 // pred_region
          _
        $region24: #{point_to_dense_forward.5} parent=11 // pred_fallthru
          _
        // Predicated region
        $region25: #{point_to_dense_forward.5} parent=11 // pred_check
          %p171 = pneg %p121
        $region26: #{point_to_dense_forward.5} parent=11 // pred_check_branch
          %173 = sbr.rel (%p171) target = $region28
        $region27: #{point_to_dense_forward.5} parent=11 // pred_region
          _
        $region28: #{point_to_dense_forward.5} parent=11 // pred_fallthru
          _
      $region12: #{point_to_dense_forward.5} parent=5 // pred_fallthru
        _
      %p174 = scmp.lt.s32.totalorder %s11, 2
      // Predicated region
      $region29: #{point_to_dense_forward.5} parent=5 // pred_check
        %p175 = pneg %p174
      $region30: #{point_to_dense_forward.5} parent=5 // pred_check_branch
        %177 = sbr.rel (%p175) target = $region32
      $region31: #{point_to_dense_forward.5} parent=5 // pred_region
        // Predicated region
        $region33: #{point_to_dense_forward.5} parent=31 // pred_check
          %p178 = pneg %p31
        $region34: #{point_to_dense_forward.5} parent=31 // pred_check_branch
          %180 = sbr.rel (%p178) target = $region36
        $region35: #{point_to_dense_forward.5} parent=31 // pred_region
          %s181 = sand.u32 %s21, 1
          %s182 = sand.u32 %s21, 1
          %s183 = smul.addr %s182, 20
          %s184 = scalar_lea.vmem [#allocation2], %s183
          %s185 = smul.addr %s11, 4
          %s186 = scalar_lea.vmem %s0, %s185
          // Predicated region
          $region37: #{point_to_dense_forward.5} parent=35 // pred_check
            _
          $region38: #{point_to_dense_forward.5} parent=35 // pred_check_branch
            %188 = sbr.rel (0) target = $region40
          $region39: #{point_to_dense_forward.5} parent=35 // pred_region
            // Predicated region
            $region41: #{point_to_dense_forward.5} parent=39 // pred_check
              _
            $region42: #{point_to_dense_forward.5} parent=39 // pred_check_branch
              %190 = sbr.rel target = $region44
            $region43: #{point_to_dense_forward.5} parent=39 // pred_region
              // Predicated region
              $region56: #{point_to_dense_forward.5} parent=43 // pred_check
                _
              $region57: #{point_to_dense_forward.5} parent=43 // pred_check_branch
                %213 = sbr.rel (0) target = $region59
              $region58: #{point_to_dense_forward.5} parent=43 // pred_region
                loop: start=0, step=1, limit=1
                $region60: #{point_to_dense_forward.5} parent=58 // loop_pre_header
                  _
                $region61: #{point_to_dense_forward.5} parent=58 // loop_header
                  %s215 = sphi 0, %s219
                  %p216 = scmp.ge.s32.totalorder %s215, 1
                  %s220 = sphi %s186, %s186
                  %s221 = sphi %s184, %s184
                $region62: #{point_to_dense_forward.5} parent=58 // loop_header_branch
                  %218 = sbr.rel (%p216) target = $region66
                $region63: #{point_to_dense_forward.5} parent=58 // loop_body
                  _
                $region64: #{point_to_dense_forward.5} parent=58 // loop_footer
                  %s219 = sadd.s32 1, %s215
                $region65: #{point_to_dense_forward.5} parent=58 // loop_footer_branch
                  %214 = sbr.rel target = $region61
                $region66: #{point_to_dense_forward.5} parent=58 // loop_exit
                  _
                loop: start=0, step=1, limit=1
                $region67: #{point_to_dense_forward.5} parent=58 // loop_pre_header
                  _
                $region68: #{point_to_dense_forward.5} parent=58 // loop_header
                  %s224 = sphi 0, %s228
                  %p225 = scmp.ge.s32.totalorder %s224, 1
                  %s229 = sphi %s186, %s186
                  %s230 = sphi %s184, %s184
                $region69: #{point_to_dense_forward.5} parent=58 // loop_header_branch
                  %227 = sbr.rel (%p225) target = $region73
                $region70: #{point_to_dense_forward.5} parent=58 // loop_body
                  %v231 = vld [vmem:[%s229] sm:$0xf]
                  %232 = vst [vmem:[%s230] sm:$0xf] %v231
                  %v233 = vld [vmem:[%s229 + $0x8] sm:$0xf]
                  %234 = vst [vmem:[%s230 + $0x4] sm:$0xf] %v233
                  %v235 = vld [vmem:[%s229 + $0x10] sm:$0xf]
                  %236 = vst [vmem:[%s230 + $0x8] sm:$0xf] %v235
                  %v237 = vld [vmem:[%s229 + $0x18] sm:$0xf]
                  %238 = vst [vmem:[%s230 + $0xc] sm:$0xf] %v237
                  %v239 = vld [vmem:[%s229 + $0x20] sm:$0xf]
                  %240 = vst [vmem:[%s230 + $0x10] sm:$0xf] %v239
                $region71: #{point_to_dense_forward.5} parent=58 // loop_footer
                  %s228 = sadd.s32 1, %s224
                $region72: #{point_to_dense_forward.5} parent=58 // loop_footer_branch
                  %223 = sbr.rel target = $region68
                $region73: #{point_to_dense_forward.5} parent=58 // loop_exit
                  _
              $region59: #{point_to_dense_forward.5} parent=43 // pred_fallthru
                _
            $region44: #{point_to_dense_forward.5} parent=39 // pred_fallthru
              _
            // Predicated region
            $region45: #{point_to_dense_forward.5} parent=39 // pred_check
              _
            $region46: #{point_to_dense_forward.5} parent=39 // pred_check_branch
              %192 = sbr.rel (0) target = $region48
            $region47: #{point_to_dense_forward.5} parent=39 // pred_region
              loop: start=0, step=1, limit=1
              $region49: #{point_to_dense_forward.5} parent=47 // loop_pre_header
                _
              $region50: #{point_to_dense_forward.5} parent=47 // loop_header
                %s195 = sphi 0, %s199
                %p196 = scmp.ge.s32.totalorder %s195, 1
                %s200 = sphi %s186, %s186
                %s201 = sphi %s184, %s184
              $region51: #{point_to_dense_forward.5} parent=47 // loop_header_branch
                %198 = sbr.rel (%p196) target = $region55
              $region52: #{point_to_dense_forward.5} parent=47 // loop_body
                %v202 = vld [vmem:[%s200] sm:$0xf]
                %203 = vst [vmem:[%s201] sm:$0xf] %v202
                %v204 = vld [vmem:[%s200 + $0x8] sm:$0xf]
                %205 = vst [vmem:[%s201 + $0x4] sm:$0xf] %v204
                %v206 = vld [vmem:[%s200 + $0x10] sm:$0xf]
                %207 = vst [vmem:[%s201 + $0x8] sm:$0xf] %v206
                %v208 = vld [vmem:[%s200 + $0x18] sm:$0xf]
                %209 = vst [vmem:[%s201 + $0xc] sm:$0xf] %v208
                %v210 = vld [vmem:[%s200 + $0x20] sm:$0xf]
                %211 = vst [vmem:[%s201 + $0x10] sm:$0xf] %v210
              $region53: #{point_to_dense_forward.5} parent=47 // loop_footer
                %s199 = sadd.s32 1, %s195
              $region54: #{point_to_dense_forward.5} parent=47 // loop_footer_branch
                %194 = sbr.rel target = $region50
              $region55: #{point_to_dense_forward.5} parent=47 // loop_exit
                _
            $region48: #{point_to_dense_forward.5} parent=39 // pred_fallthru
              _
          $region40: #{point_to_dense_forward.5} parent=35 // pred_fallthru
            _
          %241 = vnop
        $region36: #{point_to_dense_forward.5} parent=31 // pred_fallthru
          _
      $region32: #{point_to_dense_forward.5} parent=5 // pred_fallthru
        _
      %p242 = scmp.le.s32.totalorder 1, %s11
      %p243 = scmp.lt.s32.totalorder %s11, 3
      %p244 = pnand %p242, %p243
      %p245 = pneg %p244
      // Predicated region
      $region74: #{point_to_dense_forward.5} parent=5 // pred_check
        _
      $region75: #{point_to_dense_forward.5} parent=5 // pred_check_branch
        %247 = sbr.rel (%p244) target = $region77
      $region76: #{point_to_dense_forward.5} parent=5 // pred_region
        %s248 = ssub.s32 %s11, 1
        %s249 = sand.u32 %s24, 1
        %s250 = sand.u32 %s24, 1
        %s251 = smul.addr %s250, 20
        %s252 = scalar_lea.vmem [#allocation2], %s251
        // Predicated region
        $region78: #{point_to_dense_forward.5} parent=76 // pred_check
          %p253 = pneg %p37
        $region79: #{point_to_dense_forward.5} parent=76 // pred_check_branch
          %255 = sbr.rel (%p253) target = $region81
        $region80: #{point_to_dense_forward.5} parent=76 // pred_region
          _
        $region81: #{point_to_dense_forward.5} parent=76 // pred_fallthru
          _
        %s256 = sand.u32 %s24, 1
        %s257 = sand.u32 %s24, 1
        %s258 = smul.addr %s257, 20
        %s259 = scalar_lea.vmem [#allocation2], %s258
        %p260 = pneg %p37
        %p261 = pneg %p34
        %p262 = pneg %p58
        %p263 = pneg %p55
        %p264 = pneg %p79
        %p265 = pneg %p76
        %p266 = pneg %p100
        %p267 = pneg %p97
        %p268 = pneg %p121
        %p269 = pneg %p118
        %p270 = pneg %p147
        %p271 = pneg %p144
        %s272 = sand.u32 %s134, 1
        %s273 = sand.u32 %s134, 1
        %s274 = smul.addr %s273, 32
        %s275 = scalar_lea.vmem [#allocation3], %s274
        %v277 = vld [vmem:[%s252] sm:$0xf]
        %v278 = vld [vmem:[%s252 + $0x4] sm:$0xf]
        %v279 = vld [vmem:[%s252 + $0x8] sm:$0xf]
        %v280 = vld [vmem:[%s252 + $0xc] sm:$0xf]
        %v281 = vld [vmem:[%s252 + $0x10] sm:$0xf]
        %v282 = vld [vmem:[%s1] sm:$0xf]
        %v283 = vld [vmem:[%s1 + $0x4] sm:$0xf]
        %v284 = vld [vmem:[%s1 + $0x8] sm:$0xf]
        %v285 = vld [vmem:[%s1 + $0xc] sm:$0xf]
        %v286 = vld [vmem:[%s1 + $0x10] sm:$0x3]
        %v287 = vld [vmem:[%s2] sm:$0xff]
        %v288 = vld [vmem:[%s2 + $0x8] sm:$0xff]
        %v289 = vld [vmem:[%s2 + $0x10] sm:$0xff]
        %v290 = vld [vmem:[%s2 + $0x18] sm:$0xff]
        %v291 = vld [vmem:[%s2 + $0x20] sm:$0x7]
        %293 = vset.pattern.permute.xlu0 0
        %294 = vperm.xlu0 %293, %v287
        %v295 = vpop.permute.xlu0 %294
        %298 = vset.pattern.permute.xlu0 0
        %299 = vperm.xlu0 %298, %v288
        %v300 = vpop.permute.xlu0 %299
        %303 = vset.pattern.permute.xlu0 0
        %304 = vperm.xlu0 %303, %v289
        %v305 = vpop.permute.xlu0 %304
        %308 = vset.pattern.permute.xlu0 0
        %309 = vperm.xlu0 %308, %v290
        %v310 = vpop.permute.xlu0 %309
        %313 = vset.pattern.permute.xlu0 0
        %314 = vperm.xlu0 %313, %v291
        %v315 = vpop.permute.xlu0 %314
        %v322 = vunpack.c.l.b16 %v282
        %v323 = vunpack.c.l.b16 %v283
        %v324 = vunpack.c.l.b16 %v284
        %v325 = vunpack.c.l.b16 %v285
        %v326 = vunpack.c.l.b16 %v286
        %v327 = vpack.c.b16 %v323, %v322
        %v328 = vpack.c.b16 %v325, %v324
        %v329 = vpack.c.b16 %v326, %v326
        %v335 = vunpack.c.l.b16 %v277
        %v336 = vunpack.c.l.b16 %v278
        %v337 = vunpack.c.l.b16 %v279
        %v338 = vunpack.c.l.b16 %v280
        %v339 = vunpack.c.l.b16 %v281
        %v340 = vpack.c.b16 %v336, %v335
        %v341 = vpack.c.b16 %v338, %v337
        %v342 = vpack.c.b16 %v339, %v339
        %vm345 = vcmask 326656
        %v347 = vsel %vm345, %v327, 0
        %v350 = vsel %vm345, %v328, 0
        %v353 = vsel %vm345, %v329, 0
        %vm355 = vcmask 1043456
        %v357 = vsel %vm355, %v342, 0
        %359 = vmatprep.subr.bf16.mxu0 0
        %360 = vmatpush1.bf16.msra.mxu0 %v340
        %361 = vmatprep.subr.bf16.mxu0 0
        %362 = vmatpush1.bf16.msra.mxu0 %v341
        %363 = vmatprep.subr.bf16.mxu0 0
        %364 = vmatpush1.bf16.msra.mxu0 %v357
        %365 = vmatprep.subr.bf16.mxu0 0
        %366 = vmatpush1.bf16.msra.mxu0 0
        %367 = vmatprep.subr.bf16.mxu0 0
        %368 = vmatpush1.bf16.msra.mxu0 0
        %369 = vmatprep.subr.bf16.mxu0 0
        %370 = vmatpush1.bf16.msra.mxu0 0
        %371 = vmatprep.subr.bf16.mxu0 0
        %372 = vmatpush1.bf16.msra.mxu0 0
        %373 = vmatprep.subr.bf16.mxu0 0
        %374 = vmatpush1.bf16.msra.mxu0 0
        %375 = vmatprep.subr.bf16.mxu0 0
        %376 = vmatpush1.bf16.msra.mxu0 0
        %377 = vmatprep.subr.bf16.mxu0 0
        %378 = vmatpush1.bf16.msra.mxu0 0
        %379 = vmatprep.subr.bf16.mxu0 0
        %380 = vmatpush1.bf16.msra.mxu0 0
        %381 = vmatprep.subr.bf16.mxu0 0
        %382 = vmatpush1.bf16.msra.mxu0 0
        %383 = vmatprep.subr.bf16.mxu0 0
        %384 = vmatpush1.bf16.msra.mxu0 0
        %385 = vmatprep.subr.bf16.mxu0 0
        %386 = vmatpush1.bf16.msra.mxu0 0
        %387 = vmatprep.subr.bf16.mxu0 0
        %388 = vmatpush1.bf16.msra.mxu0 0
        %389 = vmatprep.subr.bf16.mxu0 0
        %390 = vmatpush1.bf16.msra.mxu0 0
        %391 = vmatprep.mubr.bf16.mxu0 0
        %392 = vmatmul.mubr.bf16.gmra.mrb[0].mxu0 %v347
        %v393 = vpop.f32.mrb[0].mxu0
        %v394 = vadd.f32 %v295, %v393
        %v395 = vpop.f32.mrb[0].mxu0
        %v396 = vpop.f32.mrb[0].mxu0
        %v397 = vadd.f32 %v300, %v396
        %v398 = vpop.f32.mrb[0].mxu0
        %399 = vmatprep.mubr.bf16.mxu0 0
        %400 = vmatmul.mubr.bf16.gmra.mrb[0].mxu0 %v350
        %v401 = vpop.f32.mrb[0].mxu0
        %v402 = vadd.f32 %v305, %v401
        %v403 = vpop.f32.mrb[0].mxu0
        %v404 = vpop.f32.mrb[0].mxu0
        %v405 = vadd.f32 %v310, %v404
        %v406 = vpop.f32.mrb[0].mxu0
        %407 = vmatprep.mubr.bf16.mxu0 0
        %408 = vmatmul.mubr.bf16.gmra.mrb[0].mxu0 %v353
        %v409 = vpop.f32.mrb[0].mxu0
        %v410 = vadd.f32 %v315, %v409
        %v411 = vpop.f32.mrb[0].mxu0
        %v412 = vpop.f32.mrb[0].mxu0
        %v413 = vpop.f32.mrb[0].mxu0
        %414 = vdwg.mxu0
        %v415 = vmul.f32 %v394, 0.5
        %v416 = vmul.f32 %v397, 0.5
        %v417 = vmul.f32 %v402, 0.5
        %v418 = vmul.f32 %v405, 0.5
        %v419 = vmul.f32 %v410, 0.5
        %v420 = vmul.f32 %v394, 0.044715
        %v421 = vmul.f32 %v397, 0.044715
        %v422 = vmul.f32 %v402, 0.044715
        %v423 = vmul.f32 %v405, 0.044715
        %v424 = vmul.f32 %v410, 0.044715
        %v425 = vmul.f32 %v420, %v394
        %v426 = vmul.f32 %v421, %v397
        %v427 = vmul.f32 %v422, %v402
        %v428 = vmul.f32 %v423, %v405
        %v429 = vmul.f32 %v424, %v410
        %v430 = vmul.f32 %v425, %v394
        %v431 = vmul.f32 %v426, %v397
        %v432 = vmul.f32 %v427, %v402
        %v433 = vmul.f32 %v428, %v405
        %v434 = vmul.f32 %v429, %v410
        %v435 = vadd.f32 %v394, %v430
        %v436 = vadd.f32 %v397, %v431
        %v437 = vadd.f32 %v402, %v432
        %v438 = vadd.f32 %v405, %v433
        %v439 = vadd.f32 %v410, %v434
        %v440 = vmul.f32 %v435, 0.7978846
        %v441 = vmul.f32 %v436, 0.7978846
        %v442 = vmul.f32 %v437, 0.7978846
        %v443 = vmul.f32 %v438, 0.7978846
        %v444 = vmul.f32 %v439, 0.7978846
        %v445 = vtanh.pop %v440
        %v446 = vtanh.pop %v441
        %v447 = vtanh.pop %v442
        %v448 = vtanh.pop %v443
        %v449 = vtanh.pop %v444
        %v450 = vadd.f32 %v445, 1.0
        %v451 = vadd.f32 %v446, 1.0
        %v452 = vadd.f32 %v447, 1.0
        %v453 = vadd.f32 %v448, 1.0
        %v454 = vadd.f32 %v449, 1.0
        %v455 = vmul.f32 %v415, %v450
        %v456 = vmul.f32 %v416, %v451
        %v457 = vmul.f32 %v417, %v452
        %v458 = vmul.f32 %v418, %v453
        %v459 = vmul.f32 %v419, %v454
        %v460 = vld [vmem:[%s3] sm:$0xf]
        %v461 = vld [vmem:[%s3 + $0x4] sm:$0xf]
        %v462 = vld [vmem:[%s3 + $0x8] sm:$0xf]
        %v463 = vld [vmem:[%s3 + $0xc] sm:$0xf]
        %v464 = vpack.c.bf16 %v456, %v455
        %v465 = vpack.c.bf16 %v458, %v457
        %v466 = vpack.c.bf16 %v459, %v459
        %v467 = vld [vmem:[%s4] sm:$0xff]
        %v468 = vld [vmem:[%s4 + $0x8] sm:$0xff]
        %v469 = vld [vmem:[%s4 + $0x10] sm:$0xff]
        %v470 = vld [vmem:[%s4 + $0x18] sm:$0xff]
        %472 = vset.pattern.permute.xlu0 0
        %473 = vperm.xlu0 %472, %v467
        %v474 = vpop.permute.xlu0 %473
        %477 = vset.pattern.permute.xlu0 0
        %478 = vperm.xlu0 %477, %v468
        %v479 = vpop.permute.xlu0 %478
        %482 = vset.pattern.permute.xlu0 0
        %483 = vperm.xlu0 %482, %v469
        %v484 = vpop.permute.xlu0 %483
        %487 = vset.pattern.permute.xlu0 0
        %488 = vperm.xlu0 %487, %v470
        %v489 = vpop.permute.xlu0 %488
        %v495 = vunpack.c.l.b16 %v460
        %v496 = vunpack.c.l.b16 %v461
        %v497 = vunpack.c.l.b16 %v462
        %v498 = vunpack.c.l.b16 %v463
        %v499 = vpack.c.b16 %v496, %v495
        %v500 = vpack.c.b16 %v498, %v497
        %vm501 = vcmask 285696
        %v503 = vsel %vm501, %v499, 0
        %v506 = vsel %vm501, %v500, 0
        %vm508 = vcmask 1040384
        %vm509 = vcmask 1041408
        %v510 = vsel %vm508, 4294967295, 65535
        %v511 = vsel %vm509, %v510, 0
        %v513 = vand.u32 %v466, %v511
        %515 = vmatprep.subr.bf16.mxu0 0
        %516 = vmatpush1.bf16.msra.mxu0 %v464
        %517 = vmatprep.subr.bf16.mxu0 0
        %518 = vmatpush1.bf16.msra.mxu0 %v465
        %519 = vmatprep.subr.bf16.mxu0 0
        %520 = vmatpush1.bf16.msra.mxu0 %v513
        %521 = vmatprep.subr.bf16.mxu0 0
        %522 = vmatpush1.bf16.msra.mxu0 0
        %523 = vmatprep.subr.bf16.mxu0 0
        %524 = vmatpush1.bf16.msra.mxu0 0
        %525 = vmatprep.subr.bf16.mxu0 0
        %526 = vmatpush1.bf16.msra.mxu0 0
        %527 = vmatprep.subr.bf16.mxu0 0
        %528 = vmatpush1.bf16.msra.mxu0 0
        %529 = vmatprep.subr.bf16.mxu0 0
        %530 = vmatpush1.bf16.msra.mxu0 0
        %531 = vmatprep.subr.bf16.mxu0 0
        %532 = vmatpush1.bf16.msra.mxu0 0
        %533 = vmatprep.subr.bf16.mxu0 0
        %534 = vmatpush1.bf16.msra.mxu0 0
        %535 = vmatprep.subr.bf16.mxu0 0
        %536 = vmatpush1.bf16.msra.mxu0 0
        %537 = vmatprep.subr.bf16.mxu0 0
        %538 = vmatpush1.bf16.msra.mxu0 0
        %539 = vmatprep.subr.bf16.mxu0 0
        %540 = vmatpush1.bf16.msra.mxu0 0
        %541 = vmatprep.subr.bf16.mxu0 0
        %542 = vmatpush1.bf16.msra.mxu0 0
        %543 = vmatprep.subr.bf16.mxu0 0
        %544 = vmatpush1.bf16.msra.mxu0 0
        %545 = vmatprep.subr.bf16.mxu0 0
        %546 = vmatpush1.bf16.msra.mxu0 0
        %547 = vmatprep.mubr.bf16.mxu0 0
        %548 = vmatmul.mubr.bf16.gmra.mrb[0].mxu0 %v503
        %v549 = vpop.f32.mrb[0].mxu0
        %v550 = vadd.f32 %v474, %v549
        %v551 = vpop.f32.mrb[0].mxu0
        %v552 = vpop.f32.mrb[0].mxu0
        %v553 = vadd.f32 %v479, %v552
        %v554 = vpop.f32.mrb[0].mxu0
        %555 = vmatprep.mubr.bf16.mxu0 0
        %556 = vmatmul.mubr.bf16.gmra.mrb[0].mxu0 %v506
        %v557 = vpop.f32.mrb[0].mxu0
        %v558 = vadd.f32 %v484, %v557
        %v559 = vpop.f32.mrb[0].mxu0
        %v560 = vpop.f32.mrb[0].mxu0
        %v561 = vadd.f32 %v489, %v560
        %v562 = vpop.f32.mrb[0].mxu0
        %563 = vdwg.mxu0
        %v564 = vmul.f32 %v550, 0.5
        %v565 = vmul.f32 %v553, 0.5
        %v566 = vmul.f32 %v558, 0.5
        %v567 = vmul.f32 %v561, 0.5
        %v568 = vmul.f32 %v550, 0.044715
        %v569 = vmul.f32 %v553, 0.044715
        %v570 = vmul.f32 %v558, 0.044715
        %v571 = vmul.f32 %v561, 0.044715
        %v572 = vmul.f32 %v568, %v550
        %v573 = vmul.f32 %v569, %v553
        %v574 = vmul.f32 %v570, %v558
        %v575 = vmul.f32 %v571, %v561
        %v576 = vmul.f32 %v572, %v550
        %v577 = vmul.f32 %v573, %v553
        %v578 = vmul.f32 %v574, %v558
        %v579 = vmul.f32 %v575, %v561
        %v580 = vadd.f32 %v550, %v576
        %v581 = vadd.f32 %v553, %v577
        %v582 = vadd.f32 %v558, %v578
        %v583 = vadd.f32 %v561, %v579
        %v584 = vmul.f32 %v580, 0.7978846
        %v585 = vmul.f32 %v581, 0.7978846
        %v586 = vmul.f32 %v582, 0.7978846
        %v587 = vmul.f32 %v583, 0.7978846
        %v588 = vtanh.pop %v584
        %v589 = vtanh.pop %v585
        %v590 = vtanh.pop %v586
        %v591 = vtanh.pop %v587
        %v592 = vadd.f32 %v588, 1.0
        %v593 = vadd.f32 %v589, 1.0
        %v594 = vadd.f32 %v590, 1.0
        %v595 = vadd.f32 %v591, 1.0
        %v596 = vmul.f32 %v564, %v592
        %v597 = vmul.f32 %v565, %v593
        %v598 = vmul.f32 %v566, %v594
        %v599 = vmul.f32 %v567, %v595
        %600 = vst [vmem:[%s275] sm:$0xff] %v596
        %601 = vst [vmem:[%s275 + $0x8] sm:$0xff] %v597
        %602 = vst [vmem:[%s275 + $0x10] sm:$0xff] %v598
        %603 = vst [vmem:[%s275 + $0x18] sm:$0xff] %v599
        %s604 = sand.u32 %s134, 1
        %s605 = sand.u32 %s134, 1
        %s606 = smul.addr %s605, 32
        %s607 = scalar_lea.vmem [#allocation3], %s606
        // Predicated region
        $region82: #{point_to_dense_forward.5} parent=76 // pred_check
          %p608 = pneg %p144
        $region83: #{point_to_dense_forward.5} parent=76 // pred_check_branch
          %610 = sbr.rel (%p608) target = $region85
        $region84: #{point_to_dense_forward.5} parent=76 // pred_region
          %s611 = smul.addr %s16, 8
          %s612 = scalar_lea.vmem %s5, %s611
          // Predicated region
          $region86: #{point_to_dense_forward.5} parent=84 // pred_check
            _
          $region87: #{point_to_dense_forward.5} parent=84 // pred_check_branch
            %614 = sbr.rel (0) target = $region89
          $region88: #{point_to_dense_forward.5} parent=84 // pred_region
            // Predicated region
            $region90: #{point_to_dense_forward.5} parent=88 // pred_check
              _
            $region91: #{point_to_dense_forward.5} parent=88 // pred_check_branch
              %616 = sbr.rel (0) target = $region93
            $region92: #{point_to_dense_forward.5} parent=88 // pred_region
              // Predicated region
              $region105: #{point_to_dense_forward.5} parent=92 // pred_check
                _
              $region106: #{point_to_dense_forward.5} parent=92 // pred_check_branch
                %637 = sbr.rel (0) target = $region108
              $region107: #{point_to_dense_forward.5} parent=92 // pred_region
                loop: start=0, step=1, limit=1
                $region109: #{point_to_dense_forward.5} parent=107 // loop_pre_header
                  _
                $region110: #{point_to_dense_forward.5} parent=107 // loop_header
                  %s639 = sphi 0, %s643
                  %p640 = scmp.ge.s32.totalorder %s639, 1
                  %s644 = sphi %s607, %s607
                  %s645 = sphi %s612, %s612
                $region111: #{point_to_dense_forward.5} parent=107 // loop_header_branch
                  %642 = sbr.rel (%p640) target = $region115
                $region112: #{point_to_dense_forward.5} parent=107 // loop_body
                  %v646 = vld [vmem:[%s644] sm:$0xff]
                  %647 = vst [vmem:[%s645] sm:$0xff] %v646
                  %v648 = vld [vmem:[%s644 + $0x8] sm:$0xff]
                  %649 = vst [vmem:[%s645 + $0x10] sm:$0xff] %v648
                  %v650 = vld [vmem:[%s644 + $0x10] sm:$0xff]
                  %651 = vst [vmem:[%s645 + $0x20] sm:$0xff] %v650
                  %v652 = vld [vmem:[%s644 + $0x18] sm:$0xff]
                  %653 = vst [vmem:[%s645 + $0x30] sm:$0xff] %v652
                $region113: #{point_to_dense_forward.5} parent=107 // loop_footer
                  %s643 = sadd.s32 1, %s639
                $region114: #{point_to_dense_forward.5} parent=107 // loop_footer_branch
                  %638 = sbr.rel target = $region110
                $region115: #{point_to_dense_forward.5} parent=107 // loop_exit
                  _
              $region108: #{point_to_dense_forward.5} parent=92 // pred_fallthru
                _
              // Predicated region
              $region116: #{point_to_dense_forward.5} parent=92 // pred_check
                _
              $region117: #{point_to_dense_forward.5} parent=92 // pred_check_branch
                %655 = sbr.rel target = $region119
              $region118: #{point_to_dense_forward.5} parent=92 // pred_region
                _
              $region119: #{point_to_dense_forward.5} parent=92 // pred_fallthru
                _
            $region93: #{point_to_dense_forward.5} parent=88 // pred_fallthru
              _
            // Predicated region
            $region94: #{point_to_dense_forward.5} parent=88 // pred_check
              _
            $region95: #{point_to_dense_forward.5} parent=88 // pred_check_branch
              %618 = sbr.rel target = $region97
            $region96: #{point_to_dense_forward.5} parent=88 // pred_region
              loop: start=0, step=1, limit=1
              $region98: #{point_to_dense_forward.5} parent=96 // loop_pre_header
                _
              $region99: #{point_to_dense_forward.5} parent=96 // loop_header
                %s621 = sphi 0, %s625
                %p622 = scmp.ge.s32.totalorder %s621, 1
                %s626 = sphi %s607, %s607
                %s627 = sphi %s612, %s612
              $region100: #{point_to_dense_forward.5} parent=96 // loop_header_branch
                %624 = sbr.rel (%p622) target = $region104
              $region101: #{point_to_dense_forward.5} parent=96 // loop_body
                %v628 = vld [vmem:[%s626] sm:$0xff]
                %629 = vst [vmem:[%s627] sm:$0xff] %v628
                %v630 = vld [vmem:[%s626 + $0x8] sm:$0xff]
                %631 = vst [vmem:[%s627 + $0x10] sm:$0xff] %v630
                %v632 = vld [vmem:[%s626 + $0x10] sm:$0xff]
                %633 = vst [vmem:[%s627 + $0x20] sm:$0xff] %v632
                %v634 = vld [vmem:[%s626 + $0x18] sm:$0xff]
                %635 = vst [vmem:[%s627 + $0x30] sm:$0xff] %v634
              $region102: #{point_to_dense_forward.5} parent=96 // loop_footer
                %s625 = sadd.s32 1, %s621
              $region103: #{point_to_dense_forward.5} parent=96 // loop_footer_branch
                %620 = sbr.rel target = $region99
              $region104: #{point_to_dense_forward.5} parent=96 // loop_exit
                _
            $region97: #{point_to_dense_forward.5} parent=88 // pred_fallthru
              _
          $region89: #{point_to_dense_forward.5} parent=84 // pred_fallthru
            _
          %656 = vnop
        $region85: #{point_to_dense_forward.5} parent=76 // pred_fallthru
          _
      $region77: #{point_to_dense_forward.5} parent=5 // pred_fallthru
        _
      %p657 = scmp.le.s32.totalorder 2, %s11
      // Predicated region
      $region120: #{point_to_dense_forward.5} parent=5 // pred_check
        %p658 = pneg %p657
      $region121: #{point_to_dense_forward.5} parent=5 // pred_check_branch
        %660 = sbr.rel (%p658) target = $region123
      $region122: #{point_to_dense_forward.5} parent=5 // pred_region
        %s661 = ssub.s32 %s11, 2
        // Predicated region
        $region124: #{point_to_dense_forward.5} parent=122 // pred_check
          %p662 = pneg %p150
        $region125: #{point_to_dense_forward.5} parent=122 // pred_check_branch
          %664 = sbr.rel (%p662) target = $region127
        $region126: #{point_to_dense_forward.5} parent=122 // pred_region
          %s665 = sand.u32 %s135, 1
          %s666 = sand.u32 %s135, 1
          %s667 = smul.addr %s666, 32
          %s668 = scalar_lea.vmem [#allocation3], %s667
        $region127: #{point_to_dense_forward.5} parent=122 // pred_fallthru
          _
      $region123: #{point_to_dense_forward.5} parent=5 // pred_fallthru
        _
    $region6: #{point_to_dense_forward.5} parent=1 // loop_footer
      %s15 = sadd.s32 1, %s11
    $region7: #{point_to_dense_forward.5} parent=1 // loop_footer_branch
      %10 = sbr.rel target = $region3
    $region8: #{point_to_dense_forward.5} parent=1 // loop_exit
      _

// kernel: point_to_dense_forward.4
$region0: #{point_to_dense_forward.4}
  #allocation0 [shape = 'u32[]', space=smem, size = 0x4, offset = 0x4, fixed_abs, tag = 'smem constant byte address 0x4 - core index']
  #allocation1 [shape = 'u32[144,128]{1,0:T(1,128)}', space=vmem, size = 0x12000, scoped, tag = 'internal scratch']
  %s0 = inlined_call_operand.vmem [shape: bf16[16,2560], index: 0, kind: input, shape index: {}]
  %s1 = inlined_call_operand.vmem [shape: bf16[22,16], index: 1, kind: input, shape index: {}]
  %s2 = inlined_call_operand.vmem [shape: f32[22,1], index: 2, kind: input, shape index: {}]
  %s3 = inlined_call_operand.vmem [shape: bf16[32,22], index: 3, kind: input, shape index: {}]
  %s4 = inlined_call_operand.vmem [shape: f32[32,1], index: 4, kind: input, shape index: {}]
  %s5 = inlined_call_operand.vmem [shape: bf16[32,256], index: 5, kind: output, shape index: {}]
  %s6 = sld [smem:[#allocation0]]
  $region113: #{point_to_dense_forward.4} parent=0
    _
  %s8 = ssub.s32 1, %s6
  %s9 = scalar_select 0, %s8, %s6
  $region1: #{point_to_dense_forward.4} parent=0
    #allocation2 [shape = 'u8[81920]{0}', space=vmem, size = 0x14000, scoped, tag = 'input window, operand 0']
    #allocation3 [shape = 'u8[16384]{0}', space=vmem, size = 0x4000, scoped, tag = 'output window, operand 0']
    loop: start=0, step=1, limit=4
    $region2: #{point_to_dense_forward.4} parent=1 // loop_pre_header
      _
    $region3: #{point_to_dense_forward.4} parent=1 // loop_header
      %s11 = sphi 0, %s15
      %p12 = scmp.ge.s32.totalorder %s11, 4
      %s21 = sphi 0, %s23
      %s24 = sphi 0, %s21
      %s25 = sphi 0, %s24
      %s41 = sphi 0, %s25
      %s45 = sphi 0, %s45
      %s47 = sphi 0, %s45
      %s48 = sphi 0, %s47
      %s62 = sphi 0, %s48
      %s66 = sphi 0, %s66
      %s68 = sphi 0, %s66
      %s69 = sphi 0, %s68
      %s83 = sphi 0, %s69
      %s87 = sphi 0, %s87
      %s89 = sphi 0, %s87
      %s90 = sphi 0, %s89
      %s104 = sphi 0, %s90
      %s108 = sphi 0, %s108
      %s110 = sphi 0, %s108
      %s111 = sphi 0, %s110
      %s125 = sphi 0, %s111
      %s131 = sphi 0, %s133
      %s134 = sphi 0, %s131
      %s135 = sphi 0, %s134
      %s151 = sphi 0, %s135
    $region4: #{point_to_dense_forward.4} parent=1 // loop_header_branch
      %14 = sbr.rel (%p12) target = $region8
    $region5: #{point_to_dense_forward.4} parent=1 // loop_body
      %s16 = ssub.s32 %s11, 1
      %s17 = ssub.s32 %s11, 2
      %s18 = sadd.s32 %s11, 1
      %s19 = ssub.s32 %s11, %s18
      %p20 = scmp.eq.s32.totalorder %s19, 0
      %s22 = sadd.s32 %s21, 1
      %s23 = scalar_select %p20, %s21, %s22
      %p26 = pneg %p20
      %p27 = scmp.eq.s32.totalorder %s11, 1
      %p28 = por %p26, %p27
      %p29 = scmp.ne.s32.totalorder %s21, %s24
      %p30 = scmp.eq.s32.totalorder %s11, 0
      %p31 = por %p29, %p30
      %p32 = scmp.ne.s32.totalorder %s21, %s24
      %p33 = scmp.eq.s32.totalorder %s16, 1
      %p34 = por %p32, %p33
      %p35 = scmp.ne.s32.totalorder %s24, %s25
      %p36 = scmp.eq.s32.totalorder %s16, 0
      %p37 = por %p35, %p36
      %p38 = scmp.ne.s32.totalorder %s24, %s25
      %p39 = scmp.eq.s32.totalorder %s17, 1
      %p40 = por %p38, %p39
      %p42 = scmp.ne.s32.totalorder %s25, %s41
      %p43 = scmp.eq.s32.totalorder %s17, 0
      %p44 = por %p42, %p43
      %s46 = sadd.s32 %s45, 1
      %p49 = scmp.eq.s32.totalorder %s11, 1
      %p50 = scmp.ne.s32.totalorder %s45, %s47
      %p51 = scmp.eq.s32.totalorder %s11, 0
      %p52 = por %p50, %p51
      %p53 = scmp.ne.s32.totalorder %s45, %s47
      %p54 = scmp.eq.s32.totalorder %s16, 1
      %p55 = por %p53, %p54
      %p56 = scmp.ne.s32.totalorder %s47, %s48
      %p57 = scmp.eq.s32.totalorder %s16, 0
      %p58 = por %p56, %p57
      %p59 = scmp.ne.s32.totalorder %s47, %s48
      %p60 = scmp.eq.s32.totalorder %s17, 1
      %p61 = por %p59, %p60
      %p63 = scmp.ne.s32.totalorder %s48, %s62
      %p64 = scmp.eq.s32.totalorder %s17, 0
      %p65 = por %p63, %p64
      %s67 = sadd.s32 %s66, 1
      %p70 = scmp.eq.s32.totalorder %s11, 1
      %p71 = scmp.ne.s32.totalorder %s66, %s68
      %p72 = scmp.eq.s32.totalorder %s11, 0
      %p73 = por %p71, %p72
      %p74 = scmp.ne.s32.totalorder %s66, %s68
      %p75 = scmp.eq.s32.totalorder %s16, 1
      %p76 = por %p74, %p75
      %p77 = scmp.ne.s32.totalorder %s68, %s69
      %p78 = scmp.eq.s32.totalorder %s16, 0
      %p79 = por %p77, %p78
      %p80 = scmp.ne.s32.totalorder %s68, %s69
      %p81 = scmp.eq.s32.totalorder %s17, 1
      %p82 = por %p80, %p81
      %p84 = scmp.ne.s32.totalorder %s69, %s83
      %p85 = scmp.eq.s32.totalorder %s17, 0
      %p86 = por %p84, %p85
      %s88 = sadd.s32 %s87, 1
      %p91 = scmp.eq.s32.totalorder %s11, 1
      %p92 = scmp.ne.s32.totalorder %s87, %s89
      %p93 = scmp.eq.s32.totalorder %s11, 0
      %p94 = por %p92, %p93
      %p95 = scmp.ne.s32.totalorder %s87, %s89
      %p96 = scmp.eq.s32.totalorder %s16, 1
      %p97 = por %p95, %p96
      %p98 = scmp.ne.s32.totalorder %s89, %s90
      %p99 = scmp.eq.s32.totalorder %s16, 0
      %p100 = por %p98, %p99
      %p101 = scmp.ne.s32.totalorder %s89, %s90
      %p102 = scmp.eq.s32.totalorder %s17, 1
      %p103 = por %p101, %p102
      %p105 = scmp.ne.s32.totalorder %s90, %s104
      %p106 = scmp.eq.s32.totalorder %s17, 0
      %p107 = por %p105, %p106
      %s109 = sadd.s32 %s108, 1
      %p112 = scmp.eq.s32.totalorder %s11, 1
      %p113 = scmp.ne.s32.totalorder %s108, %s110
      %p114 = scmp.eq.s32.totalorder %s11, 0
      %p115 = por %p113, %p114
      %p116 = scmp.ne.s32.totalorder %s108, %s110
      %p117 = scmp.eq.s32.totalorder %s16, 1
      %p118 = por %p116, %p117
      %p119 = scmp.ne.s32.totalorder %s110, %s111
      %p120 = scmp.eq.s32.totalorder %s16, 0
      %p121 = por %p119, %p120
      %p122 = scmp.ne.s32.totalorder %s110, %s111
      %p123 = scmp.eq.s32.totalorder %s17, 1
      %p124 = por %p122, %p123
      %p126 = scmp.ne.s32.totalorder %s111, %s125
      %p127 = scmp.eq.s32.totalorder %s17, 0
      %p128 = por %p126, %p127
      %s129 = ssub.s32 %s11, %s18
      %p130 = scmp.eq.s32.totalorder %s129, 0
      %s132 = sadd.s32 %s131, 1
      %s133 = scalar_select %p130, %s131, %s132
      %p136 = pneg %p130
      %p137 = scmp.eq.s32.totalorder %s11, 1
      %p138 = por %p136, %p137
      %p139 = scmp.ne.s32.totalorder %s131, %s134
      %p140 = scmp.eq.s32.totalorder %s11, 0
      %p141 = por %p139, %p140
      %p142 = scmp.ne.s32.totalorder %s131, %s134
      %p143 = scmp.eq.s32.totalorder %s16, 1
      %p144 = por %p142, %p143
      %p145 = scmp.ne.s32.totalorder %s134, %s135
      %p146 = scmp.eq.s32.totalorder %s16, 0
      %p147 = por %p145, %p146
      %p148 = scmp.ne.s32.totalorder %s134, %s135
      %p149 = scmp.eq.s32.totalorder %s17, 1
      %p150 = por %p148, %p149
      %p152 = scmp.ne.s32.totalorder %s135, %s151
      %p153 = scmp.eq.s32.totalorder %s17, 0
      %p154 = por %p152, %p153
      %p155 = scmp.le.s32.totalorder 1, %s11
      %p156 = scmp.lt.s32.totalorder %s11, 3
      %p157 = pnand %p155, %p156
      %p158 = pneg %p157
      // Predicated region
      $region9: #{point_to_dense_forward.4} parent=5 // pred_check
        _
      $region10: #{point_to_dense_forward.4} parent=5 // pred_check_branch
        %160 = sbr.rel (%p157) target = $region12
      $region11: #{point_to_dense_forward.4} parent=5 // pred_region
        %s161 = ssub.s32 %s11, 1
        // Predicated region
        $region13: #{point_to_dense_forward.4} parent=11 // pred_check
          %p162 = pneg %p58
        $region14: #{point_to_dense_forward.4} parent=11 // pred_check_branch
          %164 = sbr.rel (%p162) target = $region16
        $region15: #{point_to_dense_forward.4} parent=11 // pred_region
          _
        $region16: #{point_to_dense_forward.4} parent=11 // pred_fallthru
          _
        // Predicated region
        $region17: #{point_to_dense_forward.4} parent=11 // pred_check
          %p165 = pneg %p79
        $region18: #{point_to_dense_forward.4} parent=11 // pred_check_branch
          %167 = sbr.rel (%p165) target = $region20
        $region19: #{point_to_dense_forward.4} parent=11 // pred_region
          _
        $region20: #{point_to_dense_forward.4} parent=11 // pred_fallthru
          _
        // Predicated region
        $region21: #{point_to_dense_forward.4} parent=11 // pred_check
          %p168 = pneg %p100
        $region22: #{point_to_dense_forward.4} parent=11 // pred_check_branch
          %170 = sbr.rel (%p168) target = $region24
        $region23: #{point_to_dense_forward.4} parent=11 // pred_region
          _
        $region24: #{point_to_dense_forward.4} parent=11 // pred_fallthru
          _
        // Predicated region
        $region25: #{point_to_dense_forward.4} parent=11 // pred_check
          %p171 = pneg %p121
        $region26: #{point_to_dense_forward.4} parent=11 // pred_check_branch
          %173 = sbr.rel (%p171) target = $region28
        $region27: #{point_to_dense_forward.4} parent=11 // pred_region
          _
        $region28: #{point_to_dense_forward.4} parent=11 // pred_fallthru
          _
      $region12: #{point_to_dense_forward.4} parent=5 // pred_fallthru
        _
      %p174 = scmp.lt.s32.totalorder %s11, 2
      // Predicated region
      $region29: #{point_to_dense_forward.4} parent=5 // pred_check
        %p175 = pneg %p174
      $region30: #{point_to_dense_forward.4} parent=5 // pred_check_branch
        %177 = sbr.rel (%p175) target = $region32
      $region31: #{point_to_dense_forward.4} parent=5 // pred_region
        // Predicated region
        $region33: #{point_to_dense_forward.4} parent=31 // pred_check
          %p178 = pneg %p31
        $region34: #{point_to_dense_forward.4} parent=31 // pred_check_branch
          %180 = sbr.rel (%p178) target = $region36
        $region35: #{point_to_dense_forward.4} parent=31 // pred_region
          %s181 = sand.u32 %s21, 1
          %s182 = sand.u32 %s21, 1
          %s183 = smul.addr %s182, 80
          %s184 = scalar_lea.vmem [#allocation2], %s183
          %s185 = smul.u32 10, %s11
          %s186 = smul.addr %s185, 4
          %s187 = scalar_lea.vmem %s0, %s186
          // Predicated region
          $region37: #{point_to_dense_forward.4} parent=35 // pred_check
            _
          $region38: #{point_to_dense_forward.4} parent=35 // pred_check_branch
            %189 = sbr.rel (0) target = $region40
          $region39: #{point_to_dense_forward.4} parent=35 // pred_region
            // Predicated region
            $region41: #{point_to_dense_forward.4} parent=39 // pred_check
              _
            $region42: #{point_to_dense_forward.4} parent=39 // pred_check_branch
              %191 = sbr.rel (0) target = $region44
            $region43: #{point_to_dense_forward.4} parent=39 // pred_region
              loop: start=0, step=1, limit=1
              $region45: #{point_to_dense_forward.4} parent=43 // loop_pre_header
                _
              $region46: #{point_to_dense_forward.4} parent=43 // loop_header
                %s193 = sphi 0, %s197
                %p194 = scmp.ge.s32.totalorder %s193, 1
                %s198 = sphi %s187, %s187
                %s199 = sphi %s184, %s184
              $region47: #{point_to_dense_forward.4} parent=43 // loop_header_branch
                %196 = sbr.rel (%p194) target = $region51
              $region48: #{point_to_dense_forward.4} parent=43 // loop_body
                %v200 = vld [vmem:[%s198] sm:$0xff]
                %201 = vst [vmem:[%s199] sm:$0xff] %v200
                %v202 = vld [vmem:[%s198 + $0x8] sm:$0xff]
                %203 = vst [vmem:[%s199 + $0x8] sm:$0xff] %v202
                %v204 = vld [vmem:[%s198 + $0x10] sm:$0xff]
                %205 = vst [vmem:[%s199 + $0x10] sm:$0xff] %v204
                %v206 = vld [vmem:[%s198 + $0x18] sm:$0xff]
                %207 = vst [vmem:[%s199 + $0x18] sm:$0xff] %v206
                %v208 = vld [vmem:[%s198 + $0x20] sm:$0xff]
                %209 = vst [vmem:[%s199 + $0x20] sm:$0xff] %v208
                %v210 = vld [vmem:[%s198 + $0x50] sm:$0xff]
                %211 = vst [vmem:[%s199 + $0x28] sm:$0xff] %v210
                %v212 = vld [vmem:[%s198 + $0x58] sm:$0xff]
                %213 = vst [vmem:[%s199 + $0x30] sm:$0xff] %v212
                %v214 = vld [vmem:[%s198 + $0x60] sm:$0xff]
                %215 = vst [vmem:[%s199 + $0x38] sm:$0xff] %v214
                %v216 = vld [vmem:[%s198 + $0x68] sm:$0xff]
                %217 = vst [vmem:[%s199 + $0x40] sm:$0xff] %v216
                %v218 = vld [vmem:[%s198 + $0x70] sm:$0xff]
                %219 = vst [vmem:[%s199 + $0x48] sm:$0xff] %v218
              $region49: #{point_to_dense_forward.4} parent=43 // loop_footer
                %s197 = sadd.s32 1, %s193
              $region50: #{point_to_dense_forward.4} parent=43 // loop_footer_branch
                %192 = sbr.rel target = $region46
              $region51: #{point_to_dense_forward.4} parent=43 // loop_exit
                _
            $region44: #{point_to_dense_forward.4} parent=39 // pred_fallthru
              _
            // Predicated region
            $region52: #{point_to_dense_forward.4} parent=39 // pred_check
              _
            $region53: #{point_to_dense_forward.4} parent=39 // pred_check_branch
              %221 = sbr.rel target = $region55
            $region54: #{point_to_dense_forward.4} parent=39 // pred_region
              _
            $region55: #{point_to_dense_forward.4} parent=39 // pred_fallthru
              _
          $region40: #{point_to_dense_forward.4} parent=35 // pred_fallthru
            _
          %222 = vnop
        $region36: #{point_to_dense_forward.4} parent=31 // pred_fallthru
          _
      $region32: #{point_to_dense_forward.4} parent=5 // pred_fallthru
        _
      %p223 = scmp.le.s32.totalorder 1, %s11
      %p224 = scmp.lt.s32.totalorder %s11, 3
      %p225 = pnand %p223, %p224
      %p226 = pneg %p225
      // Predicated region
      $region56: #{point_to_dense_forward.4} parent=5 // pred_check
        _
      $region57: #{point_to_dense_forward.4} parent=5 // pred_check_branch
        %228 = sbr.rel (%p225) target = $region59
      $region58: #{point_to_dense_forward.4} parent=5 // pred_region
        %s229 = ssub.s32 %s11, 1
        %s230 = sand.u32 %s24, 1
        %s231 = sand.u32 %s24, 1
        %s232 = smul.addr %s231, 80
        %s233 = scalar_lea.vmem [#allocation2], %s232
        // Predicated region
        $region60: #{point_to_dense_forward.4} parent=58 // pred_check
          %p234 = pneg %p37
        $region61: #{point_to_dense_forward.4} parent=58 // pred_check_branch
          %236 = sbr.rel (%p234) target = $region63
        $region62: #{point_to_dense_forward.4} parent=58 // pred_region
          _
        $region63: #{point_to_dense_forward.4} parent=58 // pred_fallthru
          _
        %s237 = sand.u32 %s24, 1
        %s238 = sand.u32 %s24, 1
        %s239 = smul.addr %s238, 80
        %s240 = scalar_lea.vmem [#allocation2], %s239
        %p241 = pneg %p37
        %p242 = pneg %p34
        %p243 = pneg %p58
        %p244 = pneg %p55
        %p245 = pneg %p79
        %p246 = pneg %p76
        %p247 = pneg %p100
        %p248 = pneg %p97
        %p249 = pneg %p121
        %p250 = pneg %p118
        %p251 = pneg %p147
        %p252 = pneg %p144
        %s253 = sand.u32 %s134, 1
        %s254 = sand.u32 %s134, 1
        %s255 = smul.addr %s254, 16
        %s256 = scalar_lea.vmem [#allocation3], %s255
        %s257 = smul.u32 10, %s16
        %v259 = vld [vmem:[%s233] sm:$0xff]
        %v260 = vld [vmem:[%s233 + $0x8] sm:$0xff]
        %v261 = vld [vmem:[%s233 + $0x10] sm:$0xff]
        %v262 = vld [vmem:[%s233 + $0x18] sm:$0xff]
        %v263 = vld [vmem:[%s233 + $0x20] sm:$0xff]
        %v264 = vld [vmem:[%s233 + $0x28] sm:$0xff]
        %v265 = vld [vmem:[%s233 + $0x30] sm:$0xff]
        %v266 = vld [vmem:[%s233 + $0x38] sm:$0xff]
        %v267 = vld [vmem:[%s233 + $0x40] sm:$0xff]
        %v268 = vld [vmem:[%s233 + $0x48] sm:$0xff]
        %v269 = vld [vmem:[%s1] sm:$0xf]
        %v270 = vld [vmem:[%s1 + $0x4] sm:$0xf]
        %v271 = vld [vmem:[%s1 + $0x8] sm:$0x7]
        %v272 = vld [vmem:[%s2] sm:$0xff]
        %v273 = vld [vmem:[%s2 + $0x8] sm:$0xff]
        %v274 = vld [vmem:[%s2 + $0x10] sm:$0x3f]
        %276 = vset.pattern.permute.xlu0 0
        %277 = vperm.xlu0 %276, %v272
        %v278 = vpop.permute.xlu0 %277
        %281 = vset.pattern.permute.xlu0 0
        %282 = vperm.xlu0 %281, %v273
        %v283 = vpop.permute.xlu0 %282
        %286 = vset.pattern.permute.xlu0 0
        %287 = vperm.xlu0 %286, %v274
        %v288 = vpop.permute.xlu0 %287
        %v293 = vunpack.c.l.b16 %v269
        %v294 = vunpack.c.l.b16 %v270
        %v295 = vunpack.c.l.b16 %v271
        %v296 = vpack.c.b16 %v294, %v293
        %v297 = vpack.c.b16 %v295, %v295
        %v308 = vunpack.c.l.b16 %v259
        %v309 = vunpack.c.h.b16 %v259
        %v310 = vunpack.c.l.b16 %v260
        %v311 = vunpack.c.h.b16 %v260
        %v312 = vunpack.c.l.b16 %v261
        %v313 = vunpack.c.h.b16 %v261
        %v314 = vunpack.c.l.b16 %v262
        %v315 = vunpack.c.h.b16 %v262
        %v316 = vunpack.c.l.b16 %v263
        %v317 = vunpack.c.h.b16 %v263
        %v318 = vunpack.c.l.b16 %v264
        %v319 = vunpack.c.h.b16 %v264
        %v320 = vunpack.c.l.b16 %v265
        %v321 = vunpack.c.h.b16 %v265
        %v322 = vunpack.c.l.b16 %v266
        %v323 = vunpack.c.h.b16 %v266
        %v324 = vunpack.c.l.b16 %v267
        %v325 = vunpack.c.h.b16 %v267
        %v326 = vunpack.c.l.b16 %v268
        %v327 = vunpack.c.h.b16 %v268
        %v328 = vpack.c.b16 %v318, %v308
        %v329 = vpack.c.b16 %v319, %v309
        %v330 = vpack.c.b16 %v320, %v310
        %v331 = vpack.c.b16 %v321, %v311
        %v332 = vpack.c.b16 %v322, %v312
        %v333 = vpack.c.b16 %v323, %v313
        %v334 = vpack.c.b16 %v324, %v314
        %v335 = vpack.c.b16 %v325, %v315
        %v336 = vpack.c.b16 %v326, %v316
        %v337 = vpack.c.b16 %v327, %v317
        %vm348 = vcmask 130048
        %v350 = vsel %vm348, %v296, 0
        %v353 = vsel %vm348, %v297, 0
        %355 = vmatprep.subr.bf16.mxu0 %v329
        %356 = vmatpush1.bf16.msra.mxu0 %v328
        %357 = vmatprep.subr.bf16.mxu0 0
        %358 = vmatpush1.bf16.msra.mxu0 0
        %359 = vmatprep.subr.bf16.mxu0 0
        %360 = vmatpush1.bf16.msra.mxu0 0
        %361 = vmatprep.subr.bf16.mxu0 0
        %362 = vmatpush1.bf16.msra.mxu0 0
        %363 = vmatprep.subr.bf16.mxu0 0
        %364 = vmatpush1.bf16.msra.mxu0 0
        %365 = vmatprep.subr.bf16.mxu0 0
        %366 = vmatpush1.bf16.msra.mxu0 0
        %367 = vmatprep.subr.bf16.mxu0 0
        %368 = vmatpush1.bf16.msra.mxu0 0
        %369 = vmatprep.subr.bf16.mxu0 0
        %370 = vmatpush1.bf16.msra.mxu0 0
        %371 = vmatprep.subr.bf16.mxu0 0
        %372 = vmatpush1.bf16.msra.mxu0 0
        %373 = vmatprep.subr.bf16.mxu0 0
        %374 = vmatpush1.bf16.msra.mxu0 0
        %375 = vmatprep.subr.bf16.mxu0 0
        %376 = vmatpush1.bf16.msra.mxu0 0
        %377 = vmatprep.subr.bf16.mxu0 0
        %378 = vmatpush1.bf16.msra.mxu0 0
        %379 = vmatprep.subr.bf16.mxu0 0
        %380 = vmatpush1.bf16.msra.mxu0 0
        %381 = vmatprep.subr.bf16.mxu0 0
        %382 = vmatpush1.bf16.msra.mxu0 0
        %383 = vmatprep.subr.bf16.mxu0 0
        %384 = vmatpush1.bf16.msra.mxu0 0
        %385 = vmatprep.subr.bf16.mxu0 0
        %386 = vmatpush1.bf16.msra.mxu0 0
        %387 = vmatprep.mubr.bf16.mxu0 0
        %388 = vmatmul.mubr.bf16.gmra.mrb[0].mxu0 %v350
        %v389 = vpop.f32.mrb[0].mxu0
        %v390 = vadd.f32 %v278, %v389
        %v391 = vpop.f32.mrb[0].mxu0
        %v392 = vadd.f32 %v278, %v391
        %v393 = vpop.f32.mrb[0].mxu0
        %v394 = vadd.f32 %v283, %v393
        %v395 = vpop.f32.mrb[0].mxu0
        %v396 = vadd.f32 %v283, %v395
        %397 = vmatprep.mubr.bf16.mxu0 0
        %398 = vmatmul.mubr.bf16.gmra.mrb[0].mxu0 %v353
        %v399 = vpop.f32.mrb[0].mxu0
        %v400 = vadd.f32 %v288, %v399
        %v401 = vpop.f32.mrb[0].mxu0
        %v402 = vadd.f32 %v288, %v401
        %v403 = vpop.f32.mrb[0].mxu0
        %v404 = vpop.f32.mrb[0].mxu0
        %405 = vdwg.mxu0
        %406 = vmatprep.subr.bf16.mxu0 %v331
        %407 = vmatpush1.bf16.msra.mxu0 %v330
        %408 = vmatprep.subr.bf16.mxu0 0
        %409 = vmatpush1.bf16.msra.mxu0 0
        %410 = vmatprep.subr.bf16.mxu0 0
        %411 = vmatpush1.bf16.msra.mxu0 0
        %412 = vmatprep.subr.bf16.mxu0 0
        %413 = vmatpush1.bf16.msra.mxu0 0
        %414 = vmatprep.subr.bf16.mxu0 0
        %415 = vmatpush1.bf16.msra.mxu0 0
        %416 = vmatprep.subr.bf16.mxu0 0
        %417 = vmatpush1.bf16.msra.mxu0 0
        %418 = vmatprep.subr.bf16.mxu0 0
        %419 = vmatpush1.bf16.msra.mxu0 0
        %420 = vmatprep.subr.bf16.mxu0 0
        %421 = vmatpush1.bf16.msra.mxu0 0
        %422 = vmatprep.subr.bf16.mxu0 0
        %423 = vmatpush1.bf16.msra.mxu0 0
        %424 = vmatprep.subr.bf16.mxu0 0
        %425 = vmatpush1.bf16.msra.mxu0 0
        %426 = vmatprep.subr.bf16.mxu0 0
        %427 = vmatpush1.bf16.msra.mxu0 0
        %428 = vmatprep.subr.bf16.mxu0 0
        %429 = vmatpush1.bf16.msra.mxu0 0
        %430 = vmatprep.subr.bf16.mxu0 0
        %431 = vmatpush1.bf16.msra.mxu0 0
        %432 = vmatprep.subr.bf16.mxu0 0
        %433 = vmatpush1.bf16.msra.mxu0 0
        %434 = vmatprep.subr.bf16.mxu0 0
        %435 = vmatpush1.bf16.msra.mxu0 0
        %436 = vmatprep.subr.bf16.mxu0 0
        %437 = vmatpush1.bf16.msra.mxu0 0
        %438 = vmatprep.mubr.bf16.mxu0 0
        %439 = vmatmul.mubr.bf16.gmra.mrb[0].mxu0 %v350
        %v440 = vpop.f32.mrb[0].mxu0
        %v441 = vadd.f32 %v278, %v440
        %v442 = vpop.f32.mrb[0].mxu0
        %v443 = vadd.f32 %v278, %v442
        %v444 = vpop.f32.mrb[0].mxu0
        %v445 = vadd.f32 %v283, %v444
        %v446 = vpop.f32.mrb[0].mxu0
        %v447 = vadd.f32 %v283, %v446
        %448 = vmatprep.mubr.bf16.mxu0 0
        %449 = vmatmul.mubr.bf16.gmra.mrb[0].mxu0 %v353
        %v450 = vpop.f32.mrb[0].mxu0
        %v451 = vadd.f32 %v288, %v450
        %v452 = vpop.f32.mrb[0].mxu0
        %v453 = vadd.f32 %v288, %v452
        %v454 = vpop.f32.mrb[0].mxu0
        %v455 = vpop.f32.mrb[0].mxu0
        %456 = vdwg.mxu0
        %457 = vmatprep.subr.bf16.mxu0 %v333
        %458 = vmatpush1.bf16.msra.mxu0 %v332
        %459 = vmatprep.subr.bf16.mxu0 0
        %460 = vmatpush1.bf16.msra.mxu0 0
        %461 = vmatprep.subr.bf16.mxu0 0
        %462 = vmatpush1.bf16.msra.mxu0 0
        %463 = vmatprep.subr.bf16.mxu0 0
        %464 = vmatpush1.bf16.msra.mxu0 0
        %465 = vmatprep.subr.bf16.mxu0 0
        %466 = vmatpush1.bf16.msra.mxu0 0
        %467 = vmatprep.subr.bf16.mxu0 0
        %468 = vmatpush1.bf16.msra.mxu0 0
        %469 = vmatprep.subr.bf16.mxu0 0
        %470 = vmatpush1.bf16.msra.mxu0 0
        %471 = vmatprep.subr.bf16.mxu0 0
        %472 = vmatpush1.bf16.msra.mxu0 0
        %473 = vmatprep.subr.bf16.mxu0 0
        %474 = vmatpush1.bf16.msra.mxu0 0
        %475 = vmatprep.subr.bf16.mxu0 0
        %476 = vmatpush1.bf16.msra.mxu0 0
        %477 = vmatprep.subr.bf16.mxu0 0
        %478 = vmatpush1.bf16.msra.mxu0 0
        %479 = vmatprep.subr.bf16.mxu0 0
        %480 = vmatpush1.bf16.msra.mxu0 0
        %481 = vmatprep.subr.bf16.mxu0 0
        %482 = vmatpush1.bf16.msra.mxu0 0
        %483 = vmatprep.subr.bf16.mxu0 0
        %484 = vmatpush1.bf16.msra.mxu0 0
        %485 = vmatprep.subr.bf16.mxu0 0
        %486 = vmatpush1.bf16.msra.mxu0 0
        %487 = vmatprep.subr.bf16.mxu0 0
        %488 = vmatpush1.bf16.msra.mxu0 0
        %489 = vmatprep.mubr.bf16.mxu0 0
        %490 = vmatmul.mubr.bf16.gmra.mrb[0].mxu0 %v350
        %v491 = vpop.f32.mrb[0].mxu0
        %v492 = vadd.f32 %v278, %v491
        %v493 = vpop.f32.mrb[0].mxu0
        %v494 = vadd.f32 %v278, %v493
        %v495 = vpop.f32.mrb[0].mxu0
        %v496 = vadd.f32 %v283, %v495
        %v497 = vpop.f32.mrb[0].mxu0
        %v498 = vadd.f32 %v283, %v497
        %499 = vmatprep.mubr.bf16.mxu0 0
        %500 = vmatmul.mubr.bf16.gmra.mrb[0].mxu0 %v353
        %v501 = vpop.f32.mrb[0].mxu0
        %v502 = vadd.f32 %v288, %v501
        %v503 = vpop.f32.mrb[0].mxu0
        %v504 = vadd.f32 %v288, %v503
        %v505 = vpop.f32.mrb[0].mxu0
        %v506 = vpop.f32.mrb[0].mxu0
        %507 = vdwg.mxu0
        %508 = vmatprep.subr.bf16.mxu0 %v335
        %509 = vmatpush1.bf16.msra.mxu0 %v334
        %510 = vmatprep.subr.bf16.mxu0 0
        %511 = vmatpush1.bf16.msra.mxu0 0
        %512 = vmatprep.subr.bf16.mxu0 0
        %513 = vmatpush1.bf16.msra.mxu0 0
        %514 = vmatprep.subr.bf16.mxu0 0
        %515 = vmatpush1.bf16.msra.mxu0 0
        %516 = vmatprep.subr.bf16.mxu0 0
        %517 = vmatpush1.bf16.msra.mxu0 0
        %518 = vmatprep.subr.bf16.mxu0 0
        %519 = vmatpush1.bf16.msra.mxu0 0
        %520 = vmatprep.subr.bf16.mxu0 0
        %521 = vmatpush1.bf16.msra.mxu0 0
        %522 = vmatprep.subr.bf16.mxu0 0
        %523 = vmatpush1.bf16.msra.mxu0 0
        %524 = vmatprep.subr.bf16.mxu0 0
        %525 = vmatpush1.bf16.msra.mxu0 0
        %526 = vmatprep.subr.bf16.mxu0 0
        %527 = vmatpush1.bf16.msra.mxu0 0
        %528 = vmatprep.subr.bf16.mxu0 0
        %529 = vmatpush1.bf16.msra.mxu0 0
        %530 = vmatprep.subr.bf16.mxu0 0
        %531 = vmatpush1.bf16.msra.mxu0 0
        %532 = vmatprep.subr.bf16.mxu0 0
        %533 = vmatpush1.bf16.msra.mxu0 0
        %534 = vmatprep.subr.bf16.mxu0 0
        %535 = vmatpush1.bf16.msra.mxu0 0
        %536 = vmatprep.subr.bf16.mxu0 0
        %537 = vmatpush1.bf16.msra.mxu0 0
        %538 = vmatprep.subr.bf16.mxu0 0
        %539 = vmatpush1.bf16.msra.mxu0 0
        %540 = vmatprep.mubr.bf16.mxu0 0
        %541 = vmatmul.mubr.bf16.gmra.mrb[0].mxu0 %v350
        %v542 = vpop.f32.mrb[0].mxu0
        %v543 = vadd.f32 %v278, %v542
        %v544 = vpop.f32.mrb[0].mxu0
        %v545 = vadd.f32 %v278, %v544
        %v546 = vpop.f32.mrb[0].mxu0
        %v547 = vadd.f32 %v283, %v546
        %v548 = vpop.f32.mrb[0].mxu0
        %v549 = vadd.f32 %v283, %v548
        %550 = vmatprep.mubr.bf16.mxu0 0
        %551 = vmatmul.mubr.bf16.gmra.mrb[0].mxu0 %v353
        %v552 = vpop.f32.mrb[0].mxu0
        %v553 = vadd.f32 %v288, %v552
        %v554 = vpop.f32.mrb[0].mxu0
        %v555 = vadd.f32 %v288, %v554
        %v556 = vpop.f32.mrb[0].mxu0
        %v557 = vpop.f32.mrb[0].mxu0
        %558 = vdwg.mxu0
        %559 = vmatprep.subr.bf16.mxu0 %v337
        %560 = vmatpush1.bf16.msra.mxu0 %v336
        %561 = vmatprep.subr.bf16.mxu0 0
        %562 = vmatpush1.bf16.msra.mxu0 0
        %563 = vmatprep.subr.bf16.mxu0 0
        %564 = vmatpush1.bf16.msra.mxu0 0
        %565 = vmatprep.subr.bf16.mxu0 0
        %566 = vmatpush1.bf16.msra.mxu0 0
        %567 = vmatprep.subr.bf16.mxu0 0
        %568 = vmatpush1.bf16.msra.mxu0 0
        %569 = vmatprep.subr.bf16.mxu0 0
        %570 = vmatpush1.bf16.msra.mxu0 0
        %571 = vmatprep.subr.bf16.mxu0 0
        %572 = vmatpush1.bf16.msra.mxu0 0
        %573 = vmatprep.subr.bf16.mxu0 0
        %574 = vmatpush1.bf16.msra.mxu0 0
        %575 = vmatprep.subr.bf16.mxu0 0
        %576 = vmatpush1.bf16.msra.mxu0 0
        %577 = vmatprep.subr.bf16.mxu0 0
        %578 = vmatpush1.bf16.msra.mxu0 0
        %579 = vmatprep.subr.bf16.mxu0 0
        %580 = vmatpush1.bf16.msra.mxu0 0
        %581 = vmatprep.subr.bf16.mxu0 0
        %582 = vmatpush1.bf16.msra.mxu0 0
        %583 = vmatprep.subr.bf16.mxu0 0
        %584 = vmatpush1.bf16.msra.mxu0 0
        %585 = vmatprep.subr.bf16.mxu0 0
        %586 = vmatpush1.bf16.msra.mxu0 0
        %587 = vmatprep.subr.bf16.mxu0 0
        %588 = vmatpush1.bf16.msra.mxu0 0
        %589 = vmatprep.subr.bf16.mxu0 0
        %590 = vmatpush1.bf16.msra.mxu0 0
        %591 = vmatprep.mubr.bf16.mxu0 0
        %592 = vmatmul.mubr.bf16.gmra.mrb[0].mxu0 %v350
        %v593 = vpop.f32.mrb[0].mxu0
        %v594 = vadd.f32 %v278, %v593
        %v595 = vpop.f32.mrb[0].mxu0
        %v596 = vadd.f32 %v278, %v595
        %v597 = vpop.f32.mrb[0].mxu0
        %v598 = vadd.f32 %v283, %v597
        %v599 = vpop.f32.mrb[0].mxu0
        %v600 = vadd.f32 %v283, %v599
        %601 = vmatprep.mubr.bf16.mxu0 0
        %602 = vmatmul.mubr.bf16.gmra.mrb[0].mxu0 %v353
        %v603 = vpop.f32.mrb[0].mxu0
        %v604 = vadd.f32 %v288, %v603
        %v605 = vpop.f32.mrb[0].mxu0
        %v606 = vadd.f32 %v288, %v605
        %v607 = vpop.f32.mrb[0].mxu0
        %v608 = vpop.f32.mrb[0].mxu0
        %609 = vdwg.mxu0
        %v610 = vmul.f32 %v390, 0.5
        %v611 = vmul.f32 %v392, 0.5
        %v612 = vmul.f32 %v441, 0.5
        %v613 = vmul.f32 %v443, 0.5
        %v614 = vmul.f32 %v492, 0.5
        %v615 = vmul.f32 %v494, 0.5
        %v616 = vmul.f32 %v543, 0.5
        %v617 = vmul.f32 %v545, 0.5
        %v618 = vmul.f32 %v594, 0.5
        %v619 = vmul.f32 %v596, 0.5
        %v620 = vmul.f32 %v394, 0.5
        %v621 = vmul.f32 %v396, 0.5
        %v622 = vmul.f32 %v445, 0.5
        %v623 = vmul.f32 %v447, 0.5
        %v624 = vmul.f32 %v496, 0.5
        %v625 = vmul.f32 %v498, 0.5
        %v626 = vmul.f32 %v547, 0.5
        %v627 = vmul.f32 %v549, 0.5
        %v628 = vmul.f32 %v598, 0.5
        %v629 = vmul.f32 %v600, 0.5
        %v630 = vmul.f32 %v400, 0.5
        %v631 = vmul.f32 %v402, 0.5
        %v632 = vmul.f32 %v451, 0.5
        %v633 = vmul.f32 %v453, 0.5
        %v634 = vmul.f32 %v502, 0.5
        %v635 = vmul.f32 %v504, 0.5
        %v636 = vmul.f32 %v553, 0.5
        %v637 = vmul.f32 %v555, 0.5
        %v638 = vmul.f32 %v604, 0.5
        %v639 = vmul.f32 %v606, 0.5
        %v640 = vmul.f32 %v390, 0.044715
        %v641 = vmul.f32 %v392, 0.044715
        %v642 = vmul.f32 %v441, 0.044715
        %v643 = vmul.f32 %v443, 0.044715
        %v644 = vmul.f32 %v492, 0.044715
        %v645 = vmul.f32 %v494, 0.044715
        %v646 = vmul.f32 %v543, 0.044715
        %v647 = vmul.f32 %v545, 0.044715
        %v648 = vmul.f32 %v594, 0.044715
        %v649 = vmul.f32 %v596, 0.044715
        %v650 = vmul.f32 %v394, 0.044715
        %v651 = vmul.f32 %v396, 0.044715
        %v652 = vmul.f32 %v445, 0.044715
        %v653 = vmul.f32 %v447, 0.044715
        %v654 = vmul.f32 %v496, 0.044715
        %v655 = vmul.f32 %v498, 0.044715
        %v656 = vmul.f32 %v547, 0.044715
        %v657 = vmul.f32 %v549, 0.044715
        %v658 = vmul.f32 %v598, 0.044715
        %v659 = vmul.f32 %v600, 0.044715
        %v660 = vmul.f32 %v400, 0.044715
        %v661 = vmul.f32 %v402, 0.044715
        %v662 = vmul.f32 %v451, 0.044715
        %v663 = vmul.f32 %v453, 0.044715
        %v664 = vmul.f32 %v502, 0.044715
        %v665 = vmul.f32 %v504, 0.044715
        %v666 = vmul.f32 %v553, 0.044715
        %v667 = vmul.f32 %v555, 0.044715
        %v668 = vmul.f32 %v604, 0.044715
        %v669 = vmul.f32 %v606, 0.044715
        %v670 = vmul.f32 %v640, %v390
        %v671 = vmul.f32 %v641, %v392
        %v672 = vmul.f32 %v642, %v441
        %v673 = vmul.f32 %v643, %v443
        %v674 = vmul.f32 %v644, %v492
        %v675 = vmul.f32 %v645, %v494
        %v676 = vmul.f32 %v646, %v543
        %v677 = vmul.f32 %v647, %v545
        %v678 = vmul.f32 %v648, %v594
        %v679 = vmul.f32 %v649, %v596
        %v680 = vmul.f32 %v650, %v394
        %v681 = vmul.f32 %v651, %v396
        %v682 = vmul.f32 %v652, %v445
        %v683 = vmul.f32 %v653, %v447
        %v684 = vmul.f32 %v654, %v496
        %v685 = vmul.f32 %v655, %v498
        %v686 = vmul.f32 %v656, %v547
        %v687 = vmul.f32 %v657, %v549
        %v688 = vmul.f32 %v658, %v598
        %v689 = vmul.f32 %v659, %v600
        %v690 = vmul.f32 %v660, %v400
        %v691 = vmul.f32 %v661, %v402
        %v692 = vmul.f32 %v662, %v451
        %v693 = vmul.f32 %v663, %v453
        %v694 = vmul.f32 %v664, %v502
        %v695 = vmul.f32 %v665, %v504
        %v696 = vmul.f32 %v666, %v553
        %v697 = vmul.f32 %v667, %v555
        %v698 = vmul.f32 %v668, %v604
        %v699 = vmul.f32 %v669, %v606
        %v700 = vmul.f32 %v670, %v390
        %v701 = vmul.f32 %v671, %v392
        %v702 = vmul.f32 %v672, %v441
        %v703 = vmul.f32 %v673, %v443
        %v704 = vmul.f32 %v674, %v492
        %v705 = vmul.f32 %v675, %v494
        %v706 = vmul.f32 %v676, %v543
        %v707 = vmul.f32 %v677, %v545
        %v708 = vmul.f32 %v678, %v594
        %v709 = vmul.f32 %v679, %v596
        %v710 = vmul.f32 %v680, %v394
        %v711 = vmul.f32 %v681, %v396
        %v712 = vmul.f32 %v682, %v445
        %v713 = vmul.f32 %v683, %v447
        %v714 = vmul.f32 %v684, %v496
        %v715 = vmul.f32 %v685, %v498
        %v716 = vmul.f32 %v686, %v547
        %v717 = vmul.f32 %v687, %v549
        %v718 = vmul.f32 %v688, %v598
        %v719 = vmul.f32 %v689, %v600
        %v720 = vmul.f32 %v690, %v400
        %v721 = vmul.f32 %v691, %v402
        %v722 = vmul.f32 %v692, %v451
        %v723 = vmul.f32 %v693, %v453
        %v724 = vmul.f32 %v694, %v502
        %v725 = vmul.f32 %v695, %v504
        %v726 = vmul.f32 %v696, %v553
        %v727 = vmul.f32 %v697, %v555
        %v728 = vmul.f32 %v698, %v604
        %v729 = vmul.f32 %v699, %v606
        %v730 = vadd.f32 %v390, %v700
        %v731 = vadd.f32 %v392, %v701
        %v732 = vadd.f32 %v441, %v702
        %v733 = vadd.f32 %v443, %v703
        %v734 = vadd.f32 %v492, %v704
        %v735 = vadd.f32 %v494, %v705
        %v736 = vadd.f32 %v543, %v706
        %v737 = vadd.f32 %v545, %v707
        %v738 = vadd.f32 %v594, %v708
        %v739 = vadd.f32 %v596, %v709
        %v740 = vadd.f32 %v394, %v710
        %v741 = vadd.f32 %v396, %v711
        %v742 = vadd.f32 %v445, %v712
        %v743 = vadd.f32 %v447, %v713
        %v744 = vadd.f32 %v496, %v714
        %v745 = vadd.f32 %v498, %v715
        %v746 = vadd.f32 %v547, %v716
        %v747 = vadd.f32 %v549, %v717
        %v748 = vadd.f32 %v598, %v718
        %v749 = vadd.f32 %v600, %v719
        %v750 = vadd.f32 %v400, %v720
        %v751 = vadd.f32 %v402, %v721
        %v752 = vadd.f32 %v451, %v722
        %v753 = vadd.f32 %v453, %v723
        %v754 = vadd.f32 %v502, %v724
        %v755 = vadd.f32 %v504, %v725
        %v756 = vadd.f32 %v553, %v726
        %v757 = vadd.f32 %v555, %v727
        %v758 = vadd.f32 %v604, %v728
        %v759 = vadd.f32 %v606, %v729
        %v760 = vmul.f32 %v730, 0.7978846
        %v761 = vmul.f32 %v731, 0.7978846
        %v762 = vmul.f32 %v732, 0.7978846
        %v763 = vmul.f32 %v733, 0.7978846
        %v764 = vmul.f32 %v734, 0.7978846
        %v765 = vmul.f32 %v735, 0.7978846
        %v766 = vmul.f32 %v736, 0.7978846
        %v767 = vmul.f32 %v737, 0.7978846
        %v768 = vmul.f32 %v738, 0.7978846
        %v769 = vmul.f32 %v739, 0.7978846
        %v770 = vmul.f32 %v740, 0.7978846
        %v771 = vmul.f32 %v741, 0.7978846
        %v772 = vmul.f32 %v742, 0.7978846
        %v773 = vmul.f32 %v743, 0.7978846
        %v774 = vmul.f32 %v744, 0.7978846
        %v775 = vmul.f32 %v745, 0.7978846
        %v776 = vmul.f32 %v746, 0.7978846
        %v777 = vmul.f32 %v747, 0.7978846
        %v778 = vmul.f32 %v748, 0.7978846
        %v779 = vmul.f32 %v749, 0.7978846
        %v780 = vmul.f32 %v750, 0.7978846
        %v781 = vmul.f32 %v751, 0.7978846
        %v782 = vmul.f32 %v752, 0.7978846
        %v783 = vmul.f32 %v753, 0.7978846
        %v784 = vmul.f32 %v754, 0.7978846
        %v785 = vmul.f32 %v755, 0.7978846
        %v786 = vmul.f32 %v756, 0.7978846
        %v787 = vmul.f32 %v757, 0.7978846
        %v788 = vmul.f32 %v758, 0.7978846
        %v789 = vmul.f32 %v759, 0.7978846
        %v790 = vtanh.pop %v760
        %v791 = vtanh.pop %v761
        %v792 = vtanh.pop %v762
        %v793 = vtanh.pop %v763
        %v794 = vtanh.pop %v764
        %v795 = vtanh.pop %v765
        %v796 = vtanh.pop %v766
        %v797 = vtanh.pop %v767
        %v798 = vtanh.pop %v768
        %v799 = vtanh.pop %v769
        %v800 = vtanh.pop %v770
        %v801 = vtanh.pop %v771
        %v802 = vtanh.pop %v772
        %v803 = vtanh.pop %v773
        %v804 = vtanh.pop %v774
        %v805 = vtanh.pop %v775
        %v806 = vtanh.pop %v776
        %v807 = vtanh.pop %v777
        %v808 = vtanh.pop %v778
        %v809 = vtanh.pop %v779
        %v810 = vtanh.pop %v780
        %v811 = vtanh.pop %v781
        %v812 = vtanh.pop %v782
        %v813 = vtanh.pop %v783
        %v814 = vtanh.pop %v784
        %v815 = vtanh.pop %v785
        %v816 = vtanh.pop %v786
        %v817 = vtanh.pop %v787
        %v818 = vtanh.pop %v788
        %v819 = vtanh.pop %v789
        %v820 = vadd.f32 %v790, 1.0
        %v821 = vadd.f32 %v791, 1.0
        %v822 = vadd.f32 %v792, 1.0
        %v823 = vadd.f32 %v793, 1.0
        %v824 = vadd.f32 %v794, 1.0
        %v825 = vadd.f32 %v795, 1.0
        %v826 = vadd.f32 %v796, 1.0
        %v827 = vadd.f32 %v797, 1.0
        %v828 = vadd.f32 %v798, 1.0
        %v829 = vadd.f32 %v799, 1.0
        %v830 = vadd.f32 %v800, 1.0
        %v831 = vadd.f32 %v801, 1.0
        %v832 = vadd.f32 %v802, 1.0
        %v833 = vadd.f32 %v803, 1.0
        %v834 = vadd.f32 %v804, 1.0
        %v835 = vadd.f32 %v805, 1.0
        %v836 = vadd.f32 %v806, 1.0
        %v837 = vadd.f32 %v807, 1.0
        %v838 = vadd.f32 %v808, 1.0
        %v839 = vadd.f32 %v809, 1.0
        %v840 = vadd.f32 %v810, 1.0
        %v841 = vadd.f32 %v811, 1.0
        %v842 = vadd.f32 %v812, 1.0
        %v843 = vadd.f32 %v813, 1.0
        %v844 = vadd.f32 %v814, 1.0
        %v845 = vadd.f32 %v815, 1.0
        %v846 = vadd.f32 %v816, 1.0
        %v847 = vadd.f32 %v817, 1.0
        %v848 = vadd.f32 %v818, 1.0
        %v849 = vadd.f32 %v819, 1.0
        %v850 = vmul.f32 %v610, %v820
        %v851 = vmul.f32 %v611, %v821
        %v852 = vmul.f32 %v612, %v822
        %v853 = vmul.f32 %v613, %v823
        %v854 = vmul.f32 %v614, %v824
        %v855 = vmul.f32 %v615, %v825
        %v856 = vmul.f32 %v616, %v826
        %v857 = vmul.f32 %v617, %v827
        %v858 = vmul.f32 %v618, %v828
        %v859 = vmul.f32 %v619, %v829
        %v860 = vmul.f32 %v620, %v830
        %v861 = vmul.f32 %v621, %v831
        %v862 = vmul.f32 %v622, %v832
        %v863 = vmul.f32 %v623, %v833
        %v864 = vmul.f32 %v624, %v834
        %v865 = vmul.f32 %v625, %v835
        %v866 = vmul.f32 %v626, %v836
        %v867 = vmul.f32 %v627, %v837
        %v868 = vmul.f32 %v628, %v838
        %v869 = vmul.f32 %v629, %v839
        %v870 = vmul.f32 %v630, %v840
        %v871 = vmul.f32 %v631, %v841
        %v872 = vmul.f32 %v632, %v842
        %v873 = vmul.f32 %v633, %v843
        %v874 = vmul.f32 %v634, %v844
        %v875 = vmul.f32 %v635, %v845
        %v876 = vmul.f32 %v636, %v846
        %v877 = vmul.f32 %v637, %v847
        %v878 = vmul.f32 %v638, %v848
        %v879 = vmul.f32 %v639, %v849
        %v880 = vld [vmem:[%s3] sm:$0xf]
        %v881 = vld [vmem:[%s3 + $0x4] sm:$0xf]
        %v882 = vld [vmem:[%s3 + $0x8] sm:$0xf]
        %v883 = vld [vmem:[%s3 + $0xc] sm:$0xf]
        %v884 = vpack.c.bf16 %v860, %v850
        %v885 = vpack.c.bf16 %v861, %v851
        %v886 = vpack.c.bf16 %v862, %v852
        %v887 = vpack.c.bf16 %v863, %v853
        %v888 = vpack.c.bf16 %v864, %v854
        %v889 = vpack.c.bf16 %v865, %v855
        %v890 = vpack.c.bf16 %v866, %v856
        %v891 = vpack.c.bf16 %v867, %v857
        %v892 = vpack.c.bf16 %v868, %v858
        %v893 = vpack.c.bf16 %v869, %v859
        %v894 = vpack.c.bf16 %v870, %v870
        %v895 = vpack.c.bf16 %v871, %v871
        %v896 = vpack.c.bf16 %v872, %v872
        %v897 = vpack.c.bf16 %v873, %v873
        %v898 = vpack.c.bf16 %v874, %v874
        %v899 = vpack.c.bf16 %v875, %v875
        %v900 = vpack.c.bf16 %v876, %v876
        %v901 = vpack.c.bf16 %v877, %v877
        %v902 = vpack.c.bf16 %v878, %v878
        %v903 = vpack.c.bf16 %v879, %v879
        %v904 = vld [vmem:[%s4] sm:$0xff]
        %v905 = vld [vmem:[%s4 + $0x8] sm:$0xff]
        %v906 = vld [vmem:[%s4 + $0x10] sm:$0xff]
        %v907 = vld [vmem:[%s4 + $0x18] sm:$0xff]
        %909 = vset.pattern.permute.xlu0 0
        %910 = vperm.xlu0 %909, %v904
        %v911 = vpop.permute.xlu0 %910
        %914 = vset.pattern.permute.xlu0 0
        %915 = vperm.xlu0 %914, %v905
        %v916 = vpop.permute.xlu0 %915
        %919 = vset.pattern.permute.xlu0 0
        %920 = vperm.xlu0 %919, %v906
        %v921 = vpop.permute.xlu0 %920
        %924 = vset.pattern.permute.xlu0 0
        %925 = vperm.xlu0 %924, %v907
        %v926 = vpop.permute.xlu0 %925
        %v932 = vunpack.c.l.b16 %v880
        %v933 = vunpack.c.l.b16 %v881
        %v934 = vunpack.c.l.b16 %v882
        %v935 = vunpack.c.l.b16 %v883
        %v936 = vpack.c.b16 %v933, %v932
        %v937 = vpack.c.b16 %v935, %v934
        %vm938 = vcmask 179200
        %v940 = vsel %vm938, %v936, 0
        %v943 = vsel %vm938, %v937, 0
        %vm945 = vcmask 1042432
        %v947 = vsel %vm945, %v894, 0
        %v950 = vsel %vm945, %v895, 0
        %v953 = vsel %vm945, %v896, 0
        %v956 = vsel %vm945, %v897, 0
        %v959 = vsel %vm945, %v898, 0
        %v962 = vsel %vm945, %v899, 0
        %v965 = vsel %vm945, %v900, 0
        %v968 = vsel %vm945, %v901, 0
        %v971 = vsel %vm945, %v902, 0
        %v974 = vsel %vm945, %v903, 0
        %976 = vmatprep.subr.bf16.mxu0 %v885
        %977 = vmatpush1.bf16.msra.mxu0 %v884
        %978 = vmatprep.subr.bf16.mxu0 %v950
        %979 = vmatpush1.bf16.msra.mxu0 %v947
        %980 = vmatprep.subr.bf16.mxu0 0
        %981 = vmatpush1.bf16.msra.mxu0 0
        %982 = vmatprep.subr.bf16.mxu0 0
        %983 = vmatpush1.bf16.msra.mxu0 0
        %984 = vmatprep.subr.bf16.mxu0 0
        %985 = vmatpush1.bf16.msra.mxu0 0
        %986 = vmatprep.subr.bf16.mxu0 0
        %987 = vmatpush1.bf16.msra.mxu0 0
        %988 = vmatprep.subr.bf16.mxu0 0
        %989 = vmatpush1.bf16.msra.mxu0 0
        %990 = vmatprep.subr.bf16.mxu0 0
        %991 = vmatpush1.bf16.msra.mxu0 0
        %992 = vmatprep.subr.bf16.mxu0 0
        %993 = vmatpush1.bf16.msra.mxu0 0
        %994 = vmatprep.subr.bf16.mxu0 0
        %995 = vmatpush1.bf16.msra.mxu0 0
        %996 = vmatprep.subr.bf16.mxu0 0
        %997 = vmatpush1.bf16.msra.mxu0 0
        %998 = vmatprep.subr.bf16.mxu0 0
        %999 = vmatpush1.bf16.msra.mxu0 0
        %1000 = vmatprep.subr.bf16.mxu0 0
        %1001 = vmatpush1.bf16.msra.mxu0 0
        %1002 = vmatprep.subr.bf16.mxu0 0
        %1003 = vmatpush1.bf16.msra.mxu0 0
        %1004 = vmatprep.subr.bf16.mxu0 0
        %1005 = vmatpush1.bf16.msra.mxu0 0
        %1006 = vmatprep.subr.bf16.mxu0 0
        %1007 = vmatpush1.bf16.msra.mxu0 0
        %1008 = vmatprep.mubr.bf16.mxu0 0
        %1009 = vmatmul.mubr.bf16.gmra.mrb[0].mxu0 %v940
        %v1010 = vpop.f32.mrb[0].mxu0
        %v1011 = vadd.f32 %v911, %v1010
        %v1012 = vpop.f32.mrb[0].mxu0
        %v1013 = vadd.f32 %v911, %v1012
        %v1014 = vpop.f32.mrb[0].mxu0
        %v1015 = vadd.f32 %v916, %v1014
        %v1016 = vpop.f32.mrb[0].mxu0
        %v1017 = vadd.f32 %v916, %v1016
        %1018 = vmatprep.mubr.bf16.mxu0 0
        %1019 = vmatmul.mubr.bf16.gmra.mrb[0].mxu0 %v943
        %v1020 = vpop.f32.mrb[0].mxu0
        %v1021 = vadd.f32 %v921, %v1020
        %v1022 = vpop.f32.mrb[0].mxu0
        %v1023 = vadd.f32 %v921, %v1022
        %v1024 = vpop.f32.mrb[0].mxu0
        %v1025 = vadd.f32 %v926, %v1024
        %v1026 = vpop.f32.mrb[0].mxu0
        %v1027 = vadd.f32 %v926, %v1026
        %1028 = vdwg.mxu0
        %1029 = vmatprep.subr.bf16.mxu0 %v887
        %1030 = vmatpush1.bf16.msra.mxu0 %v886
        %1031 = vmatprep.subr.bf16.mxu0 %v956
        %1032 = vmatpush1.bf16.msra.mxu0 %v953
        %1033 = vmatprep.subr.bf16.mxu0 0
        %1034 = vmatpush1.bf16.msra.mxu0 0
        %1035 = vmatprep.subr.bf16.mxu0 0
        %1036 = vmatpush1.bf16.msra.mxu0 0
        %1037 = vmatprep.subr.bf16.mxu0 0
        %1038 = vmatpush1.bf16.msra.mxu0 0
        %1039 = vmatprep.subr.bf16.mxu0 0
        %1040 = vmatpush1.bf16.msra.mxu0 0
        %1041 = vmatprep.subr.bf16.mxu0 0
        %1042 = vmatpush1.bf16.msra.mxu0 0
        %1043 = vmatprep.subr.bf16.mxu0 0
        %1044 = vmatpush1.bf16.msra.mxu0 0
        %1045 = vmatprep.subr.bf16.mxu0 0
        %1046 = vmatpush1.bf16.msra.mxu0 0
        %1047 = vmatprep.subr.bf16.mxu0 0
        %1048 = vmatpush1.bf16.msra.mxu0 0
        %1049 = vmatprep.subr.bf16.mxu0 0
        %1050 = vmatpush1.bf16.msra.mxu0 0
        %1051 = vmatprep.subr.bf16.mxu0 0
        %1052 = vmatpush1.bf16.msra.mxu0 0
        %1053 = vmatprep.subr.bf16.mxu0 0
        %1054 = vmatpush1.bf16.msra.mxu0 0
        %1055 = vmatprep.subr.bf16.mxu0 0
        %1056 = vmatpush1.bf16.msra.mxu0 0
        %1057 = vmatprep.subr.bf16.mxu0 0
        %1058 = vmatpush1.bf16.msra.mxu0 0
        %1059 = vmatprep.subr.bf16.mxu0 0
        %1060 = vmatpush1.bf16.msra.mxu0 0
        %1061 = vmatprep.mubr.bf16.mxu0 0
        %1062 = vmatmul.mubr.bf16.gmra.mrb[0].mxu0 %v940
        %v1063 = vpop.f32.mrb[0].mxu0
        %v1064 = vadd.f32 %v911, %v1063
        %v1065 = vpop.f32.mrb[0].mxu0
        %v1066 = vadd.f32 %v911, %v1065
        %v1067 = vpop.f32.mrb[0].mxu0
        %v1068 = vadd.f32 %v916, %v1067
        %v1069 = vpop.f32.mrb[0].mxu0
        %v1070 = vadd.f32 %v916, %v1069
        %1071 = vmatprep.mubr.bf16.mxu0 0
        %1072 = vmatmul.mubr.bf16.gmra.mrb[0].mxu0 %v943
        %v1073 = vpop.f32.mrb[0].mxu0
        %v1074 = vadd.f32 %v921, %v1073
        %v1075 = vpop.f32.mrb[0].mxu0
        %v1076 = vadd.f32 %v921, %v1075
        %v1077 = vpop.f32.mrb[0].mxu0
        %v1078 = vadd.f32 %v926, %v1077
        %v1079 = vpop.f32.mrb[0].mxu0
        %v1080 = vadd.f32 %v926, %v1079
        %1081 = vdwg.mxu0
        %1082 = vmatprep.subr.bf16.mxu0 %v889
        %1083 = vmatpush1.bf16.msra.mxu0 %v888
        %1084 = vmatprep.subr.bf16.mxu0 %v962
        %1085 = vmatpush1.bf16.msra.mxu0 %v959
        %1086 = vmatprep.subr.bf16.mxu0 0
        %1087 = vmatpush1.bf16.msra.mxu0 0
        %1088 = vmatprep.subr.bf16.mxu0 0
        %1089 = vmatpush1.bf16.msra.mxu0 0
        %1090 = vmatprep.subr.bf16.mxu0 0
        %1091 = vmatpush1.bf16.msra.mxu0 0
        %1092 = vmatprep.subr.bf16.mxu0 0
        %1093 = vmatpush1.bf16.msra.mxu0 0
        %1094 = vmatprep.subr.bf16.mxu0 0
        %1095 = vmatpush1.bf16.msra.mxu0 0
        %1096 = vmatprep.subr.bf16.mxu0 0
        %1097 = vmatpush1.bf16.msra.mxu0 0
        %1098 = vmatprep.subr.bf16.mxu0 0
        %1099 = vmatpush1.bf16.msra.mxu0 0
        %1100 = vmatprep.subr.bf16.mxu0 0
        %1101 = vmatpush1.bf16.msra.mxu0 0
        %1102 = vmatprep.subr.bf16.mxu0 0
        %1103 = vmatpush1.bf16.msra.mxu0 0
        %1104 = vmatprep.subr.bf16.mxu0 0
        %1105 = vmatpush1.bf16.msra.mxu0 0
        %1106 = vmatprep.subr.bf16.mxu0 0
        %1107 = vmatpush1.bf16.msra.mxu0 0
        %1108 = vmatprep.subr.bf16.mxu0 0
        %1109 = vmatpush1.bf16.msra.mxu0 0
        %1110 = vmatprep.subr.bf16.mxu0 0
        %1111 = vmatpush1.bf16.msra.mxu0 0
        %1112 = vmatprep.subr.bf16.mxu0 0
        %1113 = vmatpush1.bf16.msra.mxu0 0
        %1114 = vmatprep.mubr.bf16.mxu0 0
        %1115 = vmatmul.mubr.bf16.gmra.mrb[0].mxu0 %v940
        %v1116 = vpop.f32.mrb[0].mxu0
        %v1117 = vadd.f32 %v911, %v1116
        %v1118 = vpop.f32.mrb[0].mxu0
        %v1119 = vadd.f32 %v911, %v1118
        %v1120 = vpop.f32.mrb[0].mxu0
        %v1121 = vadd.f32 %v916, %v1120
        %v1122 = vpop.f32.mrb[0].mxu0
        %v1123 = vadd.f32 %v916, %v1122
        %1124 = vmatprep.mubr.bf16.mxu0 0
        %1125 = vmatmul.mubr.bf16.gmra.mrb[0].mxu0 %v943
        %v1126 = vpop.f32.mrb[0].mxu0
        %v1127 = vadd.f32 %v921, %v1126
        %v1128 = vpop.f32.mrb[0].mxu0
        %v1129 = vadd.f32 %v921, %v1128
        %v1130 = vpop.f32.mrb[0].mxu0
        %v1131 = vadd.f32 %v926, %v1130
        %v1132 = vpop.f32.mrb[0].mxu0
        %v1133 = vadd.f32 %v926, %v1132
        %1134 = vdwg.mxu0
        %1135 = vmatprep.subr.bf16.mxu0 %v891
        %1136 = vmatpush1.bf16.msra.mxu0 %v890
        %1137 = vmatprep.subr.bf16.mxu0 %v968
        %1138 = vmatpush1.bf16.msra.mxu0 %v965
        %1139 = vmatprep.subr.bf16.mxu0 0
        %1140 = vmatpush1.bf16.msra.mxu0 0
        %1141 = vmatprep.subr.bf16.mxu0 0
        %1142 = vmatpush1.bf16.msra.mxu0 0
        %1143 = vmatprep.subr.bf16.mxu0 0
        %1144 = vmatpush1.bf16.msra.mxu0 0
        %1145 = vmatprep.subr.bf16.mxu0 0
        %1146 = vmatpush1.bf16.msra.mxu0 0
        %1147 = vmatprep.subr.bf16.mxu0 0
        %1148 = vmatpush1.bf16.msra.mxu0 0
        %1149 = vmatprep.subr.bf16.mxu0 0
        %1150 = vmatpush1.bf16.msra.mxu0 0
        %1151 = vmatprep.subr.bf16.mxu0 0
        %1152 = vmatpush1.bf16.msra.mxu0 0
        %1153 = vmatprep.subr.bf16.mxu0 0
        %1154 = vmatpush1.bf16.msra.mxu0 0
        %1155 = vmatprep.subr.bf16.mxu0 0
        %1156 = vmatpush1.bf16.msra.mxu0 0
        %1157 = vmatprep.subr.bf16.mxu0 0
        %1158 = vmatpush1.bf16.msra.mxu0 0
        %1159 = vmatprep.subr.bf16.mxu0 0
        %1160 = vmatpush1.bf16.msra.mxu0 0
        %1161 = vmatprep.subr.bf16.mxu0 0
        %1162 = vmatpush1.bf16.msra.mxu0 0
        %1163 = vmatprep.subr.bf16.mxu0 0
        %1164 = vmatpush1.bf16.msra.mxu0 0
        %1165 = vmatprep.subr.bf16.mxu0 0
        %1166 = vmatpush1.bf16.msra.mxu0 0
        %1167 = vmatprep.mubr.bf16.mxu0 0
        %1168 = vmatmul.mubr.bf16.gmra.mrb[0].mxu0 %v940
        %v1169 = vpop.f32.mrb[0].mxu0
        %v1170 = vadd.f32 %v911, %v1169
        %v1171 = vpop.f32.mrb[0].mxu0
        %v1172 = vadd.f32 %v911, %v1171
        %v1173 = vpop.f32.mrb[0].mxu0
        %v1174 = vadd.f32 %v916, %v1173
        %v1175 = vpop.f32.mrb[0].mxu0
        %v1176 = vadd.f32 %v916, %v1175
        %1177 = vmatprep.mubr.bf16.mxu0 0
        %1178 = vmatmul.mubr.bf16.gmra.mrb[0].mxu0 %v943
        %v1179 = vpop.f32.mrb[0].mxu0
        %v1180 = vadd.f32 %v921, %v1179
        %v1181 = vpop.f32.mrb[0].mxu0
        %v1182 = vadd.f32 %v921, %v1181
        %v1183 = vpop.f32.mrb[0].mxu0
        %v1184 = vadd.f32 %v926, %v1183
        %v1185 = vpop.f32.mrb[0].mxu0
        %v1186 = vadd.f32 %v926, %v1185
        %1187 = vdwg.mxu0
        %1188 = vmatprep.subr.bf16.mxu0 %v893
        %1189 = vmatpush1.bf16.msra.mxu0 %v892
        %1190 = vmatprep.subr.bf16.mxu0 %v974
        %1191 = vmatpush1.bf16.msra.mxu0 %v971
        %1192 = vmatprep.subr.bf16.mxu0 0
        %1193 = vmatpush1.bf16.msra.mxu0 0
        %1194 = vmatprep.subr.bf16.mxu0 0
        %1195 = vmatpush1.bf16.msra.mxu0 0
        %1196 = vmatprep.subr.bf16.mxu0 0
        %1197 = vmatpush1.bf16.msra.mxu0 0
        %1198 = vmatprep.subr.bf16.mxu0 0
        %1199 = vmatpush1.bf16.msra.mxu0 0
        %1200 = vmatprep.subr.bf16.mxu0 0
        %1201 = vmatpush1.bf16.msra.mxu0 0
        %1202 = vmatprep.subr.bf16.mxu0 0
        %1203 = vmatpush1.bf16.msra.mxu0 0
        %1204 = vmatprep.subr.bf16.mxu0 0
        %1205 = vmatpush1.bf16.msra.mxu0 0
        %1206 = vmatprep.subr.bf16.mxu0 0
        %1207 = vmatpush1.bf16.msra.mxu0 0
        %1208 = vmatprep.subr.bf16.mxu0 0
        %1209 = vmatpush1.bf16.msra.mxu0 0
        %1210 = vmatprep.subr.bf16.mxu0 0
        %1211 = vmatpush1.bf16.msra.mxu0 0
        %1212 = vmatprep.subr.bf16.mxu0 0
        %1213 = vmatpush1.bf16.msra.mxu0 0
        %1214 = vmatprep.subr.bf16.mxu0 0
        %1215 = vmatpush1.bf16.msra.mxu0 0
        %1216 = vmatprep.subr.bf16.mxu0 0
        %1217 = vmatpush1.bf16.msra.mxu0 0
        %1218 = vmatprep.subr.bf16.mxu0 0
        %1219 = vmatpush1.bf16.msra.mxu0 0
        %1220 = vmatprep.mubr.bf16.mxu0 0
        %1221 = vmatmul.mubr.bf16.gmra.mrb[0].mxu0 %v940
        %v1222 = vpop.f32.mrb[0].mxu0
        %v1223 = vadd.f32 %v911, %v1222
        %v1224 = vpop.f32.mrb[0].mxu0
        %v1225 = vadd.f32 %v911, %v1224
        %v1226 = vpop.f32.mrb[0].mxu0
        %v1227 = vadd.f32 %v916, %v1226
        %v1228 = vpop.f32.mrb[0].mxu0
        %v1229 = vadd.f32 %v916, %v1228
        %1230 = vmatprep.mubr.bf16.mxu0 0
        %1231 = vmatmul.mubr.bf16.gmra.mrb[0].mxu0 %v943
        %v1232 = vpop.f32.mrb[0].mxu0
        %v1233 = vadd.f32 %v921, %v1232
        %v1234 = vpop.f32.mrb[0].mxu0
        %v1235 = vadd.f32 %v921, %v1234
        %v1236 = vpop.f32.mrb[0].mxu0
        %v1237 = vadd.f32 %v926, %v1236
        %v1238 = vpop.f32.mrb[0].mxu0
        %v1239 = vadd.f32 %v926, %v1238
        %1240 = vdwg.mxu0
        %v1241 = vmul.f32 %v1011, 0.5
        %v1242 = vmul.f32 %v1013, 0.5
        %v1243 = vmul.f32 %v1064, 0.5
        %v1244 = vmul.f32 %v1066, 0.5
        %v1245 = vmul.f32 %v1117, 0.5
        %v1246 = vmul.f32 %v1119, 0.5
        %v1247 = vmul.f32 %v1170, 0.5
        %v1248 = vmul.f32 %v1172, 0.5
        %v1249 = vmul.f32 %v1223, 0.5
        %v1250 = vmul.f32 %v1225, 0.5
        %v1251 = vmul.f32 %v1015, 0.5
        %v1252 = vmul.f32 %v1017, 0.5
        %v1253 = vmul.f32 %v1068, 0.5
        %v1254 = vmul.f32 %v1070, 0.5
        %v1255 = vmul.f32 %v1121, 0.5
        %v1256 = vmul.f32 %v1123, 0.5
        %v1257 = vmul.f32 %v1174, 0.5
        %v1258 = vmul.f32 %v1176, 0.5
        %v1259 = vmul.f32 %v1227, 0.5
        %v1260 = vmul.f32 %v1229, 0.5
        %v1261 = vmul.f32 %v1021, 0.5
        %v1262 = vmul.f32 %v1023, 0.5
        %v1263 = vmul.f32 %v1074, 0.5
        %v1264 = vmul.f32 %v1076, 0.5
        %v1265 = vmul.f32 %v1127, 0.5
        %v1266 = vmul.f32 %v1129, 0.5
        %v1267 = vmul.f32 %v1180, 0.5
        %v1268 = vmul.f32 %v1182, 0.5
        %v1269 = vmul.f32 %v1233, 0.5
        %v1270 = vmul.f32 %v1235, 0.5
        %v1271 = vmul.f32 %v1025, 0.5
        %v1272 = vmul.f32 %v1027, 0.5
        %v1273 = vmul.f32 %v1078, 0.5
        %v1274 = vmul.f32 %v1080, 0.5
        %v1275 = vmul.f32 %v1131, 0.5
        %v1276 = vmul.f32 %v1133, 0.5
        %v1277 = vmul.f32 %v1184, 0.5
        %v1278 = vmul.f32 %v1186, 0.5
        %v1279 = vmul.f32 %v1237, 0.5
        %v1280 = vmul.f32 %v1239, 0.5
        %v1281 = vmul.f32 %v1011, 0.044715
        %v1282 = vmul.f32 %v1013, 0.044715
        %v1283 = vmul.f32 %v1064, 0.044715
        %v1284 = vmul.f32 %v1066, 0.044715
        %v1285 = vmul.f32 %v1117, 0.044715
        %v1286 = vmul.f32 %v1119, 0.044715
        %v1287 = vmul.f32 %v1170, 0.044715
        %v1288 = vmul.f32 %v1172, 0.044715
        %v1289 = vmul.f32 %v1223, 0.044715
        %v1290 = vmul.f32 %v1225, 0.044715
        %v1291 = vmul.f32 %v1015, 0.044715
        %v1292 = vmul.f32 %v1017, 0.044715
        %v1293 = vmul.f32 %v1068, 0.044715
        %v1294 = vmul.f32 %v1070, 0.044715
        %v1295 = vmul.f32 %v1121, 0.044715
        %v1296 = vmul.f32 %v1123, 0.044715
        %v1297 = vmul.f32 %v1174, 0.044715
        %v1298 = vmul.f32 %v1176, 0.044715
        %v1299 = vmul.f32 %v1227, 0.044715
        %v1300 = vmul.f32 %v1229, 0.044715
        %v1301 = vmul.f32 %v1021, 0.044715
        %v1302 = vmul.f32 %v1023, 0.044715
        %v1303 = vmul.f32 %v1074, 0.044715
        %v1304 = vmul.f32 %v1076, 0.044715
        %v1305 = vmul.f32 %v1127, 0.044715
        %v1306 = vmul.f32 %v1129, 0.044715
        %v1307 = vmul.f32 %v1180, 0.044715
        %v1308 = vmul.f32 %v1182, 0.044715
        %v1309 = vmul.f32 %v1233, 0.044715
        %v1310 = vmul.f32 %v1235, 0.044715
        %v1311 = vmul.f32 %v1025, 0.044715
        %v1312 = vmul.f32 %v1027, 0.044715
        %v1313 = vmul.f32 %v1078, 0.044715
        %v1314 = vmul.f32 %v1080, 0.044715
        %v1315 = vmul.f32 %v1131, 0.044715
        %v1316 = vmul.f32 %v1133, 0.044715
        %v1317 = vmul.f32 %v1184, 0.044715
        %v1318 = vmul.f32 %v1186, 0.044715
        %v1319 = vmul.f32 %v1237, 0.044715
        %v1320 = vmul.f32 %v1239, 0.044715
        %v1321 = vmul.f32 %v1281, %v1011
        %v1322 = vmul.f32 %v1282, %v1013
        %v1323 = vmul.f32 %v1283, %v1064
        %v1324 = vmul.f32 %v1284, %v1066
        %v1325 = vmul.f32 %v1285, %v1117
        %v1326 = vmul.f32 %v1286, %v1119
        %v1327 = vmul.f32 %v1287, %v1170
        %v1328 = vmul.f32 %v1288, %v1172
        %v1329 = vmul.f32 %v1289, %v1223
        %v1330 = vmul.f32 %v1290, %v1225
        %v1331 = vmul.f32 %v1291, %v1015
        %v1332 = vmul.f32 %v1292, %v1017
        %v1333 = vmul.f32 %v1293, %v1068
        %v1334 = vmul.f32 %v1294, %v1070
        %v1335 = vmul.f32 %v1295, %v1121
        %v1336 = vmul.f32 %v1296, %v1123
        %v1337 = vmul.f32 %v1297, %v1174
        %v1338 = vmul.f32 %v1298, %v1176
        %v1339 = vmul.f32 %v1299, %v1227
        %v1340 = vmul.f32 %v1300, %v1229
        %v1341 = vmul.f32 %v1301, %v1021
        %v1342 = vmul.f32 %v1302, %v1023
        %v1343 = vmul.f32 %v1303, %v1074
        %v1344 = vmul.f32 %v1304, %v1076
        %v1345 = vmul.f32 %v1305, %v1127
        %v1346 = vmul.f32 %v1306, %v1129
        %v1347 = vmul.f32 %v1307, %v1180
        %v1348 = vmul.f32 %v1308, %v1182
        %v1349 = vmul.f32 %v1309, %v1233
        %v1350 = vmul.f32 %v1310, %v1235
        %v1351 = vmul.f32 %v1311, %v1025
        %v1352 = vmul.f32 %v1312, %v1027
        %v1353 = vmul.f32 %v1313, %v1078
        %v1354 = vmul.f32 %v1314, %v1080
        %v1355 = vmul.f32 %v1315, %v1131
        %v1356 = vmul.f32 %v1316, %v1133
        %v1357 = vmul.f32 %v1317, %v1184
        %v1358 = vmul.f32 %v1318, %v1186
        %v1359 = vmul.f32 %v1319, %v1237
        %v1360 = vmul.f32 %v1320, %v1239
        %v1361 = vmul.f32 %v1321, %v1011
        %v1362 = vmul.f32 %v1322, %v1013
        %v1363 = vmul.f32 %v1323, %v1064
        %v1364 = vmul.f32 %v1324, %v1066
        %v1365 = vmul.f32 %v1325, %v1117
        %v1366 = vmul.f32 %v1326, %v1119
        %v1367 = vmul.f32 %v1327, %v1170
        %v1368 = vmul.f32 %v1328, %v1172
        %v1369 = vmul.f32 %v1329, %v1223
        %v1370 = vmul.f32 %v1330, %v1225
        %v1371 = vmul.f32 %v1331, %v1015
        %v1372 = vmul.f32 %v1332, %v1017
        %v1373 = vmul.f32 %v1333, %v1068
        %v1374 = vmul.f32 %v1334, %v1070
        %v1375 = vmul.f32 %v1335, %v1121
        %v1376 = vmul.f32 %v1336, %v1123
        %v1377 = vmul.f32 %v1337, %v1174
        %v1378 = vmul.f32 %v1338, %v1176
        %v1379 = vmul.f32 %v1339, %v1227
        %v1380 = vmul.f32 %v1340, %v1229
        %v1381 = vmul.f32 %v1341, %v1021
        %v1382 = vmul.f32 %v1342, %v1023
        %v1383 = vmul.f32 %v1343, %v1074
        %v1384 = vmul.f32 %v1344, %v1076
        %v1385 = vmul.f32 %v1345, %v1127
        %v1386 = vmul.f32 %v1346, %v1129
        %v1387 = vmul.f32 %v1347, %v1180
        %v1388 = vmul.f32 %v1348, %v1182
        %v1389 = vmul.f32 %v1349, %v1233
        %v1390 = vmul.f32 %v1350, %v1235
        %v1391 = vmul.f32 %v1351, %v1025
        %v1392 = vmul.f32 %v1352, %v1027
        %v1393 = vmul.f32 %v1353, %v1078
        %v1394 = vmul.f32 %v1354, %v1080
        %v1395 = vmul.f32 %v1355, %v1131
        %v1396 = vmul.f32 %v1356, %v1133
        %v1397 = vmul.f32 %v1357, %v1184
        %v1398 = vmul.f32 %v1358, %v1186
        %v1399 = vmul.f32 %v1359, %v1237
        %v1400 = vmul.f32 %v1360, %v1239
        %v1401 = vadd.f32 %v1011, %v1361
        %v1402 = vadd.f32 %v1013, %v1362
        %v1403 = vadd.f32 %v1064, %v1363
        %v1404 = vadd.f32 %v1066, %v1364
        %v1405 = vadd.f32 %v1117, %v1365
        %v1406 = vadd.f32 %v1119, %v1366
        %v1407 = vadd.f32 %v1170, %v1367
        %v1408 = vadd.f32 %v1172, %v1368
        %v1409 = vadd.f32 %v1223, %v1369
        %v1410 = vadd.f32 %v1225, %v1370
        %v1411 = vadd.f32 %v1015, %v1371
        %v1412 = vadd.f32 %v1017, %v1372
        %v1413 = vadd.f32 %v1068, %v1373
        %v1414 = vadd.f32 %v1070, %v1374
        %v1415 = vadd.f32 %v1121, %v1375
        %v1416 = vadd.f32 %v1123, %v1376
        %v1417 = vadd.f32 %v1174, %v1377
        %v1418 = vadd.f32 %v1176, %v1378
        %v1419 = vadd.f32 %v1227, %v1379
        %v1420 = vadd.f32 %v1229, %v1380
        %v1421 = vadd.f32 %v1021, %v1381
        %v1422 = vadd.f32 %v1023, %v1382
        %v1423 = vadd.f32 %v1074, %v1383
        %v1424 = vadd.f32 %v1076, %v1384
        %v1425 = vadd.f32 %v1127, %v1385
        %v1426 = vadd.f32 %v1129, %v1386
        %v1427 = vadd.f32 %v1180, %v1387
        %v1428 = vadd.f32 %v1182, %v1388
        %v1429 = vadd.f32 %v1233, %v1389
        %v1430 = vadd.f32 %v1235, %v1390
        %v1431 = vadd.f32 %v1025, %v1391
        %v1432 = vadd.f32 %v1027, %v1392
        %v1433 = vadd.f32 %v1078, %v1393
        %v1434 = vadd.f32 %v1080, %v1394
        %v1435 = vadd.f32 %v1131, %v1395
        %v1436 = vadd.f32 %v1133, %v1396
        %v1437 = vadd.f32 %v1184, %v1397
        %v1438 = vadd.f32 %v1186, %v1398
        %v1439 = vadd.f32 %v1237, %v1399
        %v1440 = vadd.f32 %v1239, %v1400
        %v1441 = vmul.f32 %v1401, 0.7978846
        %v1442 = vmul.f32 %v1402, 0.7978846
        %v1443 = vmul.f32 %v1403, 0.7978846
        %v1444 = vmul.f32 %v1404, 0.7978846
        %v1445 = vmul.f32 %v1405, 0.7978846
        %v1446 = vmul.f32 %v1406, 0.7978846
        %v1447 = vmul.f32 %v1407, 0.7978846
        %v1448 = vmul.f32 %v1408, 0.7978846
        %v1449 = vmul.f32 %v1409, 0.7978846
        %v1450 = vmul.f32 %v1410, 0.7978846
        %v1451 = vmul.f32 %v1411, 0.7978846
        %v1452 = vmul.f32 %v1412, 0.7978846
        %v1453 = vmul.f32 %v1413, 0.7978846
        %v1454 = vmul.f32 %v1414, 0.7978846
        %v1455 = vmul.f32 %v1415, 0.7978846
        %v1456 = vmul.f32 %v1416, 0.7978846
        %v1457 = vmul.f32 %v1417, 0.7978846
        %v1458 = vmul.f32 %v1418, 0.7978846
        %v1459 = vmul.f32 %v1419, 0.7978846
        %v1460 = vmul.f32 %v1420, 0.7978846
        %v1461 = vmul.f32 %v1421, 0.7978846
        %v1462 = vmul.f32 %v1422, 0.7978846
        %v1463 = vmul.f32 %v1423, 0.7978846
        %v1464 = vmul.f32 %v1424, 0.7978846
        %v1465 = vmul.f32 %v1425, 0.7978846
        %v1466 = vmul.f32 %v1426, 0.7978846
        %v1467 = vmul.f32 %v1427, 0.7978846
        %v1468 = vmul.f32 %v1428, 0.7978846
        %v1469 = vmul.f32 %v1429, 0.7978846
        %v1470 = vmul.f32 %v1430, 0.7978846
        %v1471 = vmul.f32 %v1431, 0.7978846
        %v1472 = vmul.f32 %v1432, 0.7978846
        %v1473 = vmul.f32 %v1433, 0.7978846
        %v1474 = vmul.f32 %v1434, 0.7978846
        %v1475 = vmul.f32 %v1435, 0.7978846
        %v1476 = vmul.f32 %v1436, 0.7978846
        %v1477 = vmul.f32 %v1437, 0.7978846
        %v1478 = vmul.f32 %v1438, 0.7978846
        %v1479 = vmul.f32 %v1439, 0.7978846
        %v1480 = vmul.f32 %v1440, 0.7978846
        %v1481 = vtanh.pop %v1441
        %v1482 = vtanh.pop %v1442
        %v1483 = vtanh.pop %v1443
        %v1484 = vtanh.pop %v1444
        %v1485 = vtanh.pop %v1445
        %v1486 = vtanh.pop %v1446
        %v1487 = vtanh.pop %v1447
        %v1488 = vtanh.pop %v1448
        %v1489 = vtanh.pop %v1449
        %v1490 = vtanh.pop %v1450
        %v1491 = vtanh.pop %v1451
        %v1492 = vtanh.pop %v1452
        %v1493 = vtanh.pop %v1453
        %v1494 = vtanh.pop %v1454
        %v1495 = vtanh.pop %v1455
        %v1496 = vtanh.pop %v1456
        %v1497 = vtanh.pop %v1457
        %v1498 = vtanh.pop %v1458
        %v1499 = vtanh.pop %v1459
        %v1500 = vtanh.pop %v1460
        %v1501 = vtanh.pop %v1461
        %v1502 = vtanh.pop %v1462
        %v1503 = vtanh.pop %v1463
        %v1504 = vtanh.pop %v1464
        %v1505 = vtanh.pop %v1465
        %v1506 = vtanh.pop %v1466
        %v1507 = vtanh.pop %v1467
        %v1508 = vtanh.pop %v1468
        %v1509 = vtanh.pop %v1469
        %v1510 = vtanh.pop %v1470
        %v1511 = vtanh.pop %v1471
        %v1512 = vtanh.pop %v1472
        %v1513 = vtanh.pop %v1473
        %v1514 = vtanh.pop %v1474
        %v1515 = vtanh.pop %v1475
        %v1516 = vtanh.pop %v1476
        %v1517 = vtanh.pop %v1477
        %v1518 = vtanh.pop %v1478
        %v1519 = vtanh.pop %v1479
        %v1520 = vtanh.pop %v1480
        %v1521 = vadd.f32 %v1481, 1.0
        %v1522 = vadd.f32 %v1482, 1.0
        %v1523 = vadd.f32 %v1483, 1.0
        %v1524 = vadd.f32 %v1484, 1.0
        %v1525 = vadd.f32 %v1485, 1.0
        %v1526 = vadd.f32 %v1486, 1.0
        %v1527 = vadd.f32 %v1487, 1.0
        %v1528 = vadd.f32 %v1488, 1.0
        %v1529 = vadd.f32 %v1489, 1.0
        %v1530 = vadd.f32 %v1490, 1.0
        %v1531 = vadd.f32 %v1491, 1.0
        %v1532 = vadd.f32 %v1492, 1.0
        %v1533 = vadd.f32 %v1493, 1.0
        %v1534 = vadd.f32 %v1494, 1.0
        %v1535 = vadd.f32 %v1495, 1.0
        %v1536 = vadd.f32 %v1496, 1.0
        %v1537 = vadd.f32 %v1497, 1.0
        %v1538 = vadd.f32 %v1498, 1.0
        %v1539 = vadd.f32 %v1499, 1.0
        %v1540 = vadd.f32 %v1500, 1.0
        %v1541 = vadd.f32 %v1501, 1.0
        %v1542 = vadd.f32 %v1502, 1.0
        %v1543 = vadd.f32 %v1503, 1.0
        %v1544 = vadd.f32 %v1504, 1.0
        %v1545 = vadd.f32 %v1505, 1.0
        %v1546 = vadd.f32 %v1506, 1.0
        %v1547 = vadd.f32 %v1507, 1.0
        %v1548 = vadd.f32 %v1508, 1.0
        %v1549 = vadd.f32 %v1509, 1.0
        %v1550 = vadd.f32 %v1510, 1.0
        %v1551 = vadd.f32 %v1511, 1.0
        %v1552 = vadd.f32 %v1512, 1.0
        %v1553 = vadd.f32 %v1513, 1.0
        %v1554 = vadd.f32 %v1514, 1.0
        %v1555 = vadd.f32 %v1515, 1.0
        %v1556 = vadd.f32 %v1516, 1.0
        %v1557 = vadd.f32 %v1517, 1.0
        %v1558 = vadd.f32 %v1518, 1.0
        %v1559 = vadd.f32 %v1519, 1.0
        %v1560 = vadd.f32 %v1520, 1.0
        %v1561 = vmul.f32 %v1241, %v1521
        %v1562 = vmul.f32 %v1242, %v1522
        %v1563 = vmul.f32 %v1243, %v1523
        %v1564 = vmul.f32 %v1244, %v1524
        %v1565 = vmul.f32 %v1245, %v1525
        %v1566 = vmul.f32 %v1246, %v1526
        %v1567 = vmul.f32 %v1247, %v1527
        %v1568 = vmul.f32 %v1248, %v1528
        %v1569 = vmul.f32 %v1249, %v1529
        %v1570 = vmul.f32 %v1250, %v1530
        %v1571 = vmul.f32 %v1251, %v1531
        %v1572 = vmul.f32 %v1252, %v1532
        %v1573 = vmul.f32 %v1253, %v1533
        %v1574 = vmul.f32 %v1254, %v1534
        %v1575 = vmul.f32 %v1255, %v1535
        %v1576 = vmul.f32 %v1256, %v1536
        %v1577 = vmul.f32 %v1257, %v1537
        %v1578 = vmul.f32 %v1258, %v1538
        %v1579 = vmul.f32 %v1259, %v1539
        %v1580 = vmul.f32 %v1260, %v1540
        %v1581 = vmul.f32 %v1261, %v1541
        %v1582 = vmul.f32 %v1262, %v1542
        %v1583 = vmul.f32 %v1263, %v1543
        %v1584 = vmul.f32 %v1264, %v1544
        %v1585 = vmul.f32 %v1265, %v1545
        %v1586 = vmul.f32 %v1266, %v1546
        %v1587 = vmul.f32 %v1267, %v1547
        %v1588 = vmul.f32 %v1268, %v1548
        %v1589 = vmul.f32 %v1269, %v1549
        %v1590 = vmul.f32 %v1270, %v1550
        %v1591 = vmul.f32 %v1271, %v1551
        %v1592 = vmul.f32 %v1272, %v1552
        %v1593 = vmul.f32 %v1273, %v1553
        %v1594 = vmul.f32 %v1274, %v1554
        %v1595 = vmul.f32 %v1275, %v1555
        %v1596 = vmul.f32 %v1276, %v1556
        %v1597 = vmul.f32 %v1277, %v1557
        %v1598 = vmul.f32 %v1278, %v1558
        %v1599 = vmul.f32 %v1279, %v1559
        %v1600 = vmul.f32 %v1280, %v1560
        %v1601 = vmax.f32 %v1561, %v1562
        %v1602 = vmax.f32 %v1571, %v1572
        %v1603 = vmax.f32 %v1581, %v1582
        %v1604 = vmax.f32 %v1591, %v1592
        %v1605 = vmax.f32 %v1601, %v1563
        %v1606 = vmax.f32 %v1602, %v1573
        %v1607 = vmax.f32 %v1603, %v1583
        %v1608 = vmax.f32 %v1604, %v1593
        %v1609 = vmax.f32 %v1605, %v1564
        %v1610 = vmax.f32 %v1606, %v1574
        %v1611 = vmax.f32 %v1607, %v1584
        %v1612 = vmax.f32 %v1608, %v1594
        %v1613 = vmax.f32 %v1609, %v1565
        %v1614 = vmax.f32 %v1610, %v1575
        %v1615 = vmax.f32 %v1611, %v1585
        %v1616 = vmax.f32 %v1612, %v1595
        %v1617 = vmax.f32 %v1613, %v1566
        %v1618 = vmax.f32 %v1614, %v1576
        %v1619 = vmax.f32 %v1615, %v1586
        %v1620 = vmax.f32 %v1616, %v1596
        %v1621 = vmax.f32 %v1617, %v1567
        %v1622 = vmax.f32 %v1618, %v1577
        %v1623 = vmax.f32 %v1619, %v1587
        %v1624 = vmax.f32 %v1620, %v1597
        %v1625 = vmax.f32 %v1621, %v1568
        %v1626 = vmax.f32 %v1622, %v1578
        %v1627 = vmax.f32 %v1623, %v1588
        %v1628 = vmax.f32 %v1624, %v1598
        %v1629 = vmax.f32 %v1625, %v1569
        %v1630 = vmax.f32 %v1626, %v1579
        %v1631 = vmax.f32 %v1627, %v1589
        %v1632 = vmax.f32 %v1628, %v1599
        %v1633 = vmax.f32 %v1629, %v1570
        %v1634 = vmax.f32 %v1630, %v1580
        %v1635 = vmax.f32 %v1631, %v1590
        %v1636 = vmax.f32 %v1632, %v1600
        %v1637 = vpack.c.bf16 %v1634, %v1633
        %v1638 = vpack.c.bf16 %v1636, %v1635
        %v1641 = vunpack.c.l.b16 %v1637
        %v1642 = vunpack.c.h.b16 %v1637
        %v1643 = vunpack.c.l.b16 %v1638
        %v1644 = vunpack.c.h.b16 %v1638
        %v1645 = vpack.c.b16 %v1641, %v1641
        %v1646 = vpack.c.b16 %v1642, %v1642
        %v1647 = vpack.c.b16 %v1643, %v1643
        %v1648 = vpack.c.b16 %v1644, %v1644
        %1653 = vst [vmem:[%s256] sm:$0xf] %v1645
        %1654 = vst [vmem:[%s256 + $0x4] sm:$0xf] %v1646
        %1655 = vst [vmem:[%s256 + $0x8] sm:$0xf] %v1647
        %1656 = vst [vmem:[%s256 + $0xc] sm:$0xf] %v1648
        %s1657 = sand.u32 %s134, 1
        %s1658 = sand.u32 %s134, 1
        %s1659 = smul.addr %s1658, 16
        %s1660 = scalar_lea.vmem [#allocation3], %s1659
        // Predicated region
        $region64: #{point_to_dense_forward.4} parent=58 // pred_check
          %p1661 = pneg %p144
        $region65: #{point_to_dense_forward.4} parent=58 // pred_check_branch
          %1663 = sbr.rel (%p1661) target = $region67
        $region66: #{point_to_dense_forward.4} parent=58 // pred_region
          %s1664 = smul.addr %s16, 4
          %s1665 = scalar_lea.vmem %s5, %s1664
          // Predicated region
          $region68: #{point_to_dense_forward.4} parent=66 // pred_check
            _
          $region69: #{point_to_dense_forward.4} parent=66 // pred_check_branch
            %1667 = sbr.rel (0) target = $region71
          $region70: #{point_to_dense_forward.4} parent=66 // pred_region
            // Predicated region
            $region72: #{point_to_dense_forward.4} parent=70 // pred_check
              _
            $region73: #{point_to_dense_forward.4} parent=70 // pred_check_branch
              %1669 = sbr.rel target = $region75
            $region74: #{point_to_dense_forward.4} parent=70 // pred_region
              // Predicated region
              $region87: #{point_to_dense_forward.4} parent=74 // pred_check
                _
              $region88: #{point_to_dense_forward.4} parent=74 // pred_check_branch
                %1690 = sbr.rel (0) target = $region90
              $region89: #{point_to_dense_forward.4} parent=74 // pred_region
                loop: start=0, step=1, limit=1
                $region91: #{point_to_dense_forward.4} parent=89 // loop_pre_header
                  _
                $region92: #{point_to_dense_forward.4} parent=89 // loop_header
                  %s1692 = sphi 0, %s1696
                  %p1693 = scmp.ge.s32.totalorder %s1692, 1
                  %s1697 = sphi %s1660, %s1660
                  %s1698 = sphi %s1665, %s1665
                $region93: #{point_to_dense_forward.4} parent=89 // loop_header_branch
                  %1695 = sbr.rel (%p1693) target = $region97
                $region94: #{point_to_dense_forward.4} parent=89 // loop_body
                  _
                $region95: #{point_to_dense_forward.4} parent=89 // loop_footer
                  %s1696 = sadd.s32 1, %s1692
                $region96: #{point_to_dense_forward.4} parent=89 // loop_footer_branch
                  %1691 = sbr.rel target = $region92
                $region97: #{point_to_dense_forward.4} parent=89 // loop_exit
                  _
                loop: start=0, step=1, limit=1
                $region98: #{point_to_dense_forward.4} parent=89 // loop_pre_header
                  _
                $region99: #{point_to_dense_forward.4} parent=89 // loop_header
                  %s1701 = sphi 0, %s1705
                  %p1702 = scmp.ge.s32.totalorder %s1701, 1
                  %s1706 = sphi %s1660, %s1660
                  %s1707 = sphi %s1665, %s1665
                $region100: #{point_to_dense_forward.4} parent=89 // loop_header_branch
                  %1704 = sbr.rel (%p1702) target = $region104
                $region101: #{point_to_dense_forward.4} parent=89 // loop_body
                  %v1708 = vld [vmem:[%s1706] sm:$0xf]
                  %1709 = vst [vmem:[%s1707] sm:$0xf] %v1708
                  %v1710 = vld [vmem:[%s1706 + $0x4] sm:$0xf]
                  %1711 = vst [vmem:[%s1707 + $0x8] sm:$0xf] %v1710
                  %v1712 = vld [vmem:[%s1706 + $0x8] sm:$0xf]
                  %1713 = vst [vmem:[%s1707 + $0x10] sm:$0xf] %v1712
                  %v1714 = vld [vmem:[%s1706 + $0xc] sm:$0xf]
                  %1715 = vst [vmem:[%s1707 + $0x18] sm:$0xf] %v1714
                $region102: #{point_to_dense_forward.4} parent=89 // loop_footer
                  %s1705 = sadd.s32 1, %s1701
                $region103: #{point_to_dense_forward.4} parent=89 // loop_footer_branch
                  %1700 = sbr.rel target = $region99
                $region104: #{point_to_dense_forward.4} parent=89 // loop_exit
                  _
              $region90: #{point_to_dense_forward.4} parent=74 // pred_fallthru
                _
            $region75: #{point_to_dense_forward.4} parent=70 // pred_fallthru
              _
            // Predicated region
            $region76: #{point_to_dense_forward.4} parent=70 // pred_check
              _
            $region77: #{point_to_dense_forward.4} parent=70 // pred_check_branch
              %1671 = sbr.rel (0) target = $region79
            $region78: #{point_to_dense_forward.4} parent=70 // pred_region
              loop: start=0, step=1, limit=1
              $region80: #{point_to_dense_forward.4} parent=78 // loop_pre_header
                _
              $region81: #{point_to_dense_forward.4} parent=78 // loop_header
                %s1674 = sphi 0, %s1678
                %p1675 = scmp.ge.s32.totalorder %s1674, 1
                %s1679 = sphi %s1660, %s1660
                %s1680 = sphi %s1665, %s1665
              $region82: #{point_to_dense_forward.4} parent=78 // loop_header_branch
                %1677 = sbr.rel (%p1675) target = $region86
              $region83: #{point_to_dense_forward.4} parent=78 // loop_body
                %v1681 = vld [vmem:[%s1679] sm:$0xf]
                %1682 = vst [vmem:[%s1680] sm:$0xf] %v1681
                %v1683 = vld [vmem:[%s1679 + $0x4] sm:$0xf]
                %1684 = vst [vmem:[%s1680 + $0x8] sm:$0xf] %v1683
                %v1685 = vld [vmem:[%s1679 + $0x8] sm:$0xf]
                %1686 = vst [vmem:[%s1680 + $0x10] sm:$0xf] %v1685
                %v1687 = vld [vmem:[%s1679 + $0xc] sm:$0xf]
                %1688 = vst [vmem:[%s1680 + $0x18] sm:$0xf] %v1687
              $region84: #{point_to_dense_forward.4} parent=78 // loop_footer
                %s1678 = sadd.s32 1, %s1674
              $region85: #{point_to_dense_forward.4} parent=78 // loop_footer_branch
                %1673 = sbr.rel target = $region81
              $region86: #{point_to_dense_forward.4} parent=78 // loop_exit
                _
            $region79: #{point_to_dense_forward.4} parent=70 // pred_fallthru
              _
          $region71: #{point_to_dense_forward.4} parent=66 // pred_fallthru
            _
          %1716 = vnop
        $region67: #{point_to_dense_forward.4} parent=58 // pred_fallthru
          _
      $region59: #{point_to_dense_forward.4} parent=5 // pred_fallthru
        _
      %p1717 = scmp.le.s32.totalorder 2, %s11
      // Predicated region
      $region105: #{point_to_dense_forward.4} parent=5 // pred_check
        %p1718 = pneg %p1717
      $region106: #{point_to_dense_forward.4} parent=5 // pred_check_branch
        %1720 = sbr.rel (%p1718) target = $region108
      $region107: #{point_to_dense_forward.4} parent=5 // pred_region
        %s1721 = ssub.s32 %s11, 2
        // Predicated region
        $region109: #{point_to_dense_forward.4} parent=107 // pred_check
          %p1722 = pneg %p150
        $region110: #{point_to_dense_forward.4} parent=107 // pred_check_branch
          %1724 = sbr.rel (%p1722) target = $region112
        $region111: #{point_to_dense_forward.4} parent=107 // pred_region
          %s1725 = sand.u32 %s135, 1
          %s1726 = sand.u32 %s135, 1
          %s1727 = smul.addr %s1726, 16
          %s1728 = scalar_lea.vmem [#allocation3], %s1727
        $region112: #{point_to_dense_forward.4} parent=107 // pred_fallthru
          _
      $region108: #{point_to_dense_forward.4} parent=5 // pred_fallthru
        _
    $region6: #{point_to_dense_forward.4} parent=1 // loop_footer
      %s15 = sadd.s32 1, %s11
    $region7: #{point_to_dense_forward.4} parent=1 // loop_footer_branch
      %10 = sbr.rel target = $region3
    $region8: #{point_to_dense_forward.4} parent=1 // loop_exit
      _

</llo_original>
